<compile_context>
chip_gen: v7x
topology: tpu7x:2x2x1
jax: 0.10.0
libtpu: 0.0.40
codegen_flags: <defaults>
</compile_context>

<pallas_src>
import math
from functools import partial

import jax
import jax.numpy as jnp
from jax import lax
from jax.experimental import pallas as pl
from jax.experimental.pallas import tpu as pltpu

EPS = 1e-5
LANE = 128
VMEM_LIMIT = 32 * 1024 * 1024


def _ceil_to(x, m):
    return (x + m - 1) // m * m


# ----------------------------- Pallas kernels -----------------------------

def _make_conv_stats_kernel(*, n_out_rows, in_width, out_width, wo_valid,
                            split_parity, has_shortcut):
    """3x3 conv (padding=1) on one flattened, zero-padded image as 9
    accumulated MXU matmuls over shifted row slices, plus masked per-channel
    sum / sum-of-squares partial BN statistics.

    Row layout: output row q = ho*out_width + wo; input row for tap (dy,dx)
    is stride*q + dy*in_width + dx (stride folded in via the parity split of
    the input when stride == 2)."""
    offsets = [dy * in_width + dx for dy in range(3) for dx in range(3)]

    def kernel(*refs):
        idx = 0
        if split_parity:
            xe_ref, xo_ref = refs[0], refs[1]
            idx = 2
        else:
            x_ref = refs[0]
            idx = 1
        w_ref = refs[idx]; idx += 1
        if has_shortcut:
            s_ref, wd_ref = refs[idx], refs[idx + 1]
            idx += 2
        y_ref, st_ref = refs[idx], refs[idx + 1]
        idx += 2
        if has_shortcut:
            sc_ref, stsc_ref = refs[idx], refs[idx + 1]

        cout = y_ref.shape[-1]
        acc = jnp.zeros((n_out_rows, cout), jnp.float32)
        for t, off in enumerate(offsets):
            if split_parity:
                src = xe_ref if (off % 2 == 0) else xo_ref
                start = off // 2
                xs = src[0, start:start + n_out_rows, :]
            else:
                xs = x_ref[0, off:off + n_out_rows, :]
            acc = acc + jnp.dot(xs, w_ref[t],
                                preferred_element_type=jnp.float32)

        # Validity mask: flat-layout wrap-around ("junk") columns are excluded
        # from the batch statistics (and later sliced off in the wrapper).
        col = lax.broadcasted_iota(jnp.int32, (n_out_rows, 1), 0) % out_width
        maskf = (col < wo_valid).astype(jnp.float32)

        y_ref[0] = acc.astype(y_ref.dtype)
        am = acc * maskf
        st_ref[0] = jnp.concatenate(
            [jnp.sum(am, axis=0, keepdims=True),
             jnp.sum(am * acc, axis=0, keepdims=True)], axis=0)

        if has_shortcut:
            # 1x1 stride-2 downsample conv, co-tiled on the same M rows.
            sc = jnp.dot(s_ref[0], wd_ref[...],
                         preferred_element_type=jnp.float32)
            sc_ref[0] = sc.astype(sc_ref.dtype)
            scm = sc * maskf
            stsc_ref[0] = jnp.concatenate(
                [jnp.sum(scm, axis=0, keepdims=True),
                 jnp.sum(scm * sc, axis=0, keepdims=True)], axis=0)

    return kernel


def _finalize_kernel(y_ref, sc_ref, prm_ref, o_ref):
    # prm rows: 0 scale_main, 1 shift_main, 2 scale_shortcut, 3 shift_shortcut
    y = y_ref[...].astype(jnp.float32)
    sc = sc_ref[...].astype(jnp.float32)
    pre = (y * prm_ref[0:1, :] + prm_ref[1:2, :]
           + sc * prm_ref[2:3, :] + prm_ref[3:4, :])
    o_ref[...] = jnp.maximum(pre, 0.0)


# --------------------------- pallas_call wrappers ---------------------------

def _conv_pass(x_flats, w, n_out_rows, *, in_width, out_width, wo_valid,
               split_parity, shortcut=None):
    """Gridded over images. x_flats: 1 or 2 arrays (N, R, Cin_p) bf16.
    w: (9, Cin_p, Cout_p) bf16. shortcut: optional (s_flat, wds)."""
    N = x_flats[0].shape[0]
    cout = w.shape[-1]
    has_shortcut = shortcut is not None

    kernel = _make_conv_stats_kernel(
        n_out_rows=n_out_rows, in_width=in_width, out_width=out_width,
        wo_valid=wo_valid, split_parity=split_parity,
        has_shortcut=has_shortcut)

    in_specs, args = [], []
    for xf in x_flats:
        in_specs.append(pl.BlockSpec((1, xf.shape[1], xf.shape[2]),
                                     lambda n: (n, 0, 0)))
        args.append(xf)
    in_specs.append(pl.BlockSpec(w.shape, lambda n: (0, 0, 0)))
    args.append(w)
    if has_shortcut:
        s_flat, wds = shortcut
        in_specs.append(pl.BlockSpec((1, s_flat.shape[1], s_flat.shape[2]),
                                     lambda n: (n, 0, 0)))
        in_specs.append(pl.BlockSpec(wds.shape, lambda n: (0, 0)))
        args += [s_flat, wds]

    out_shape = [jax.ShapeDtypeStruct((N, n_out_rows, cout), jnp.bfloat16),
                 jax.ShapeDtypeStruct((N, 2, cout), jnp.float32)]
    out_specs = [pl.BlockSpec((1, n_out_rows, cout), lambda n: (n, 0, 0)),
                 pl.BlockSpec((1, 2, cout), lambda n: (n, 0, 0))]
    if has_shortcut:
        out_shape += [jax.ShapeDtypeStruct((N, n_out_rows, cout), jnp.bfloat16),
                      jax.ShapeDtypeStruct((N, 2, cout), jnp.float32)]
        out_specs += [pl.BlockSpec((1, n_out_rows, cout), lambda n: (n, 0, 0)),
                      pl.BlockSpec((1, 2, cout), lambda n: (n, 0, 0))]

    return pl.pallas_call(
        kernel,
        grid=(N,),
        in_specs=in_specs,
        out_specs=out_specs,
        out_shape=out_shape,
        compiler_params=pltpu.CompilerParams(
            dimension_semantics=("parallel",),
            vmem_limit_bytes=VMEM_LIMIT),
    )(*args)


def _finalize_pass(y_flat, sc_flat, prm, tm):
    mpad, cout = y_flat.shape
    return pl.pallas_call(
        _finalize_kernel,
        grid=(mpad // tm,),
        in_specs=[pl.BlockSpec((tm, cout), lambda i: (i, 0)),
                  pl.BlockSpec((tm, cout), lambda i: (i, 0)),
                  pl.BlockSpec(prm.shape, lambda i: (0, 0))],
        out_specs=pl.BlockSpec((tm, cout), lambda i: (i, 0)),
        out_shape=jax.ShapeDtypeStruct((mpad, cout), jnp.float32),
        compiler_params=pltpu.CompilerParams(
            dimension_semantics=("parallel",),
            vmem_limit_bytes=VMEM_LIMIT),
    )(y_flat, sc_flat, prm)


# ------------------------------- forward pass -------------------------------

def _fold_bn(stats, count, gamma, beta, cout_p, outpl):
    ssum = jnp.sum(stats[:, 0, :], axis=0)
    ssq = jnp.sum(stats[:, 1, :], axis=0)
    mean = ssum / count
    var = jnp.maximum(ssq / count - mean * mean, 0.0)
    g = jnp.pad(gamma.reshape(-1), (0, cout_p - outpl))
    b = jnp.pad(beta.reshape(-1), (0, cout_p - outpl))
    scale = g * lax.rsqrt(var + EPS)
    shift = b - mean * scale
    return scale, shift


def basic_block_forward(x_nchw, params):
    """Pallas implementation of BasicBlock.forward. Input/output NCHW."""
    inpl = x_nchw.shape[1]
    outpl = params["w1"].shape[-1]
    stride = outpl // inpl
    N, _, H, W = x_nchw.shape
    assert H % stride == 0 and W % stride == 0
    if stride == 1:
        assert inpl == outpl, "identity shortcut requires inplanes == outplanes"
    Ho, Wo = H // stride, W // stride

    cin_p = _ceil_to(inpl, LANE)
    cout_p = _ceil_to(outpl, LANE)

    # NCHW -> NHWC, zero-pad channels to the lane width.
    x = jnp.transpose(x_nchw, (0, 2, 3, 1)).astype(jnp.float32)
    xc = jnp.pad(x, ((0, 0), (0, 0), (0, 0), (0, cin_p - inpl)))

    # -------- conv1 + bn1 partial stats (grid over images) --------
    Hp, Wp = H + 2, W + 2
    q1 = Ho * Wp                                  # flat output rows per image
    r1 = _ceil_to(Hp * Wp + 8, 16)
    xp = jnp.pad(xc, ((0, 0), (1, 1), (1, 1), (0, 0)))
    xp_flat = jnp.pad(xp.reshape(N, Hp * Wp, cin_p),
                      ((0, 0), (0, r1 - Hp * Wp), (0, 0))).astype(jnp.bfloat16)

    w1p = jnp.pad(params["w1"].reshape(9, inpl, outpl),
                  ((0, 0), (0, cin_p - inpl), (0, cout_p - outpl))
                  ).astype(jnp.bfloat16)

    if stride == 2:
        x_in = (xp_flat[:, 0::2, :], xp_flat[:, 1::2, :])   # parity split
        split = True
    else:
        x_in = (xp_flat,)
        split = False

    y1, st1 = _conv_pass(x_in, w1p, q1, in_width=Wp, out_width=Wp,
                         wo_valid=Wo, split_parity=split)

    count = float(N * Ho * Wo)
    scale1, shift1 = _fold_bn(st1, count, params["g1"], params["b1"],
                              cout_p, outpl)

    # bn1 + relu fused (in XLA) with the re-layout of y1 into conv2's
    # zero-padded flat layout.
    y1v = y1.reshape(N, Ho, Wp, cout_p)[:, :, :Wo, :].astype(jnp.float32)
    a1 = jnp.maximum(y1v * scale1 + shift1, 0.0)

    Hp2, Wp2 = Ho + 2, Wo + 2
    q2 = Ho * Wp2
    r2 = _ceil_to(Hp2 * Wp2 + 8, 8)
    a1p = jnp.pad(a1, ((0, 0), (1, 1), (1, 1), (0, 0)))
    a1p_flat = jnp.pad(a1p.reshape(N, Hp2 * Wp2, cout_p),
                       ((0, 0), (0, r2 - Hp2 * Wp2), (0, 0))
                       ).astype(jnp.bfloat16)

    w2p = jnp.pad(params["w2"].reshape(9, outpl, outpl),
                  ((0, 0), (0, cout_p - outpl), (0, cout_p - outpl))
                  ).astype(jnp.bfloat16)

    # -------- conv2 (+ fused 1x1 stride-2 downsample) + partial stats --------
    if stride == 2:
        x_dec = xc[:, ::2, ::2, :]                            # (N, Ho, Wo, Cp)
        sc_in = jnp.pad(x_dec, ((0, 0), (0, 0), (0, Wp2 - Wo), (0, 0)))
        sc_in = sc_in.reshape(N, q2, cin_p).astype(jnp.bfloat16)
        wdsp = jnp.pad(params["wds"],
                       ((0, cin_p - inpl), (0, cout_p - outpl))
                       ).astype(jnp.bfloat16)
        y2, st2, scr, stsc = _conv_pass(
            (a1p_flat,), w2p, q2, in_width=Wp2, out_width=Wp2, wo_valid=Wo,
            split_parity=False, shortcut=(sc_in, wdsp))
        scale_sc, shift_sc = _fold_bn(stsc, count, params["gds"],
                                      params["bds"], cout_p, outpl)
    else:
        y2, st2 = _conv_pass((a1p_flat,), w2p, q2, in_width=Wp2,
                             out_width=Wp2, wo_valid=Wo, split_parity=False)
        # identity shortcut, laid out to match y2's flat rows
        scr = jnp.pad(xc, ((0, 0), (0, 0), (0, Wp2 - W), (0, 0)))
        scr = scr.reshape(N, q2, cin_p)
        scale_sc = jnp.ones((cout_p,), jnp.float32)
        shift_sc = jnp.zeros((cout_p,), jnp.float32)

    scale2, shift2 = _fold_bn(st2, count, params["g2"], params["b2"],
                              cout_p, outpl)

    prm = jnp.zeros((8, cout_p), jnp.float32)
    prm = prm.at[0].set(scale2).at[1].set(shift2)
    prm = prm.at[2].set(scale_sc).at[3].set(shift_sc)

    # -------- finalize: bn2 (+bn_ds) + residual add + relu, M-row tiles -----
    mtot = N * q2
    tm = 512 if mtot >= 512 else _ceil_to(mtot, 8)
    mpad = _ceil_to(mtot, tm)
    y2f = jnp.pad(y2.reshape(mtot, cout_p), ((0, mpad - mtot), (0, 0)))
    scf = jnp.pad(scr.reshape(mtot, cout_p), ((0, mpad - mtot), (0, 0)))
    outf = _finalize_pass(y2f, scf, prm, tm)

    out = outf[:mtot].reshape(N, Ho, Wp2, cout_p)[:, :, :Wo, :outpl]
    return jnp.transpose(out, (0, 3, 1, 2))                   # back to NCHW


# ------------------------------- init params --------------------------------

def init_params(key, inplanes, outplanes):
    stride = outplanes // inplanes
    k1, k2, k3, k4, k5 = jax.random.split(key, 5)
    params = {
        # conv weights in HWIO layout
        "w1": jax.random.normal(k1, (3, 3, inplanes, outplanes), jnp.float32)
              * (1.0 / math.sqrt(9 * inplanes)),
        "w2": jax.random.normal(k2, (3, 3, outplanes, outplanes), jnp.float32)
              * (1.0 / math.sqrt(9 * outplanes)),
        # BN affine params (perturbed deterministically to exercise the path)
        "g1": 1.0 + 0.1 * jax.random.normal(k4, (1, outplanes), jnp.float32),
        "b1": 0.1 * jax.random.normal(k5, (1, outplanes), jnp.float32),
        "g2": jnp.ones((1, outplanes), jnp.float32),
        "b2": jnp.zeros((1, outplanes), jnp.float32),
    }
    if stride == 2:
        params["wds"] = (jax.random.normal(k3, (inplanes, outplanes),
                                           jnp.float32)
                         * (1.0 / math.sqrt(inplanes)))
        params["gds"] = jnp.ones((1, outplanes), jnp.float32)
        params["bds"] = jnp.zeros((1, outplanes), jnp.float32)
    return params


# --------------------------- pure-JAX reference ----------------------------

def reference_forward(x_nchw, params):
    inplanes = x_nchw.shape[1]
    outplanes = params["w1"].shape[-1]
    stride = outplanes // inplanes
    x = jnp.transpose(x_nchw, (0, 2, 3, 1)).astype(jnp.float32)

    def bn(y, g, b):
        m = jnp.mean(y, axis=(0, 1, 2), keepdims=True)
        v = jnp.mean(jnp.square(y - m), axis=(0, 1, 2), keepdims=True)
        return ((y - m) / jnp.sqrt(v + EPS) * g.reshape(1, 1, 1, -1)
                + b.reshape(1, 1, 1, -1))

    dn = ("NHWC", "HWIO", "NHWC")
    y = lax.conv_general_dilated(x, params["w1"], (stride, stride),
                                 ((1, 1), (1, 1)), dimension_numbers=dn)
    y = jax.nn.relu(bn(y, params["g1"], params["b1"]))
    y = lax.conv_general_dilated(y, params["w2"], (1, 1),
                                 ((1, 1), (1, 1)), dimension_numbers=dn)
    y = bn(y, params["g2"], params["b2"])
    if stride == 2:
        wds = params["wds"].reshape(1, 1, inplanes, outplanes)
        sc = lax.conv_general_dilated(x, wds, (2, 2), ((0, 0), (0, 0)),
                                      dimension_numbers=dn)
        sc = bn(sc, params["gds"], params["bds"])
    else:
        sc = x
    out = jax.nn.relu(y + sc)
    return jnp.transpose(out, (0, 3, 1, 2))


# ---------------------------------- main -----------------------------------

if __name__ == "__main__":
    key = jax.random.PRNGKey(0)
    kx, kp, kx2, kp2 = jax.random.split(key, 4)

    fwd = jax.jit(basic_block_forward)

    # downsample block: stride = 2 (active 1x1-conv shortcut)
    inpl, outpl = 4, 8
    x = jax.random.normal(kx, (2, inpl, 16, 16), jnp.float32)       # NCHW
    params = init_params(kp, inpl, outpl)
    out = jax.block_until_ready(fwd(x, params))
    ref = jax.block_until_ready(reference_forward(x, params))
    assert out.shape == (2, outpl, 8, 8), out.shape
    assert bool(jnp.allclose(out, ref, atol=4e-2, rtol=4e-2)), \
        "stride-2 mismatch vs reference"

    # identity block: stride = 1
    inpl2 = outpl2 = 8
    x2 = jax.random.normal(kx2, (2, inpl2, 16, 16), jnp.float32)
    params2 = init_params(kp2, inpl2, outpl2)
    out2 = jax.block_until_ready(fwd(x2, params2))
    ref2 = jax.block_until_ready(reference_forward(x2, params2))
    assert out2.shape == (2, outpl2, 16, 16), out2.shape
    assert bool(jnp.allclose(out2, ref2, atol=4e-2, rtol=4e-2)), \
        "stride-1 mismatch vs reference"

    print("KERNEL_OK")
</pallas_src>

<mosaic_0001>
module attributes {stable_mosaic.version = 11 : i64} {
  func.func @kernel(%arg0: i32, %arg1: memref<1x168x128xbf16, #tpu.memory_space<vmem>>, %arg2: memref<1x168x128xbf16, #tpu.memory_space<vmem>>, %arg3: memref<9x128x128xbf16, #tpu.memory_space<vmem>>, %arg4: memref<1x144x128xbf16, #tpu.memory_space<vmem>>, %arg5: memref<1x2x128xf32, #tpu.memory_space<vmem>>) attributes {dimension_semantics = [#tpu.dimension_semantics<parallel>], iteration_bounds = array<i64: 2>, scalar_prefetch = 0 : i64, scratch_operands = 0 : i64, tpu.core_type = #tpu.core_type<tc>, window_params = [{transform_indices = @transform_0, window_bounds = array<i64: 1, 168, 128>}, {transform_indices = @transform_1, window_bounds = array<i64: 1, 168, 128>}, {pipeline_mode = #tpu.pipeline_mode<synchronous>, transform_indices = @transform_2, window_bounds = array<i64: 9, 128, 128>}, {transform_indices = @transform_3, window_bounds = array<i64: 1, 144, 128>}, {transform_indices = @transform_4, window_bounds = array<i64: 1, 2, 128>}]} {
    %cst = arith.constant 0.000000e+00 : f32
    %0 = vector.broadcast %cst : f32 to vector<144x128xf32>
    %c0 = arith.constant 0 : index
    %c0_0 = arith.constant 0 : index
    %c0_1 = arith.constant 0 : index
    %1 = vector.load %arg1[%c0, %c0_0, %c0_1] : memref<1x168x128xbf16, #tpu.memory_space<vmem>>, vector<1x144x128xbf16>
    %2 = vector.shape_cast %1 : vector<1x144x128xbf16> to vector<144x128xbf16>
    %c0_2 = arith.constant 0 : index
    %c0_3 = arith.constant 0 : index
    %c0_4 = arith.constant 0 : index
    %3 = vector.load %arg3[%c0_2, %c0_3, %c0_4] : memref<9x128x128xbf16, #tpu.memory_space<vmem>>, vector<1x128x128xbf16>
    %4 = vector.shape_cast %3 : vector<1x128x128xbf16> to vector<128x128xbf16>
    %cst_5 = arith.constant dense<0.000000e+00> : vector<144x128xf32>
    %5 = tpu.matmul %2, %4, %cst_5 {dimension_numbers = #tpu.dot_dimension_numbers<[1], [0], [0], [1], [0, 0, 1, 1], [], []>} : vector<144x128xbf16>, vector<128x128xbf16>, vector<144x128xf32> -> vector<144x128xf32>
    %6 = arith.addf %0, %5 : vector<144x128xf32>
    %c0_6 = arith.constant 0 : index
    %c0_7 = arith.constant 0 : index
    %c0_8 = arith.constant 0 : index
    %7 = vector.load %arg2[%c0_6, %c0_7, %c0_8] : memref<1x168x128xbf16, #tpu.memory_space<vmem>>, vector<1x144x128xbf16>
    %8 = vector.shape_cast %7 : vector<1x144x128xbf16> to vector<144x128xbf16>
    %c1 = arith.constant 1 : index
    %c0_9 = arith.constant 0 : index
    %c0_10 = arith.constant 0 : index
    %9 = vector.load %arg3[%c1, %c0_9, %c0_10] : memref<9x128x128xbf16, #tpu.memory_space<vmem>>, vector<1x128x128xbf16>
    %10 = vector.shape_cast %9 : vector<1x128x128xbf16> to vector<128x128xbf16>
    %cst_11 = arith.constant dense<0.000000e+00> : vector<144x128xf32>
    %11 = tpu.matmul %8, %10, %cst_11 {dimension_numbers = #tpu.dot_dimension_numbers<[1], [0], [0], [1], [0, 0, 1, 1], [], []>} : vector<144x128xbf16>, vector<128x128xbf16>, vector<144x128xf32> -> vector<144x128xf32>
    %12 = arith.addf %6, %11 : vector<144x128xf32>
    %c0_12 = arith.constant 0 : index
    %c1_13 = arith.constant 1 : index
    %c0_14 = arith.constant 0 : index
    %13 = vector.load %arg1[%c0_12, %c1_13, %c0_14] : memref<1x168x128xbf16, #tpu.memory_space<vmem>>, vector<1x144x128xbf16>
    %14 = vector.shape_cast %13 : vector<1x144x128xbf16> to vector<144x128xbf16>
    %c2 = arith.constant 2 : index
    %c0_15 = arith.constant 0 : index
    %c0_16 = arith.constant 0 : index
    %15 = vector.load %arg3[%c2, %c0_15, %c0_16] : memref<9x128x128xbf16, #tpu.memory_space<vmem>>, vector<1x128x128xbf16>
    %16 = vector.shape_cast %15 : vector<1x128x128xbf16> to vector<128x128xbf16>
    %cst_17 = arith.constant dense<0.000000e+00> : vector<144x128xf32>
    %17 = tpu.matmul %14, %16, %cst_17 {dimension_numbers = #tpu.dot_dimension_numbers<[1], [0], [0], [1], [0, 0, 1, 1], [], []>} : vector<144x128xbf16>, vector<128x128xbf16>, vector<144x128xf32> -> vector<144x128xf32>
    %18 = arith.addf %12, %17 : vector<144x128xf32>
    %c0_18 = arith.constant 0 : index
    %c9 = arith.constant 9 : index
    %c0_19 = arith.constant 0 : index
    %19 = vector.load %arg1[%c0_18, %c9, %c0_19] : memref<1x168x128xbf16, #tpu.memory_space<vmem>>, vector<1x144x128xbf16>
    %20 = vector.shape_cast %19 : vector<1x144x128xbf16> to vector<144x128xbf16>
    %c3 = arith.constant 3 : index
    %c0_20 = arith.constant 0 : index
    %c0_21 = arith.constant 0 : index
    %21 = vector.load %arg3[%c3, %c0_20, %c0_21] : memref<9x128x128xbf16, #tpu.memory_space<vmem>>, vector<1x128x128xbf16>
    %22 = vector.shape_cast %21 : vector<1x128x128xbf16> to vector<128x128xbf16>
    %cst_22 = arith.constant dense<0.000000e+00> : vector<144x128xf32>
    %23 = tpu.matmul %20, %22, %cst_22 {dimension_numbers = #tpu.dot_dimension_numbers<[1], [0], [0], [1], [0, 0, 1, 1], [], []>} : vector<144x128xbf16>, vector<128x128xbf16>, vector<144x128xf32> -> vector<144x128xf32>
    %24 = arith.addf %18, %23 : vector<144x128xf32>
    %c0_23 = arith.constant 0 : index
    %c9_24 = arith.constant 9 : index
    %c0_25 = arith.constant 0 : index
    %25 = vector.load %arg2[%c0_23, %c9_24, %c0_25] : memref<1x168x128xbf16, #tpu.memory_space<vmem>>, vector<1x144x128xbf16>
    %26 = vector.shape_cast %25 : vector<1x144x128xbf16> to vector<144x128xbf16>
    %c4 = arith.constant 4 : index
    %c0_26 = arith.constant 0 : index
    %c0_27 = arith.constant 0 : index
    %27 = vector.load %arg3[%c4, %c0_26, %c0_27] : memref<9x128x128xbf16, #tpu.memory_space<vmem>>, vector<1x128x128xbf16>
    %28 = vector.shape_cast %27 : vector<1x128x128xbf16> to vector<128x128xbf16>
    %cst_28 = arith.constant dense<0.000000e+00> : vector<144x128xf32>
    %29 = tpu.matmul %26, %28, %cst_28 {dimension_numbers = #tpu.dot_dimension_numbers<[1], [0], [0], [1], [0, 0, 1, 1], [], []>} : vector<144x128xbf16>, vector<128x128xbf16>, vector<144x128xf32> -> vector<144x128xf32>
    %30 = arith.addf %24, %29 : vector<144x128xf32>
    %c0_29 = arith.constant 0 : index
    %c10 = arith.constant 10 : index
    %c0_30 = arith.constant 0 : index
    %31 = vector.load %arg1[%c0_29, %c10, %c0_30] : memref<1x168x128xbf16, #tpu.memory_space<vmem>>, vector<1x144x128xbf16>
    %32 = vector.shape_cast %31 : vector<1x144x128xbf16> to vector<144x128xbf16>
    %c5 = arith.constant 5 : index
    %c0_31 = arith.constant 0 : index
    %c0_32 = arith.constant 0 : index
    %33 = vector.load %arg3[%c5, %c0_31, %c0_32] : memref<9x128x128xbf16, #tpu.memory_space<vmem>>, vector<1x128x128xbf16>
    %34 = vector.shape_cast %33 : vector<1x128x128xbf16> to vector<128x128xbf16>
    %cst_33 = arith.constant dense<0.000000e+00> : vector<144x128xf32>
    %35 = tpu.matmul %32, %34, %cst_33 {dimension_numbers = #tpu.dot_dimension_numbers<[1], [0], [0], [1], [0, 0, 1, 1], [], []>} : vector<144x128xbf16>, vector<128x128xbf16>, vector<144x128xf32> -> vector<144x128xf32>
    %36 = arith.addf %30, %35 : vector<144x128xf32>
    %c0_34 = arith.constant 0 : index
    %c18 = arith.constant 18 : index
    %c0_35 = arith.constant 0 : index
    %37 = vector.load %arg1[%c0_34, %c18, %c0_35] : memref<1x168x128xbf16, #tpu.memory_space<vmem>>, vector<1x144x128xbf16>
    %38 = vector.shape_cast %37 : vector<1x144x128xbf16> to vector<144x128xbf16>
    %c6 = arith.constant 6 : index
    %c0_36 = arith.constant 0 : index
    %c0_37 = arith.constant 0 : index
    %39 = vector.load %arg3[%c6, %c0_36, %c0_37] : memref<9x128x128xbf16, #tpu.memory_space<vmem>>, vector<1x128x128xbf16>
    %40 = vector.shape_cast %39 : vector<1x128x128xbf16> to vector<128x128xbf16>
    %cst_38 = arith.constant dense<0.000000e+00> : vector<144x128xf32>
    %41 = tpu.matmul %38, %40, %cst_38 {dimension_numbers = #tpu.dot_dimension_numbers<[1], [0], [0], [1], [0, 0, 1, 1], [], []>} : vector<144x128xbf16>, vector<128x128xbf16>, vector<144x128xf32> -> vector<144x128xf32>
    %42 = arith.addf %36, %41 : vector<144x128xf32>
    %c0_39 = arith.constant 0 : index
    %c18_40 = arith.constant 18 : index
    %c0_41 = arith.constant 0 : index
    %43 = vector.load %arg2[%c0_39, %c18_40, %c0_41] : memref<1x168x128xbf16, #tpu.memory_space<vmem>>, vector<1x144x128xbf16>
    %44 = vector.shape_cast %43 : vector<1x144x128xbf16> to vector<144x128xbf16>
    %c7 = arith.constant 7 : index
    %c0_42 = arith.constant 0 : index
    %c0_43 = arith.constant 0 : index
    %45 = vector.load %arg3[%c7, %c0_42, %c0_43] : memref<9x128x128xbf16, #tpu.memory_space<vmem>>, vector<1x128x128xbf16>
    %46 = vector.shape_cast %45 : vector<1x128x128xbf16> to vector<128x128xbf16>
    %cst_44 = arith.constant dense<0.000000e+00> : vector<144x128xf32>
    %47 = tpu.matmul %44, %46, %cst_44 {dimension_numbers = #tpu.dot_dimension_numbers<[1], [0], [0], [1], [0, 0, 1, 1], [], []>} : vector<144x128xbf16>, vector<128x128xbf16>, vector<144x128xf32> -> vector<144x128xf32>
    %48 = arith.addf %42, %47 : vector<144x128xf32>
    %c0_45 = arith.constant 0 : index
    %c19 = arith.constant 19 : index
    %c0_46 = arith.constant 0 : index
    %49 = vector.load %arg1[%c0_45, %c19, %c0_46] : memref<1x168x128xbf16, #tpu.memory_space<vmem>>, vector<1x144x128xbf16>
    %50 = vector.shape_cast %49 : vector<1x144x128xbf16> to vector<144x128xbf16>
    %c8 = arith.constant 8 : index
    %c0_47 = arith.constant 0 : index
    %c0_48 = arith.constant 0 : index
    %51 = vector.load %arg3[%c8, %c0_47, %c0_48] : memref<9x128x128xbf16, #tpu.memory_space<vmem>>, vector<1x128x128xbf16>
    %52 = vector.shape_cast %51 : vector<1x128x128xbf16> to vector<128x128xbf16>
    %cst_49 = arith.constant dense<0.000000e+00> : vector<144x128xf32>
    %53 = tpu.matmul %50, %52, %cst_49 {dimension_numbers = #tpu.dot_dimension_numbers<[1], [0], [0], [1], [0, 0, 1, 1], [], []>} : vector<144x128xbf16>, vector<128x128xbf16>, vector<144x128xf32> -> vector<144x128xf32>
    %54 = arith.addf %48, %53 : vector<144x128xf32>
    %55 = tpu.iota {dimensions = array<i32: 0>} : vector<144x1xi32>
    %c18_i32 = arith.constant 18 : i32
    %c0_i32 = arith.constant 0 : i32
    %56 = arith.cmpi eq, %c18_i32, %c0_i32 : i32
    %c1_i32 = arith.constant 1 : i32
    %57 = arith.select %56, %c1_i32, %c18_i32 : i32
    %58 = vector.broadcast %57 : i32 to vector<144x1xi32>
    %59 = arith.remsi %55, %58 : vector<144x1xi32>
    %c0_i32_50 = arith.constant 0 : i32
    %60 = vector.broadcast %c0_i32_50 : i32 to vector<144x1xi32>
    %61 = arith.cmpi ne, %59, %60 : vector<144x1xi32>
    %c0_i32_51 = arith.constant 0 : i32
    %62 = vector.broadcast %c0_i32_51 : i32 to vector<144x1xi32>
    %63 = arith.cmpi slt, %59, %62 : vector<144x1xi32>
    %c0_i32_52 = arith.constant 0 : i32
    %64 = arith.cmpi slt, %57, %c0_i32_52 : i32
    %65 = vector.broadcast %64 : i1 to vector<144x1xi1>
    %66 = vector.broadcast %65 : vector<144x1xi1> to vector<144x1xi1>
    %67 = arith.xori %63, %66 : vector<144x1xi1>
    %68 = arith.andi %67, %61 : vector<144x1xi1>
    %69 = vector.broadcast %57 : i32 to vector<144x1xi32>
    %70 = arith.addi %59, %69 : vector<144x1xi32>
    %71 = arith.select %68, %70, %59 : vector<144x1xi1>, vector<144x1xi32>
    %c8_i32 = arith.constant 8 : i32
    %72 = vector.broadcast %c8_i32 : i32 to vector<144x1xi32>
    %73 = arith.cmpi slt, %71, %72 : vector<144x1xi32>
    %74 = arith.extui %73 : vector<144x1xi1> to vector<144x1xi32>
    %75 = arith.sitofp %74 : vector<144x1xi32> to vector<144x1xf32>
    %76 = arith.truncf %54 : vector<144x128xf32> to vector<144x128xbf16>
    %c0_53 = arith.constant 0 : index
    %c0_54 = arith.constant 0 : index
    %c0_55 = arith.constant 0 : index
    %77 = vector.load %arg4[%c0_53, %c0_54, %c0_55] : memref<1x144x128xbf16, #tpu.memory_space<vmem>>, vector<1x144x128xbf16>
    %78 = vector.shape_cast %77 : vector<1x144x128xbf16> to vector<144x128xbf16>
    %79 = vector.shape_cast %76 : vector<144x128xbf16> to vector<1x144x128xbf16>
    tpu.vector_store %arg4[%c0_53, %c0_54, %c0_55], %79 {strides = array<i32>} : memref<1x144x128xbf16, #tpu.memory_space<vmem>>, vector<1x144x128xbf16>,
    %80 = vector.broadcast %75 : vector<144x1xf32> to vector<144x128xf32>
    %81 = arith.mulf %54, %80 : vector<144x128xf32>
    %cst_56 = arith.constant dense<0.000000e+00> : vector<128xf32>
    %82 = vector.multi_reduction <add>, %81, %cst_56 [0] : vector<144x128xf32> to vector<128xf32>
    %83 = vector.shape_cast %82 : vector<128xf32> to vector<1x128xf32>
    %84 = arith.mulf %81, %54 : vector<144x128xf32>
    %cst_57 = arith.constant dense<0.000000e+00> : vector<128xf32>
    %85 = vector.multi_reduction <add>, %84, %cst_57 [0] : vector<144x128xf32> to vector<128xf32>
    %86 = vector.shape_cast %85 : vector<128xf32> to vector<1x128xf32>
    %87 = tpu.concatenate %83, %86 in 0 : vector<1x128xf32>, vector<1x128xf32> -> vector<2x128xf32>
    %c0_58 = arith.constant 0 : index
    %c0_59 = arith.constant 0 : index
    %c0_60 = arith.constant 0 : index
    %88 = vector.load %arg5[%c0_58, %c0_59, %c0_60] : memref<1x2x128xf32, #tpu.memory_space<vmem>>, vector<1x2x128xf32>
    %89 = vector.shape_cast %88 : vector<1x2x128xf32> to vector<2x128xf32>
    %90 = vector.shape_cast %87 : vector<2x128xf32> to vector<1x2x128xf32>
    tpu.vector_store %arg5[%c0_58, %c0_59, %c0_60], %90 {strides = array<i32>} : memref<1x2x128xf32, #tpu.memory_space<vmem>>, vector<1x2x128xf32>,
    return
  }
  func.func @transform_0(%arg0: i32) -> (i32, i32, i32) {
    %c0_i32 = arith.constant 0 : i32
    %c0_i32_0 = arith.constant 0 : i32
    %c0_i32_1 = arith.constant 0 : i32
    return %arg0, %c0_i32, %c0_i32_0 : i32, i32, i32
  }
  func.func @transform_1(%arg0: i32) -> (i32, i32, i32) {
    %c0_i32 = arith.constant 0 : i32
    %c0_i32_0 = arith.constant 0 : i32
    %c0_i32_1 = arith.constant 0 : i32
    return %arg0, %c0_i32, %c0_i32_0 : i32, i32, i32
  }
  func.func @transform_2(%arg0: i32) -> (i32, i32, i32) {
    %c0_i32 = arith.constant 0 : i32
    %c0_i32_0 = arith.constant 0 : i32
    %c0_i32_1 = arith.constant 0 : i32
    %c0_i32_2 = arith.constant 0 : i32
    return %c0_i32, %c0_i32_0, %c0_i32_1 : i32, i32, i32
  }
  func.func @transform_3(%arg0: i32) -> (i32, i32, i32) {
    %c0_i32 = arith.constant 0 : i32
    %c0_i32_0 = arith.constant 0 : i32
    %c0_i32_1 = arith.constant 0 : i32
    return %arg0, %c0_i32, %c0_i32_0 : i32, i32, i32
  }
  func.func @transform_4(%arg0: i32) -> (i32, i32, i32) {
    %c0_i32 = arith.constant 0 : i32
    %c0_i32_0 = arith.constant 0 : i32
    %c0_i32_1 = arith.constant 0 : i32
    return %arg0, %c0_i32, %c0_i32_0 : i32, i32, i32
  }
}

module attributes {stable_mosaic.version = 11 : i64} {
  func.func @kernel(%arg0: i32, %arg1: memref<1x112x128xbf16, #tpu.memory_space<vmem>>, %arg2: memref<9x128x128xbf16, #tpu.memory_space<vmem>>, %arg3: memref<1x80x128xbf16, #tpu.memory_space<vmem>>, %arg4: memref<128x128xbf16, #tpu.memory_space<vmem>>, %arg5: memref<1x80x128xbf16, #tpu.memory_space<vmem>>, %arg6: memref<1x2x128xf32, #tpu.memory_space<vmem>>, %arg7: memref<1x80x128xbf16, #tpu.memory_space<vmem>>, %arg8: memref<1x2x128xf32, #tpu.memory_space<vmem>>) attributes {dimension_semantics = [#tpu.dimension_semantics<parallel>], iteration_bounds = array<i64: 2>, scalar_prefetch = 0 : i64, scratch_operands = 0 : i64, tpu.core_type = #tpu.core_type<tc>, window_params = [{transform_indices = @transform_0, window_bounds = array<i64: 1, 112, 128>}, {pipeline_mode = #tpu.pipeline_mode<synchronous>, transform_indices = @transform_1, window_bounds = array<i64: 9, 128, 128>}, {transform_indices = @transform_2, window_bounds = array<i64: 1, 80, 128>}, {pipeline_mode = #tpu.pipeline_mode<synchronous>, transform_indices = @transform_3, window_bounds = array<i64: 128, 128>}, {transform_indices = @transform_4, window_bounds = array<i64: 1, 80, 128>}, {transform_indices = @transform_5, window_bounds = array<i64: 1, 2, 128>}, {transform_indices = @transform_6, window_bounds = array<i64: 1, 80, 128>}, {transform_indices = @transform_7, window_bounds = array<i64: 1, 2, 128>}]} {
    %cst = arith.constant 0.000000e+00 : f32
    %0 = vector.broadcast %cst : f32 to vector<80x128xf32>
    %c0 = arith.constant 0 : index
    %c0_0 = arith.constant 0 : index
    %c0_1 = arith.constant 0 : index
    %1 = vector.load %arg1[%c0, %c0_0, %c0_1] : memref<1x112x128xbf16, #tpu.memory_space<vmem>>, vector<1x80x128xbf16>
    %2 = vector.shape_cast %1 : vector<1x80x128xbf16> to vector<80x128xbf16>
    %c0_2 = arith.constant 0 : index
    %c0_3 = arith.constant 0 : index
    %c0_4 = arith.constant 0 : index
    %3 = vector.load %arg2[%c0_2, %c0_3, %c0_4] : memref<9x128x128xbf16, #tpu.memory_space<vmem>>, vector<1x128x128xbf16>
    %4 = vector.shape_cast %3 : vector<1x128x128xbf16> to vector<128x128xbf16>
    %cst_5 = arith.constant dense<0.000000e+00> : vector<80x128xf32>
    %5 = tpu.matmul %2, %4, %cst_5 {dimension_numbers = #tpu.dot_dimension_numbers<[1], [0], [0], [1], [0, 0, 1, 1], [], []>} : vector<80x128xbf16>, vector<128x128xbf16>, vector<80x128xf32> -> vector<80x128xf32>
    %6 = arith.addf %0, %5 : vector<80x128xf32>
    %c0_6 = arith.constant 0 : index
    %c1 = arith.constant 1 : index
    %c0_7 = arith.constant 0 : index
    %7 = vector.load %arg1[%c0_6, %c1, %c0_7] : memref<1x112x128xbf16, #tpu.memory_space<vmem>>, vector<1x80x128xbf16>
    %8 = vector.shape_cast %7 : vector<1x80x128xbf16> to vector<80x128xbf16>
    %c1_8 = arith.constant 1 : index
    %c0_9 = arith.constant 0 : index
    %c0_10 = arith.constant 0 : index
    %9 = vector.load %arg2[%c1_8, %c0_9, %c0_10] : memref<9x128x128xbf16, #tpu.memory_space<vmem>>, vector<1x128x128xbf16>
    %10 = vector.shape_cast %9 : vector<1x128x128xbf16> to vector<128x128xbf16>
    %cst_11 = arith.constant dense<0.000000e+00> : vector<80x128xf32>
    %11 = tpu.matmul %8, %10, %cst_11 {dimension_numbers = #tpu.dot_dimension_numbers<[1], [0], [0], [1], [0, 0, 1, 1], [], []>} : vector<80x128xbf16>, vector<128x128xbf16>, vector<80x128xf32> -> vector<80x128xf32>
    %12 = arith.addf %6, %11 : vector<80x128xf32>
    %c0_12 = arith.constant 0 : index
    %c2 = arith.constant 2 : index
    %c0_13 = arith.constant 0 : index
    %13 = vector.load %arg1[%c0_12, %c2, %c0_13] : memref<1x112x128xbf16, #tpu.memory_space<vmem>>, vector<1x80x128xbf16>
    %14 = vector.shape_cast %13 : vector<1x80x128xbf16> to vector<80x128xbf16>
    %c2_14 = arith.constant 2 : index
    %c0_15 = arith.constant 0 : index
    %c0_16 = arith.constant 0 : index
    %15 = vector.load %arg2[%c2_14, %c0_15, %c0_16] : memref<9x128x128xbf16, #tpu.memory_space<vmem>>, vector<1x128x128xbf16>
    %16 = vector.shape_cast %15 : vector<1x128x128xbf16> to vector<128x128xbf16>
    %cst_17 = arith.constant dense<0.000000e+00> : vector<80x128xf32>
    %17 = tpu.matmul %14, %16, %cst_17 {dimension_numbers = #tpu.dot_dimension_numbers<[1], [0], [0], [1], [0, 0, 1, 1], [], []>} : vector<80x128xbf16>, vector<128x128xbf16>, vector<80x128xf32> -> vector<80x128xf32>
    %18 = arith.addf %12, %17 : vector<80x128xf32>
    %c0_18 = arith.constant 0 : index
    %c10 = arith.constant 10 : index
    %c0_19 = arith.constant 0 : index
    %19 = vector.load %arg1[%c0_18, %c10, %c0_19] : memref<1x112x128xbf16, #tpu.memory_space<vmem>>, vector<1x80x128xbf16>
    %20 = vector.shape_cast %19 : vector<1x80x128xbf16> to vector<80x128xbf16>
    %c3 = arith.constant 3 : index
    %c0_20 = arith.constant 0 : index
    %c0_21 = arith.constant 0 : index
    %21 = vector.load %arg2[%c3, %c0_20, %c0_21] : memref<9x128x128xbf16, #tpu.memory_space<vmem>>, vector<1x128x128xbf16>
    %22 = vector.shape_cast %21 : vector<1x128x128xbf16> to vector<128x128xbf16>
    %cst_22 = arith.constant dense<0.000000e+00> : vector<80x128xf32>
    %23 = tpu.matmul %20, %22, %cst_22 {dimension_numbers = #tpu.dot_dimension_numbers<[1], [0], [0], [1], [0, 0, 1, 1], [], []>} : vector<80x128xbf16>, vector<128x128xbf16>, vector<80x128xf32> -> vector<80x128xf32>
    %24 = arith.addf %18, %23 : vector<80x128xf32>
    %c0_23 = arith.constant 0 : index
    %c11 = arith.constant 11 : index
    %c0_24 = arith.constant 0 : index
    %25 = vector.load %arg1[%c0_23, %c11, %c0_24] : memref<1x112x128xbf16, #tpu.memory_space<vmem>>, vector<1x80x128xbf16>
    %26 = vector.shape_cast %25 : vector<1x80x128xbf16> to vector<80x128xbf16>
    %c4 = arith.constant 4 : index
    %c0_25 = arith.constant 0 : index
    %c0_26 = arith.constant 0 : index
    %27 = vector.load %arg2[%c4, %c0_25, %c0_26] : memref<9x128x128xbf16, #tpu.memory_space<vmem>>, vector<1x128x128xbf16>
    %28 = vector.shape_cast %27 : vector<1x128x128xbf16> to vector<128x128xbf16>
    %cst_27 = arith.constant dense<0.000000e+00> : vector<80x128xf32>
    %29 = tpu.matmul %26, %28, %cst_27 {dimension_numbers = #tpu.dot_dimension_numbers<[1], [0], [0], [1], [0, 0, 1, 1], [], []>} : vector<80x128xbf16>, vector<128x128xbf16>, vector<80x128xf32> -> vector<80x128xf32>
    %30 = arith.addf %24, %29 : vector<80x128xf32>
    %c0_28 = arith.constant 0 : index
    %c12 = arith.constant 12 : index
    %c0_29 = arith.constant 0 : index
    %31 = vector.load %arg1[%c0_28, %c12, %c0_29] : memref<1x112x128xbf16, #tpu.memory_space<vmem>>, vector<1x80x128xbf16>
    %32 = vector.shape_cast %31 : vector<1x80x128xbf16> to vector<80x128xbf16>
    %c5 = arith.constant 5 : index
    %c0_30 = arith.constant 0 : index
    %c0_31 = arith.constant 0 : index
    %33 = vector.load %arg2[%c5, %c0_30, %c0_31] : memref<9x128x128xbf16, #tpu.memory_space<vmem>>, vector<1x128x128xbf16>
    %34 = vector.shape_cast %33 : vector<1x128x128xbf16> to vector<128x128xbf16>
    %cst_32 = arith.constant dense<0.000000e+00> : vector<80x128xf32>
    %35 = tpu.matmul %32, %34, %cst_32 {dimension_numbers = #tpu.dot_dimension_numbers<[1], [0], [0], [1], [0, 0, 1, 1], [], []>} : vector<80x128xbf16>, vector<128x128xbf16>, vector<80x128xf32> -> vector<80x128xf32>
    %36 = arith.addf %30, %35 : vector<80x128xf32>
    %c0_33 = arith.constant 0 : index
    %c20 = arith.constant 20 : index
    %c0_34 = arith.constant 0 : index
    %37 = vector.load %arg1[%c0_33, %c20, %c0_34] : memref<1x112x128xbf16, #tpu.memory_space<vmem>>, vector<1x80x128xbf16>
    %38 = vector.shape_cast %37 : vector<1x80x128xbf16> to vector<80x128xbf16>
    %c6 = arith.constant 6 : index
    %c0_35 = arith.constant 0 : index
    %c0_36 = arith.constant 0 : index
    %39 = vector.load %arg2[%c6, %c0_35, %c0_36] : memref<9x128x128xbf16, #tpu.memory_space<vmem>>, vector<1x128x128xbf16>
    %40 = vector.shape_cast %39 : vector<1x128x128xbf16> to vector<128x128xbf16>
    %cst_37 = arith.constant dense<0.000000e+00> : vector<80x128xf32>
    %41 = tpu.matmul %38, %40, %cst_37 {dimension_numbers = #tpu.dot_dimension_numbers<[1], [0], [0], [1], [0, 0, 1, 1], [], []>} : vector<80x128xbf16>, vector<128x128xbf16>, vector<80x128xf32> -> vector<80x128xf32>
    %42 = arith.addf %36, %41 : vector<80x128xf32>
    %c0_38 = arith.constant 0 : index
    %c21 = arith.constant 21 : index
    %c0_39 = arith.constant 0 : index
    %43 = vector.load %arg1[%c0_38, %c21, %c0_39] : memref<1x112x128xbf16, #tpu.memory_space<vmem>>, vector<1x80x128xbf16>
    %44 = vector.shape_cast %43 : vector<1x80x128xbf16> to vector<80x128xbf16>
    %c7 = arith.constant 7 : index
    %c0_40 = arith.constant 0 : index
    %c0_41 = arith.constant 0 : index
    %45 = vector.load %arg2[%c7, %c0_40, %c0_41] : memref<9x128x128xbf16, #tpu.memory_space<vmem>>, vector<1x128x128xbf16>
    %46 = vector.shape_cast %45 : vector<1x128x128xbf16> to vector<128x128xbf16>
    %cst_42 = arith.constant dense<0.000000e+00> : vector<80x128xf32>
    %47 = tpu.matmul %44, %46, %cst_42 {dimension_numbers = #tpu.dot_dimension_numbers<[1], [0], [0], [1], [0, 0, 1, 1], [], []>} : vector<80x128xbf16>, vector<128x128xbf16>, vector<80x128xf32> -> vector<80x128xf32>
    %48 = arith.addf %42, %47 : vector<80x128xf32>
    %c0_43 = arith.constant 0 : index
    %c22 = arith.constant 22 : index
    %c0_44 = arith.constant 0 : index
    %49 = vector.load %arg1[%c0_43, %c22, %c0_44] : memref<1x112x128xbf16, #tpu.memory_space<vmem>>, vector<1x80x128xbf16>
    %50 = vector.shape_cast %49 : vector<1x80x128xbf16> to vector<80x128xbf16>
    %c8 = arith.constant 8 : index
    %c0_45 = arith.constant 0 : index
    %c0_46 = arith.constant 0 : index
    %51 = vector.load %arg2[%c8, %c0_45, %c0_46] : memref<9x128x128xbf16, #tpu.memory_space<vmem>>, vector<1x128x128xbf16>
    %52 = vector.shape_cast %51 : vector<1x128x128xbf16> to vector<128x128xbf16>
    %cst_47 = arith.constant dense<0.000000e+00> : vector<80x128xf32>
    %53 = tpu.matmul %50, %52, %cst_47 {dimension_numbers = #tpu.dot_dimension_numbers<[1], [0], [0], [1], [0, 0, 1, 1], [], []>} : vector<80x128xbf16>, vector<128x128xbf16>, vector<80x128xf32> -> vector<80x128xf32>
    %54 = arith.addf %48, %53 : vector<80x128xf32>
    %55 = tpu.iota {dimensions = array<i32: 0>} : vector<80x1xi32>
    %c10_i32 = arith.constant 10 : i32
    %c0_i32 = arith.constant 0 : i32
    %56 = arith.cmpi eq, %c10_i32, %c0_i32 : i32
    %c1_i32 = arith.constant 1 : i32
    %57 = arith.select %56, %c1_i32, %c10_i32 : i32
    %58 = vector.broadcast %57 : i32 to vector<80x1xi32>
    %59 = arith.remsi %55, %58 : vector<80x1xi32>
    %c0_i32_48 = arith.constant 0 : i32
    %60 = vector.broadcast %c0_i32_48 : i32 to vector<80x1xi32>
    %61 = arith.cmpi ne, %59, %60 : vector<80x1xi32>
    %c0_i32_49 = arith.constant 0 : i32
    %62 = vector.broadcast %c0_i32_49 : i32 to vector<80x1xi32>
    %63 = arith.cmpi slt, %59, %62 : vector<80x1xi32>
    %c0_i32_50 = arith.constant 0 : i32
    %64 = arith.cmpi slt, %57, %c0_i32_50 : i32
    %65 = vector.broadcast %64 : i1 to vector<80x1xi1>
    %66 = vector.broadcast %65 : vector<80x1xi1> to vector<80x1xi1>
    %67 = arith.xori %63, %66 : vector<80x1xi1>
    %68 = arith.andi %67, %61 : vector<80x1xi1>
    %69 = vector.broadcast %57 : i32 to vector<80x1xi32>
    %70 = arith.addi %59, %69 : vector<80x1xi32>
    %71 = arith.select %68, %70, %59 : vector<80x1xi1>, vector<80x1xi32>
    %c8_i32 = arith.constant 8 : i32
    %72 = vector.broadcast %c8_i32 : i32 to vector<80x1xi32>
    %73 = arith.cmpi slt, %71, %72 : vector<80x1xi32>
    %74 = arith.extui %73 : vector<80x1xi1> to vector<80x1xi32>
    %75 = arith.sitofp %74 : vector<80x1xi32> to vector<80x1xf32>
    %76 = arith.truncf %54 : vector<80x128xf32> to vector<80x128xbf16>
    %c0_51 = arith.constant 0 : index
    %c0_52 = arith.constant 0 : index
    %c0_53 = arith.constant 0 : index
    %77 = vector.load %arg5[%c0_51, %c0_52, %c0_53] : memref<1x80x128xbf16, #tpu.memory_space<vmem>>, vector<1x80x128xbf16>
    %78 = vector.shape_cast %77 : vector<1x80x128xbf16> to vector<80x128xbf16>
    %79 = vector.shape_cast %76 : vector<80x128xbf16> to vector<1x80x128xbf16>
    tpu.vector_store %arg5[%c0_51, %c0_52, %c0_53], %79 {strides = array<i32>} : memref<1x80x128xbf16, #tpu.memory_space<vmem>>, vector<1x80x128xbf16>,
    %80 = vector.broadcast %75 : vector<80x1xf32> to vector<80x128xf32>
    %81 = arith.mulf %54, %80 : vector<80x128xf32>
    %cst_54 = arith.constant dense<0.000000e+00> : vector<128xf32>
    %82 = vector.multi_reduction <add>, %81, %cst_54 [0] : vector<80x128xf32> to vector<128xf32>
    %83 = vector.shape_cast %82 : vector<128xf32> to vector<1x128xf32>
    %84 = arith.mulf %81, %54 : vector<80x128xf32>
    %cst_55 = arith.constant dense<0.000000e+00> : vector<128xf32>
    %85 = vector.multi_reduction <add>, %84, %cst_55 [0] : vector<80x128xf32> to vector<128xf32>
    %86 = vector.shape_cast %85 : vector<128xf32> to vector<1x128xf32>
    %87 = tpu.concatenate %83, %86 in 0 : vector<1x128xf32>, vector<1x128xf32> -> vector<2x128xf32>
    %c0_56 = arith.constant 0 : index
    %c0_57 = arith.constant 0 : index
    %c0_58 = arith.constant 0 : index
    %88 = vector.load %arg6[%c0_56, %c0_57, %c0_58] : memref<1x2x128xf32, #tpu.memory_space<vmem>>, vector<1x2x128xf32>
    %89 = vector.shape_cast %88 : vector<1x2x128xf32> to vector<2x128xf32>
    %90 = vector.shape_cast %87 : vector<2x128xf32> to vector<1x2x128xf32>
    tpu.vector_store %arg6[%c0_56, %c0_57, %c0_58], %90 {strides = array<i32>} : memref<1x2x128xf32, #tpu.memory_space<vmem>>, vector<1x2x128xf32>,
    %c0_59 = arith.constant 0 : index
    %c0_60 = arith.constant 0 : index
    %c0_61 = arith.constant 0 : index
    %91 = vector.load %arg3[%c0_59, %c0_60, %c0_61] : memref<1x80x128xbf16, #tpu.memory_space<vmem>>, vector<1x80x128xbf16>
    %92 = vector.shape_cast %91 : vector<1x80x128xbf16> to vector<80x128xbf16>
    %c0_62 = arith.constant 0 : index
    %c0_63 = arith.constant 0 : index
    %93 = vector.load %arg4[%c0_62, %c0_63] : memref<128x128xbf16, #tpu.memory_space<vmem>>, vector<128x128xbf16>
    %cst_64 = arith.constant dense<0.000000e+00> : vector<80x128xf32>
    %94 = tpu.matmul %92, %93, %cst_64 {dimension_numbers = #tpu.dot_dimension_numbers<[1], [0], [0], [1], [0, 0, 1, 1], [], []>} : vector<80x128xbf16>, vector<128x128xbf16>, vector<80x128xf32> -> vector<80x128xf32>
    %95 = arith.truncf %94 : vector<80x128xf32> to vector<80x128xbf16>
    %c0_65 = arith.constant 0 : index
    %c0_66 = arith.constant 0 : index
    %c0_67 = arith.constant 0 : index
    %96 = vector.load %arg7[%c0_65, %c0_66, %c0_67] : memref<1x80x128xbf16, #tpu.memory_space<vmem>>, vector<1x80x128xbf16>
    %97 = vector.shape_cast %96 : vector<1x80x128xbf16> to vector<80x128xbf16>
    %98 = vector.shape_cast %95 : vector<80x128xbf16> to vector<1x80x128xbf16>
    tpu.vector_store %arg7[%c0_65, %c0_66, %c0_67], %98 {strides = array<i32>} : memref<1x80x128xbf16, #tpu.memory_space<vmem>>, vector<1x80x128xbf16>,
    %99 = vector.broadcast %75 : vector<80x1xf32> to vector<80x128xf32>
    %100 = arith.mulf %94, %99 : vector<80x128xf32>
    %cst_68 = arith.constant dense<0.000000e+00> : vector<128xf32>
    %101 = vector.multi_reduction <add>, %100, %cst_68 [0] : vector<80x128xf32> to vector<128xf32>
    %102 = vector.shape_cast %101 : vector<128xf32> to vector<1x128xf32>
    %103 = arith.mulf %100, %94 : vector<80x128xf32>
    %cst_69 = arith.constant dense<0.000000e+00> : vector<128xf32>
    %104 = vector.multi_reduction <add>, %103, %cst_69 [0] : vector<80x128xf32> to vector<128xf32>
    %105 = vector.shape_cast %104 : vector<128xf32> to vector<1x128xf32>
    %106 = tpu.concatenate %102, %105 in 0 : vector<1x128xf32>, vector<1x128xf32> -> vector<2x128xf32>
    %c0_70 = arith.constant 0 : index
    %c0_71 = arith.constant 0 : index
    %c0_72 = arith.constant 0 : index
    %107 = vector.load %arg8[%c0_70, %c0_71, %c0_72] : memref<1x2x128xf32, #tpu.memory_space<vmem>>, vector<1x2x128xf32>
    %108 = vector.shape_cast %107 : vector<1x2x128xf32> to vector<2x128xf32>
    %109 = vector.shape_cast %106 : vector<2x128xf32> to vector<1x2x128xf32>
    tpu.vector_store %arg8[%c0_70, %c0_71, %c0_72], %109 {strides = array<i32>} : memref<1x2x128xf32, #tpu.memory_space<vmem>>, vector<1x2x128xf32>,
    return
  }
  func.func @transform_0(%arg0: i32) -> (i32, i32, i32) {
    %c0_i32 = arith.constant 0 : i32
    %c0_i32_0 = arith.constant 0 : i32
    %c0_i32_1 = arith.constant 0 : i32
    return %arg0, %c0_i32, %c0_i32_0 : i32, i32, i32
  }
  func.func @transform_1(%arg0: i32) -> (i32, i32, i32) {
    %c0_i32 = arith.constant 0 : i32
    %c0_i32_0 = arith.constant 0 : i32
    %c0_i32_1 = arith.constant 0 : i32
    %c0_i32_2 = arith.constant 0 : i32
    return %c0_i32, %c0_i32_0, %c0_i32_1 : i32, i32, i32
  }
  func.func @transform_2(%arg0: i32) -> (i32, i32, i32) {
    %c0_i32 = arith.constant 0 : i32
    %c0_i32_0 = arith.constant 0 : i32
    %c0_i32_1 = arith.constant 0 : i32
    return %arg0, %c0_i32, %c0_i32_0 : i32, i32, i32
  }
  func.func @transform_3(%arg0: i32) -> (i32, i32) {
    %c0_i32 = arith.constant 0 : i32
    %c0_i32_0 = arith.constant 0 : i32
    %c0_i32_1 = arith.constant 0 : i32
    return %c0_i32, %c0_i32_0 : i32, i32
  }
  func.func @transform_4(%arg0: i32) -> (i32, i32, i32) {
    %c0_i32 = arith.constant 0 : i32
    %c0_i32_0 = arith.constant 0 : i32
    %c0_i32_1 = arith.constant 0 : i32
    return %arg0, %c0_i32, %c0_i32_0 : i32, i32, i32
  }
  func.func @transform_5(%arg0: i32) -> (i32, i32, i32) {
    %c0_i32 = arith.constant 0 : i32
    %c0_i32_0 = arith.constant 0 : i32
    %c0_i32_1 = arith.constant 0 : i32
    return %arg0, %c0_i32, %c0_i32_0 : i32, i32, i32
  }
  func.func @transform_6(%arg0: i32) -> (i32, i32, i32) {
    %c0_i32 = arith.constant 0 : i32
    %c0_i32_0 = arith.constant 0 : i32
    %c0_i32_1 = arith.constant 0 : i32
    return %arg0, %c0_i32, %c0_i32_0 : i32, i32, i32
  }
  func.func @transform_7(%arg0: i32) -> (i32, i32, i32) {
    %c0_i32 = arith.constant 0 : i32
    %c0_i32_0 = arith.constant 0 : i32
    %c0_i32_1 = arith.constant 0 : i32
    return %arg0, %c0_i32, %c0_i32_0 : i32, i32, i32
  }
}

module attributes {stable_mosaic.version = 11 : i64} {
  func.func @_finalize_kernel(%arg0: i32, %arg1: memref<160x128xbf16, #tpu.memory_space<vmem>>, %arg2: memref<160x128xbf16, #tpu.memory_space<vmem>>, %arg3: memref<8x128xf32, #tpu.memory_space<vmem>>, %arg4: memref<160x128xf32, #tpu.memory_space<vmem>>) attributes {dimension_semantics = [#tpu.dimension_semantics<parallel>], iteration_bounds = array<i64: 1>, scalar_prefetch = 0 : i64, scratch_operands = 0 : i64, tpu.core_type = #tpu.core_type<tc>, window_params = [{transform_indices = @transform_0, window_bounds = array<i64: 160, 128>}, {transform_indices = @transform_1, window_bounds = array<i64: 160, 128>}, {pipeline_mode = #tpu.pipeline_mode<synchronous>, transform_indices = @transform_2, window_bounds = array<i64: 8, 128>}, {transform_indices = @transform_3, window_bounds = array<i64: 160, 128>}]} {
    %c0 = arith.constant 0 : index
    %c0_0 = arith.constant 0 : index
    %0 = vector.load %arg1[%c0, %c0_0] : memref<160x128xbf16, #tpu.memory_space<vmem>>, vector<160x128xbf16>
    %1 = arith.extf %0 : vector<160x128xbf16> to vector<160x128xf32>
    %c0_1 = arith.constant 0 : index
    %c0_2 = arith.constant 0 : index
    %2 = vector.load %arg2[%c0_1, %c0_2] : memref<160x128xbf16, #tpu.memory_space<vmem>>, vector<160x128xbf16>
    %3 = arith.extf %2 : vector<160x128xbf16> to vector<160x128xf32>
    %c0_3 = arith.constant 0 : index
    %c0_4 = arith.constant 0 : index
    %4 = vector.load %arg3[%c0_3, %c0_4] : memref<8x128xf32, #tpu.memory_space<vmem>>, vector<1x128xf32>
    %5 = vector.broadcast %4 : vector<1x128xf32> to vector<160x128xf32>
    %6 = arith.mulf %1, %5 : vector<160x128xf32>
    %c1 = arith.constant 1 : index
    %c0_5 = arith.constant 0 : index
    %7 = vector.load %arg3[%c1, %c0_5] : memref<8x128xf32, #tpu.memory_space<vmem>>, vector<1x128xf32>
    %8 = vector.broadcast %7 : vector<1x128xf32> to vector<160x128xf32>
    %9 = arith.addf %6, %8 : vector<160x128xf32>
    %c2 = arith.constant 2 : index
    %c0_6 = arith.constant 0 : index
    %10 = vector.load %arg3[%c2, %c0_6] : memref<8x128xf32, #tpu.memory_space<vmem>>, vector<1x128xf32>
    %11 = vector.broadcast %10 : vector<1x128xf32> to vector<160x128xf32>
    %12 = arith.mulf %3, %11 : vector<160x128xf32>
    %13 = arith.addf %9, %12 : vector<160x128xf32>
    %c3 = arith.constant 3 : index
    %c0_7 = arith.constant 0 : index
    %14 = vector.load %arg3[%c3, %c0_7] : memref<8x128xf32, #tpu.memory_space<vmem>>, vector<1x128xf32>
    %15 = vector.broadcast %14 : vector<1x128xf32> to vector<160x128xf32>
    %16 = arith.addf %13, %15 : vector<160x128xf32>
    %cst = arith.constant 0.000000e+00 : f32
    %17 = vector.broadcast %cst : f32 to vector<160x128xf32>
    %18 = arith.maximumf %16, %17 : vector<160x128xf32>
    %c0_8 = arith.constant 0 : index
    %c0_9 = arith.constant 0 : index
    %19 = vector.load %arg4[%c0_8, %c0_9] : memref<160x128xf32, #tpu.memory_space<vmem>>, vector<160x128xf32>
    tpu.vector_store %arg4[%c0_8, %c0_9], %18 {strides = array<i32>} : memref<160x128xf32, #tpu.memory_space<vmem>>, vector<160x128xf32>,
    return
  }
  func.func @transform_0(%arg0: i32) -> (i32, i32) {
    %c0_i32 = arith.constant 0 : i32
    %c0_i32_0 = arith.constant 0 : i32
    return %arg0, %c0_i32 : i32, i32
  }
  func.func @transform_1(%arg0: i32) -> (i32, i32) {
    %c0_i32 = arith.constant 0 : i32
    %c0_i32_0 = arith.constant 0 : i32
    return %arg0, %c0_i32 : i32, i32
  }
  func.func @transform_2(%arg0: i32) -> (i32, i32) {
    %c0_i32 = arith.constant 0 : i32
    %c0_i32_0 = arith.constant 0 : i32
    %c0_i32_1 = arith.constant 0 : i32
    return %c0_i32, %c0_i32_0 : i32, i32
  }
  func.func @transform_3(%arg0: i32) -> (i32, i32) {
    %c0_i32 = arith.constant 0 : i32
    %c0_i32_0 = arith.constant 0 : i32
    return %arg0, %c0_i32 : i32, i32
  }
}

</mosaic_0001>

<llo_original>
// kernel: basic_block_forward.3
$region0: #{basic_block_forward.3}
  #allocation0 [shape = 'u32[]', space=smem, size = 0x4, offset = 0x4, fixed_abs, tag = 'smem constant byte address 0x4 - core index']
  #allocation1 [shape = 'u32[144,128]{1,0:T(1,128)}', space=vmem, size = 0x12000, scoped, tag = 'internal scratch']
  %s0 = inlined_call_operand.vmem [shape: bf16[2,168,128], index: 0, kind: input, shape index: {}]
  %s1 = inlined_call_operand.vmem [shape: bf16[2,168,128], index: 1, kind: input, shape index: {}]
  %s2 = inlined_call_operand.vmem [shape: bf16[9,128,128], index: 2, kind: input, shape index: {}]
  %s3 = inlined_call_operand.vmem [shape: bf16[2,144,128], index: 3, kind: output, shape index: {0}]
  %s4 = inlined_call_operand.vmem [shape: f32[2,2,128], index: 4, kind: output, shape index: {1}]
  %5 = xla_tuple %s3, %s4
  %s6 = sld [smem:[#allocation0]]
  $region53: #{basic_block_forward.3} parent=0
    _
  %s8 = ssub.s32 1, %s6
  %s9 = scalar_select 0, %s8, %s6
  loop: start=0, step=1, limit=4
  $region2: #{basic_block_forward.3} parent=0 // loop_pre_header
    _
  $region3: #{basic_block_forward.3} parent=0 // loop_header
    %s11 = sphi 0, %s15
    %p12 = scmp.ge.s32.totalorder %s11, 4
    %s21 = sphi 0, %s23
    %s24 = sphi 0, %s21
    %s25 = sphi 0, %s24
    %s41 = sphi 0, %s25
    %s47 = sphi 0, %s49
    %s50 = sphi 0, %s47
    %s51 = sphi 0, %s50
    %s67 = sphi 0, %s51
    %s71 = sphi 0, %s71
    %s73 = sphi 0, %s71
    %s74 = sphi 0, %s73
    %s88 = sphi 0, %s74
    %s94 = sphi 0, %s96
    %s97 = sphi 0, %s94
    %s98 = sphi 0, %s97
    %s114 = sphi 0, %s98
    %s120 = sphi 0, %s122
    %s123 = sphi 0, %s120
    %s124 = sphi 0, %s123
    %s140 = sphi 0, %s124
  $region4: #{basic_block_forward.3} parent=0 // loop_header_branch
    %14 = sbr.rel (%p12) target = $region8
  $region5: #{basic_block_forward.3} parent=0 // loop_body
    %s16 = ssub.s32 %s11, 1
    %s17 = ssub.s32 %s11, 2
    %s18 = sadd.s32 %s11, 1
    %s19 = ssub.s32 %s11, %s18
    %p20 = scmp.eq.s32.totalorder %s19, 0
    %s22 = sadd.s32 %s21, 1
    %s23 = scalar_select %p20, %s21, %s22
    %p26 = pneg %p20
    %p27 = scmp.eq.s32.totalorder %s11, 1
    %p28 = por %p26, %p27
    %p29 = scmp.ne.s32.totalorder %s21, %s24
    %p30 = scmp.eq.s32.totalorder %s11, 0
    %p31 = por %p29, %p30
    %p32 = scmp.ne.s32.totalorder %s21, %s24
    %p33 = scmp.eq.s32.totalorder %s16, 1
    %p34 = por %p32, %p33
    %p35 = scmp.ne.s32.totalorder %s24, %s25
    %p36 = scmp.eq.s32.totalorder %s16, 0
    %p37 = por %p35, %p36
    %p38 = scmp.ne.s32.totalorder %s24, %s25
    %p39 = scmp.eq.s32.totalorder %s17, 1
    %p40 = por %p38, %p39
    %p42 = scmp.ne.s32.totalorder %s25, %s41
    %p43 = scmp.eq.s32.totalorder %s17, 0
    %p44 = por %p42, %p43
    %s45 = ssub.s32 %s11, %s18
    %p46 = scmp.eq.s32.totalorder %s45, 0
    %s48 = sadd.s32 %s47, 1
    %s49 = scalar_select %p46, %s47, %s48
    %p52 = pneg %p46
    %p53 = scmp.eq.s32.totalorder %s11, 1
    %p54 = por %p52, %p53
    %p55 = scmp.ne.s32.totalorder %s47, %s50
    %p56 = scmp.eq.s32.totalorder %s11, 0
    %p57 = por %p55, %p56
    %p58 = scmp.ne.s32.totalorder %s47, %s50
    %p59 = scmp.eq.s32.totalorder %s16, 1
    %p60 = por %p58, %p59
    %p61 = scmp.ne.s32.totalorder %s50, %s51
    %p62 = scmp.eq.s32.totalorder %s16, 0
    %p63 = por %p61, %p62
    %p64 = scmp.ne.s32.totalorder %s50, %s51
    %p65 = scmp.eq.s32.totalorder %s17, 1
    %p66 = por %p64, %p65
    %p68 = scmp.ne.s32.totalorder %s51, %s67
    %p69 = scmp.eq.s32.totalorder %s17, 0
    %p70 = por %p68, %p69
    %s72 = sadd.s32 %s71, 1
    %p75 = scmp.eq.s32.totalorder %s11, 1
    %p76 = scmp.ne.s32.totalorder %s71, %s73
    %p77 = scmp.eq.s32.totalorder %s11, 0
    %p78 = por %p76, %p77
    %p79 = scmp.ne.s32.totalorder %s71, %s73
    %p80 = scmp.eq.s32.totalorder %s16, 1
    %p81 = por %p79, %p80
    %p82 = scmp.ne.s32.totalorder %s73, %s74
    %p83 = scmp.eq.s32.totalorder %s16, 0
    %p84 = por %p82, %p83
    %p85 = scmp.ne.s32.totalorder %s73, %s74
    %p86 = scmp.eq.s32.totalorder %s17, 1
    %p87 = por %p85, %p86
    %p89 = scmp.ne.s32.totalorder %s74, %s88
    %p90 = scmp.eq.s32.totalorder %s17, 0
    %p91 = por %p89, %p90
    %s92 = ssub.s32 %s11, %s18
    %p93 = scmp.eq.s32.totalorder %s92, 0
    %s95 = sadd.s32 %s94, 1
    %s96 = scalar_select %p93, %s94, %s95
    %p99 = pneg %p93
    %p100 = scmp.eq.s32.totalorder %s11, 1
    %p101 = por %p99, %p100
    %p102 = scmp.ne.s32.totalorder %s94, %s97
    %p103 = scmp.eq.s32.totalorder %s11, 0
    %p104 = por %p102, %p103
    %p105 = scmp.ne.s32.totalorder %s94, %s97
    %p106 = scmp.eq.s32.totalorder %s16, 1
    %p107 = por %p105, %p106
    %p108 = scmp.ne.s32.totalorder %s97, %s98
    %p109 = scmp.eq.s32.totalorder %s16, 0
    %p110 = por %p108, %p109
    %p111 = scmp.ne.s32.totalorder %s97, %s98
    %p112 = scmp.eq.s32.totalorder %s17, 1
    %p113 = por %p111, %p112
    %p115 = scmp.ne.s32.totalorder %s98, %s114
    %p116 = scmp.eq.s32.totalorder %s17, 0
    %p117 = por %p115, %p116
    %s118 = ssub.s32 %s11, %s18
    %p119 = scmp.eq.s32.totalorder %s118, 0
    %s121 = sadd.s32 %s120, 1
    %s122 = scalar_select %p119, %s120, %s121
    %p125 = pneg %p119
    %p126 = scmp.eq.s32.totalorder %s11, 1
    %p127 = por %p125, %p126
    %p128 = scmp.ne.s32.totalorder %s120, %s123
    %p129 = scmp.eq.s32.totalorder %s11, 0
    %p130 = por %p128, %p129
    %p131 = scmp.ne.s32.totalorder %s120, %s123
    %p132 = scmp.eq.s32.totalorder %s16, 1
    %p133 = por %p131, %p132
    %p134 = scmp.ne.s32.totalorder %s123, %s124
    %p135 = scmp.eq.s32.totalorder %s16, 0
    %p136 = por %p134, %p135
    %p137 = scmp.ne.s32.totalorder %s123, %s124
    %p138 = scmp.eq.s32.totalorder %s17, 1
    %p139 = por %p137, %p138
    %p141 = scmp.ne.s32.totalorder %s124, %s140
    %p142 = scmp.eq.s32.totalorder %s17, 0
    %p143 = por %p141, %p142
    %p144 = scmp.le.s32.totalorder 1, %s11
    %p145 = scmp.lt.s32.totalorder %s11, 3
    %p146 = pnand %p144, %p145
    %p147 = pneg %p146
    // Predicated region
    $region9: #{basic_block_forward.3} parent=5 // pred_check
      _
    $region10: #{basic_block_forward.3} parent=5 // pred_check_branch
      %149 = sbr.rel (%p146) target = $region12
    $region11: #{basic_block_forward.3} parent=5 // pred_region
      %s150 = ssub.s32 %s11, 1
      // Predicated region
      $region13: #{basic_block_forward.3} parent=11 // pred_check
        %p151 = pneg %p84
      $region14: #{basic_block_forward.3} parent=11 // pred_check_branch
        %153 = sbr.rel (%p151) target = $region16
      $region15: #{basic_block_forward.3} parent=11 // pred_region
        _
      $region16: #{basic_block_forward.3} parent=11 // pred_fallthru
        _
    $region12: #{basic_block_forward.3} parent=5 // pred_fallthru
      _
    %p154 = scmp.lt.s32.totalorder %s11, 2
    // Predicated region
    $region17: #{basic_block_forward.3} parent=5 // pred_check
      %p155 = pneg %p154
    $region18: #{basic_block_forward.3} parent=5 // pred_check_branch
      %157 = sbr.rel (%p155) target = $region20
    $region19: #{basic_block_forward.3} parent=5 // pred_region
      // Predicated region
      $region21: #{basic_block_forward.3} parent=19 // pred_check
        %p158 = pneg %p31
      $region22: #{basic_block_forward.3} parent=19 // pred_check_branch
        %160 = sbr.rel (%p158) target = $region24
      $region23: #{basic_block_forward.3} parent=19 // pred_region
        %p161 = scmp.lt.s32.totalorder %s11, 1
        %s162 = scalar_select %p161, %s11, 1
        %s163 = smul.addr %s162, 21
        %s164 = smul.addr %s163, 4
        %s165 = scalar_lea.vmem %s0, %s164
      $region24: #{basic_block_forward.3} parent=19 // pred_fallthru
        _
      // Predicated region
      $region25: #{basic_block_forward.3} parent=19 // pred_check
        %p166 = pneg %p57
      $region26: #{basic_block_forward.3} parent=19 // pred_check_branch
        %168 = sbr.rel (%p166) target = $region28
      $region27: #{basic_block_forward.3} parent=19 // pred_region
        %p169 = scmp.lt.s32.totalorder %s11, 1
        %s170 = scalar_select %p169, %s11, 1
        %s171 = smul.addr %s170, 21
        %s172 = smul.addr %s171, 4
        %s173 = scalar_lea.vmem %s1, %s172
      $region28: #{basic_block_forward.3} parent=19 // pred_fallthru
        _
    $region20: #{basic_block_forward.3} parent=5 // pred_fallthru
      _
    %p174 = scmp.le.s32.totalorder 1, %s11
    %p175 = scmp.lt.s32.totalorder %s11, 3
    %p176 = pnand %p174, %p175
    %p177 = pneg %p176
    // Predicated region
    $region29: #{basic_block_forward.3} parent=5 // pred_check
      _
    $region30: #{basic_block_forward.3} parent=5 // pred_check_branch
      %179 = sbr.rel (%p176) target = $region32
    $region31: #{basic_block_forward.3} parent=5 // pred_region
      %s180 = ssub.s32 %s11, 1
      %p181 = scmp.lt.s32.totalorder %s16, 1
      %s182 = scalar_select %p181, %s16, 1
      %s183 = smul.addr %s182, 21
      %s184 = smul.addr %s183, 4
      %s185 = scalar_lea.vmem %s0, %s184
      %p186 = pneg %p37
      %p187 = pneg %p34
      %p188 = scmp.lt.s32.totalorder %s16, 1
      %s189 = scalar_select %p188, %s16, 1
      %s190 = smul.addr %s189, 21
      %s191 = smul.addr %s190, 4
      %s192 = scalar_lea.vmem %s1, %s191
      %p193 = pneg %p63
      %p194 = pneg %p60
      %p195 = pneg %p84
      %p196 = pneg %p81
      %p197 = pneg %p110
      %p198 = pneg %p107
      %p199 = scmp.lt.s32.totalorder %s16, 1
      %s200 = scalar_select %p199, %s16, 1
      %s201 = smul.addr %s200, 18
      %s202 = smul.addr %s201, 4
      %s203 = scalar_lea.vmem %s3, %s202
      %p204 = pneg %p136
      %p205 = pneg %p133
      %p206 = scmp.lt.s32.totalorder %s16, 1
      %s207 = scalar_select %p206, %s16, 1
      %s208 = smul.addr %s207, 2
      %s209 = scalar_lea.vmem %s4, %s208
      %p210 = scmp.lt.s32.totalorder %s16, 1
      %s211 = scalar_select %p210, %s16, 1
      %s212 = smul.addr %s211, 21
      %s213 = smul.addr %s212, 4
      %s214 = scalar_lea.vmem %s0, %s213
      %p215 = scmp.lt.s32.totalorder %s16, 1
      %s216 = scalar_select %p215, %s16, 1
      %s217 = smul.addr %s216, 21
      %s218 = smul.addr %s217, 4
      %s219 = scalar_lea.vmem %s1, %s218
      %p220 = scmp.lt.s32.totalorder %s16, 1
      %s221 = scalar_select %p220, %s16, 1
      %s222 = smul.addr %s221, 18
      %s223 = smul.addr %s222, 4
      %s224 = scalar_lea.vmem %s3, %s223
      %p225 = scmp.lt.s32.totalorder %s16, 1
      %s226 = scalar_select %p225, %s16, 1
      %s227 = smul.addr %s226, 2
      %s228 = scalar_lea.vmem %s4, %s227
      %v230 = vld [vmem:[%s214] sm:$0xf]
      %v231 = vld [vmem:[%s214 + $0x4] sm:$0xf]
      %v232 = vld [vmem:[%s214 + $0x8] sm:$0xf]
      %v233 = vld [vmem:[%s214 + $0xc] sm:$0xf]
      %v234 = vld [vmem:[%s214 + $0x10] sm:$0xf]
      %v235 = vld [vmem:[%s214 + $0x14] sm:$0xf]
      %v236 = vld [vmem:[%s214 + $0x18] sm:$0xf]
      %v237 = vld [vmem:[%s214 + $0x1c] sm:$0xf]
      %v238 = vld [vmem:[%s214 + $0x20] sm:$0xf]
      %v239 = vld [vmem:[%s214 + $0x24] sm:$0xf]
      %v240 = vld [vmem:[%s214 + $0x28] sm:$0xf]
      %v241 = vld [vmem:[%s214 + $0x2c] sm:$0xf]
      %v242 = vld [vmem:[%s214 + $0x30] sm:$0xf]
      %v243 = vld [vmem:[%s214 + $0x34] sm:$0xf]
      %v244 = vld [vmem:[%s214 + $0x38] sm:$0xf]
      %v245 = vld [vmem:[%s214 + $0x3c] sm:$0xf]
      %v246 = vld [vmem:[%s214 + $0x40] sm:$0xf]
      %v247 = vld [vmem:[%s214 + $0x44] sm:$0xf]
      %v248 = vld [vmem:[%s2] sm:$0xf]
      %v249 = vld [vmem:[%s2 + $0x4] sm:$0xf]
      %v250 = vld [vmem:[%s2 + $0x8] sm:$0xf]
      %v251 = vld [vmem:[%s2 + $0xc] sm:$0xf]
      %v252 = vld [vmem:[%s2 + $0x10] sm:$0xf]
      %v253 = vld [vmem:[%s2 + $0x14] sm:$0xf]
      %v254 = vld [vmem:[%s2 + $0x18] sm:$0xf]
      %v255 = vld [vmem:[%s2 + $0x1c] sm:$0xf]
      %v256 = vld [vmem:[%s2 + $0x20] sm:$0xf]
      %v257 = vld [vmem:[%s2 + $0x24] sm:$0xf]
      %v258 = vld [vmem:[%s2 + $0x28] sm:$0xf]
      %v259 = vld [vmem:[%s2 + $0x2c] sm:$0xf]
      %v260 = vld [vmem:[%s2 + $0x30] sm:$0xf]
      %v261 = vld [vmem:[%s2 + $0x34] sm:$0xf]
      %v262 = vld [vmem:[%s2 + $0x38] sm:$0xf]
      %v263 = vld [vmem:[%s2 + $0x3c] sm:$0xf]
      %v264 = vld [vmem:[%s219] sm:$0xf]
      %v265 = vld [vmem:[%s219 + $0x4] sm:$0xf]
      %v266 = vld [vmem:[%s219 + $0x8] sm:$0xf]
      %v267 = vld [vmem:[%s219 + $0xc] sm:$0xf]
      %v268 = vld [vmem:[%s219 + $0x10] sm:$0xf]
      %v269 = vld [vmem:[%s219 + $0x14] sm:$0xf]
      %v270 = vld [vmem:[%s219 + $0x18] sm:$0xf]
      %v271 = vld [vmem:[%s219 + $0x1c] sm:$0xf]
      %v272 = vld [vmem:[%s219 + $0x20] sm:$0xf]
      %v273 = vld [vmem:[%s219 + $0x24] sm:$0xf]
      %v274 = vld [vmem:[%s219 + $0x28] sm:$0xf]
      %v275 = vld [vmem:[%s219 + $0x2c] sm:$0xf]
      %v276 = vld [vmem:[%s219 + $0x30] sm:$0xf]
      %v277 = vld [vmem:[%s219 + $0x34] sm:$0xf]
      %v278 = vld [vmem:[%s219 + $0x38] sm:$0xf]
      %v279 = vld [vmem:[%s219 + $0x3c] sm:$0xf]
      %v280 = vld [vmem:[%s219 + $0x40] sm:$0xf]
      %v281 = vld [vmem:[%s219 + $0x44] sm:$0xf]
      %s282 = scalar_lea.vmem %s2, 64
      %v283 = vld [vmem:[%s282] sm:$0xf]
      %v284 = vld [vmem:[%s282 + $0x4] sm:$0xf]
      %v285 = vld [vmem:[%s282 + $0x8] sm:$0xf]
      %v286 = vld [vmem:[%s282 + $0xc] sm:$0xf]
      %v287 = vld [vmem:[%s282 + $0x10] sm:$0xf]
      %v288 = vld [vmem:[%s282 + $0x14] sm:$0xf]
      %v289 = vld [vmem:[%s282 + $0x18] sm:$0xf]
      %v290 = vld [vmem:[%s282 + $0x1c] sm:$0xf]
      %v291 = vld [vmem:[%s282 + $0x20] sm:$0xf]
      %v292 = vld [vmem:[%s282 + $0x24] sm:$0xf]
      %v293 = vld [vmem:[%s282 + $0x28] sm:$0xf]
      %v294 = vld [vmem:[%s282 + $0x2c] sm:$0xf]
      %v295 = vld [vmem:[%s282 + $0x30] sm:$0xf]
      %v296 = vld [vmem:[%s282 + $0x34] sm:$0xf]
      %v297 = vld [vmem:[%s282 + $0x38] sm:$0xf]
      %v298 = vld [vmem:[%s282 + $0x3c] sm:$0xf]
      %v317 = vunpack.c.l.b16 %v264
      %v318 = vunpack.c.l.b16 %v265
      %v319 = vunpack.c.l.b16 %v266
      %v320 = vunpack.c.l.b16 %v267
      %v321 = vunpack.c.l.b16 %v268
      %v322 = vunpack.c.l.b16 %v269
      %v323 = vunpack.c.l.b16 %v270
      %v324 = vunpack.c.l.b16 %v271
      %v325 = vunpack.c.l.b16 %v272
      %v326 = vunpack.c.l.b16 %v273
      %v327 = vunpack.c.l.b16 %v274
      %v328 = vunpack.c.l.b16 %v275
      %v329 = vunpack.c.l.b16 %v276
      %v330 = vunpack.c.l.b16 %v277
      %v331 = vunpack.c.l.b16 %v278
      %v332 = vunpack.c.l.b16 %v279
      %v333 = vunpack.c.l.b16 %v280
      %v334 = vunpack.c.l.b16 %v281
      %v335 = vpack.c.b16 %v318, %v317
      %v336 = vpack.c.b16 %v320, %v319
      %v337 = vpack.c.b16 %v322, %v321
      %v338 = vpack.c.b16 %v324, %v323
      %v339 = vpack.c.b16 %v326, %v325
      %v340 = vpack.c.b16 %v328, %v327
      %v341 = vpack.c.b16 %v330, %v329
      %v342 = vpack.c.b16 %v332, %v331
      %v343 = vpack.c.b16 %v334, %v333
      %v369 = vunpack.c.l.b16 %v283
      %v370 = vunpack.c.l.b16 %v284
      %v371 = vunpack.c.l.b16 %v285
      %v372 = vunpack.c.l.b16 %v286
      %v373 = vunpack.c.l.b16 %v287
      %v374 = vunpack.c.l.b16 %v288
      %v375 = vunpack.c.l.b16 %v289
      %v376 = vunpack.c.l.b16 %v290
      %v377 = vunpack.c.l.b16 %v291
      %v378 = vunpack.c.l.b16 %v292
      %v379 = vunpack.c.l.b16 %v293
      %v380 = vunpack.c.l.b16 %v294
      %v381 = vunpack.c.l.b16 %v295
      %v382 = vunpack.c.l.b16 %v296
      %v383 = vunpack.c.l.b16 %v297
      %v384 = vunpack.c.l.b16 %v298
      %v385 = vpack.c.b16 %v370, %v369
      %v386 = vpack.c.b16 %v372, %v371
      %v387 = vpack.c.b16 %v374, %v373
      %v388 = vpack.c.b16 %v376, %v375
      %v389 = vpack.c.b16 %v378, %v377
      %v390 = vpack.c.b16 %v380, %v379
      %v391 = vpack.c.b16 %v382, %v381
      %v392 = vpack.c.b16 %v384, %v383
      %401 = vmatprep.subr.bf16.mxu0 0
      %402 = vmatpush1.bf16.msra.mxu0 %v385
      %403 = vmatprep.subr.bf16.mxu0 0
      %404 = vmatpush1.bf16.msra.mxu0 %v386
      %405 = vmatprep.subr.bf16.mxu0 0
      %406 = vmatpush1.bf16.msra.mxu0 %v387
      %407 = vmatprep.subr.bf16.mxu0 0
      %408 = vmatpush1.bf16.msra.mxu0 %v388
      %409 = vmatprep.subr.bf16.mxu0 0
      %410 = vmatpush1.bf16.msra.mxu0 %v389
      %411 = vmatprep.subr.bf16.mxu0 0
      %412 = vmatpush1.bf16.msra.mxu0 %v390
      %413 = vmatprep.subr.bf16.mxu0 0
      %414 = vmatpush1.bf16.msra.mxu0 %v391
      %415 = vmatprep.subr.bf16.mxu0 0
      %416 = vmatpush1.bf16.msra.mxu0 %v392
      %417 = vmatprep.subr.bf16.mxu0 0
      %418 = vmatpush1.bf16.msra.mxu0 0
      %419 = vmatprep.subr.bf16.mxu0 0
      %420 = vmatpush1.bf16.msra.mxu0 0
      %421 = vmatprep.subr.bf16.mxu0 0
      %422 = vmatpush1.bf16.msra.mxu0 0
      %423 = vmatprep.subr.bf16.mxu0 0
      %424 = vmatpush1.bf16.msra.mxu0 0
      %425 = vmatprep.subr.bf16.mxu0 0
      %426 = vmatpush1.bf16.msra.mxu0 0
      %427 = vmatprep.subr.bf16.mxu0 0
      %428 = vmatpush1.bf16.msra.mxu0 0
      %429 = vmatprep.subr.bf16.mxu0 0
      %430 = vmatpush1.bf16.msra.mxu0 0
      %431 = vmatprep.subr.bf16.mxu0 0
      %432 = vmatpush1.bf16.msra.mxu0 0
      %433 = vmatprep.mubr.bf16.mxu0 0
      %434 = vmatmul.mubr.bf16.gmra.mrb[0].mxu0 %v335
      %v435 = vpop.f32.mrb[0].mxu0
      %v436 = vadd.f32 0.0, %v435
      %v437 = vpop.f32.mrb[0].mxu0
      %v438 = vpop.f32.mrb[0].mxu0
      %v439 = vadd.f32 0.0, %v438
      %v440 = vpop.f32.mrb[0].mxu0
      %441 = vmatprep.mubr.bf16.mxu0 0
      %442 = vmatmul.mubr.bf16.gmra.mrb[0].mxu0 %v336
      %v443 = vpop.f32.mrb[0].mxu0
      %v444 = vadd.f32 0.0, %v443
      %v445 = vpop.f32.mrb[0].mxu0
      %v446 = vpop.f32.mrb[0].mxu0
      %v447 = vadd.f32 0.0, %v446
      %v448 = vpop.f32.mrb[0].mxu0
      %449 = vmatprep.mubr.bf16.mxu0 0
      %450 = vmatmul.mubr.bf16.gmra.mrb[0].mxu0 %v337
      %v451 = vpop.f32.mrb[0].mxu0
      %v452 = vadd.f32 0.0, %v451
      %v453 = vpop.f32.mrb[0].mxu0
      %v454 = vpop.f32.mrb[0].mxu0
      %v455 = vadd.f32 0.0, %v454
      %v456 = vpop.f32.mrb[0].mxu0
      %457 = vmatprep.mubr.bf16.mxu0 0
      %458 = vmatmul.mubr.bf16.gmra.mrb[0].mxu0 %v338
      %v459 = vpop.f32.mrb[0].mxu0
      %v460 = vadd.f32 0.0, %v459
      %v461 = vpop.f32.mrb[0].mxu0
      %v462 = vpop.f32.mrb[0].mxu0
      %v463 = vadd.f32 0.0, %v462
      %v464 = vpop.f32.mrb[0].mxu0
      %465 = vmatprep.mubr.bf16.mxu0 0
      %466 = vmatmul.mubr.bf16.gmra.mrb[0].mxu0 %v339
      %v467 = vpop.f32.mrb[0].mxu0
      %v468 = vadd.f32 0.0, %v467
      %v469 = vpop.f32.mrb[0].mxu0
      %v470 = vpop.f32.mrb[0].mxu0
      %v471 = vadd.f32 0.0, %v470
      %v472 = vpop.f32.mrb[0].mxu0
      %473 = vmatprep.mubr.bf16.mxu0 0
      %474 = vmatmul.mubr.bf16.gmra.mrb[0].mxu0 %v340
      %v475 = vpop.f32.mrb[0].mxu0
      %v476 = vadd.f32 0.0, %v475
      %v477 = vpop.f32.mrb[0].mxu0
      %v478 = vpop.f32.mrb[0].mxu0
      %v479 = vadd.f32 0.0, %v478
      %v480 = vpop.f32.mrb[0].mxu0
      %481 = vmatprep.mubr.bf16.mxu0 0
      %482 = vmatmul.mubr.bf16.gmra.mrb[0].mxu0 %v341
      %v483 = vpop.f32.mrb[0].mxu0
      %v484 = vadd.f32 0.0, %v483
      %v485 = vpop.f32.mrb[0].mxu0
      %v486 = vpop.f32.mrb[0].mxu0
      %v487 = vadd.f32 0.0, %v486
      %v488 = vpop.f32.mrb[0].mxu0
      %489 = vmatprep.mubr.bf16.mxu0 0
      %490 = vmatmul.mubr.bf16.gmra.mrb[0].mxu0 %v342
      %v491 = vpop.f32.mrb[0].mxu0
      %v492 = vadd.f32 0.0, %v491
      %v493 = vpop.f32.mrb[0].mxu0
      %v494 = vpop.f32.mrb[0].mxu0
      %v495 = vadd.f32 0.0, %v494
      %v496 = vpop.f32.mrb[0].mxu0
      %497 = vmatprep.mubr.bf16.mxu0 0
      %498 = vmatmul.mubr.bf16.gmra.mrb[0].mxu0 %v343
      %v499 = vpop.f32.mrb[0].mxu0
      %v500 = vadd.f32 0.0, %v499
      %v501 = vpop.f32.mrb[0].mxu0
      %v502 = vpop.f32.mrb[0].mxu0
      %v503 = vadd.f32 0.0, %v502
      %v504 = vpop.f32.mrb[0].mxu0
      %505 = vdwg.mxu0
      %v524 = vunpack.c.l.b16 %v230
      %v525 = vunpack.c.l.b16 %v231
      %v526 = vunpack.c.l.b16 %v232
      %v527 = vunpack.c.l.b16 %v233
      %v528 = vunpack.c.l.b16 %v234
      %v529 = vunpack.c.l.b16 %v235
      %v530 = vunpack.c.l.b16 %v236
      %v531 = vunpack.c.l.b16 %v237
      %v532 = vunpack.c.l.b16 %v238
      %v533 = vunpack.c.l.b16 %v239
      %v534 = vunpack.c.l.b16 %v240
      %v535 = vunpack.c.l.b16 %v241
      %v536 = vunpack.c.l.b16 %v242
      %v537 = vunpack.c.l.b16 %v243
      %v538 = vunpack.c.l.b16 %v244
      %v539 = vunpack.c.l.b16 %v245
      %v540 = vunpack.c.l.b16 %v246
      %v541 = vunpack.c.l.b16 %v247
      %v542 = vpack.c.b16 %v525, %v524
      %v543 = vpack.c.b16 %v527, %v526
      %v544 = vpack.c.b16 %v529, %v528
      %v545 = vpack.c.b16 %v531, %v530
      %v546 = vpack.c.b16 %v533, %v532
      %v547 = vpack.c.b16 %v535, %v534
      %v548 = vpack.c.b16 %v537, %v536
      %v549 = vpack.c.b16 %v539, %v538
      %v550 = vpack.c.b16 %v541, %v540
      %v576 = vunpack.c.l.b16 %v248
      %v577 = vunpack.c.l.b16 %v249
      %v578 = vunpack.c.l.b16 %v250
      %v579 = vunpack.c.l.b16 %v251
      %v580 = vunpack.c.l.b16 %v252
      %v581 = vunpack.c.l.b16 %v253
      %v582 = vunpack.c.l.b16 %v254
      %v583 = vunpack.c.l.b16 %v255
      %v584 = vunpack.c.l.b16 %v256
      %v585 = vunpack.c.l.b16 %v257
      %v586 = vunpack.c.l.b16 %v258
      %v587 = vunpack.c.l.b16 %v259
      %v588 = vunpack.c.l.b16 %v260
      %v589 = vunpack.c.l.b16 %v261
      %v590 = vunpack.c.l.b16 %v262
      %v591 = vunpack.c.l.b16 %v263
      %v592 = vpack.c.b16 %v577, %v576
      %v593 = vpack.c.b16 %v579, %v578
      %v594 = vpack.c.b16 %v581, %v580
      %v595 = vpack.c.b16 %v583, %v582
      %v596 = vpack.c.b16 %v585, %v584
      %v597 = vpack.c.b16 %v587, %v586
      %v598 = vpack.c.b16 %v589, %v588
      %v599 = vpack.c.b16 %v591, %v590
      %608 = vmatprep.subr.bf16.mxu0 0
      %609 = vmatpush1.bf16.msra.mxu0 %v592
      %610 = vmatprep.subr.bf16.mxu0 0
      %611 = vmatpush1.bf16.msra.mxu0 %v593
      %612 = vmatprep.subr.bf16.mxu0 0
      %613 = vmatpush1.bf16.msra.mxu0 %v594
      %614 = vmatprep.subr.bf16.mxu0 0
      %615 = vmatpush1.bf16.msra.mxu0 %v595
      %616 = vmatprep.subr.bf16.mxu0 0
      %617 = vmatpush1.bf16.msra.mxu0 %v596
      %618 = vmatprep.subr.bf16.mxu0 0
      %619 = vmatpush1.bf16.msra.mxu0 %v597
      %620 = vmatprep.subr.bf16.mxu0 0
      %621 = vmatpush1.bf16.msra.mxu0 %v598
      %622 = vmatprep.subr.bf16.mxu0 0
      %623 = vmatpush1.bf16.msra.mxu0 %v599
      %624 = vmatprep.subr.bf16.mxu0 0
      %625 = vmatpush1.bf16.msra.mxu0 0
      %626 = vmatprep.subr.bf16.mxu0 0
      %627 = vmatpush1.bf16.msra.mxu0 0
      %628 = vmatprep.subr.bf16.mxu0 0
      %629 = vmatpush1.bf16.msra.mxu0 0
      %630 = vmatprep.subr.bf16.mxu0 0
      %631 = vmatpush1.bf16.msra.mxu0 0
      %632 = vmatprep.subr.bf16.mxu0 0
      %633 = vmatpush1.bf16.msra.mxu0 0
      %634 = vmatprep.subr.bf16.mxu0 0
      %635 = vmatpush1.bf16.msra.mxu0 0
      %636 = vmatprep.subr.bf16.mxu0 0
      %637 = vmatpush1.bf16.msra.mxu0 0
      %638 = vmatprep.subr.bf16.mxu0 0
      %639 = vmatpush1.bf16.msra.mxu0 0
      %640 = vmatprep.mubr.bf16.mxu0 0
      %641 = vmatmul.mubr.bf16.gmra.mrb[0].mxu0 %v542
      %v642 = vpop.f32.mrb[0].mxu0
      %v643 = vadd.f32 %v436, %v642
      %v644 = vpop.f32.mrb[0].mxu0
      %v645 = vpop.f32.mrb[0].mxu0
      %v646 = vadd.f32 %v439, %v645
      %v647 = vpop.f32.mrb[0].mxu0
      %648 = vmatprep.mubr.bf16.mxu0 0
      %649 = vmatmul.mubr.bf16.gmra.mrb[0].mxu0 %v543
      %v650 = vpop.f32.mrb[0].mxu0
      %v651 = vadd.f32 %v444, %v650
      %v652 = vpop.f32.mrb[0].mxu0
      %v653 = vpop.f32.mrb[0].mxu0
      %v654 = vadd.f32 %v447, %v653
      %v655 = vpop.f32.mrb[0].mxu0
      %656 = vmatprep.mubr.bf16.mxu0 0
      %657 = vmatmul.mubr.bf16.gmra.mrb[0].mxu0 %v544
      %v658 = vpop.f32.mrb[0].mxu0
      %v659 = vadd.f32 %v452, %v658
      %v660 = vpop.f32.mrb[0].mxu0
      %v661 = vpop.f32.mrb[0].mxu0
      %v662 = vadd.f32 %v455, %v661
      %v663 = vpop.f32.mrb[0].mxu0
      %664 = vmatprep.mubr.bf16.mxu0 0
      %665 = vmatmul.mubr.bf16.gmra.mrb[0].mxu0 %v545
      %v666 = vpop.f32.mrb[0].mxu0
      %v667 = vadd.f32 %v460, %v666
      %v668 = vpop.f32.mrb[0].mxu0
      %v669 = vpop.f32.mrb[0].mxu0
      %v670 = vadd.f32 %v463, %v669
      %v671 = vpop.f32.mrb[0].mxu0
      %672 = vmatprep.mubr.bf16.mxu0 0
      %673 = vmatmul.mubr.bf16.gmra.mrb[0].mxu0 %v546
      %v674 = vpop.f32.mrb[0].mxu0
      %v675 = vadd.f32 %v468, %v674
      %v676 = vpop.f32.mrb[0].mxu0
      %v677 = vpop.f32.mrb[0].mxu0
      %v678 = vadd.f32 %v471, %v677
      %v679 = vpop.f32.mrb[0].mxu0
      %680 = vmatprep.mubr.bf16.mxu0 0
      %681 = vmatmul.mubr.bf16.gmra.mrb[0].mxu0 %v547
      %v682 = vpop.f32.mrb[0].mxu0
      %v683 = vadd.f32 %v476, %v682
      %v684 = vpop.f32.mrb[0].mxu0
      %v685 = vpop.f32.mrb[0].mxu0
      %v686 = vadd.f32 %v479, %v685
      %v687 = vpop.f32.mrb[0].mxu0
      %688 = vmatprep.mubr.bf16.mxu0 0
      %689 = vmatmul.mubr.bf16.gmra.mrb[0].mxu0 %v548
      %v690 = vpop.f32.mrb[0].mxu0
      %v691 = vadd.f32 %v484, %v690
      %v692 = vpop.f32.mrb[0].mxu0
      %v693 = vpop.f32.mrb[0].mxu0
      %v694 = vadd.f32 %v487, %v693
      %v695 = vpop.f32.mrb[0].mxu0
      %696 = vmatprep.mubr.bf16.mxu0 0
      %697 = vmatmul.mubr.bf16.gmra.mrb[0].mxu0 %v549
      %v698 = vpop.f32.mrb[0].mxu0
      %v699 = vadd.f32 %v492, %v698
      %v700 = vpop.f32.mrb[0].mxu0
      %v701 = vpop.f32.mrb[0].mxu0
      %v702 = vadd.f32 %v495, %v701
      %v703 = vpop.f32.mrb[0].mxu0
      %704 = vmatprep.mubr.bf16.mxu0 0
      %705 = vmatmul.mubr.bf16.gmra.mrb[0].mxu0 %v550
      %v706 = vpop.f32.mrb[0].mxu0
      %v707 = vadd.f32 %v500, %v706
      %v708 = vpop.f32.mrb[0].mxu0
      %v709 = vpop.f32.mrb[0].mxu0
      %v710 = vadd.f32 %v503, %v709
      %v711 = vpop.f32.mrb[0].mxu0
      %712 = vdwg.mxu0
      %v713 = vld [vmem:[%s214] sm:$0xf]
      %v714 = vld [vmem:[%s214 + $0x4] sm:$0xf]
      %v715 = vld [vmem:[%s214 + $0x8] sm:$0xf]
      %v716 = vld [vmem:[%s214 + $0xc] sm:$0xf]
      %v717 = vld [vmem:[%s214 + $0x10] sm:$0xf]
      %v718 = vld [vmem:[%s214 + $0x14] sm:$0xf]
      %v719 = vld [vmem:[%s214 + $0x18] sm:$0xf]
      %v720 = vld [vmem:[%s214 + $0x1c] sm:$0xf]
      %v721 = vld [vmem:[%s214 + $0x20] sm:$0xf]
      %v722 = vld [vmem:[%s214 + $0x24] sm:$0xf]
      %v723 = vld [vmem:[%s214 + $0x28] sm:$0xf]
      %v724 = vld [vmem:[%s214 + $0x2c] sm:$0xf]
      %v725 = vld [vmem:[%s214 + $0x30] sm:$0xf]
      %v726 = vld [vmem:[%s214 + $0x34] sm:$0xf]
      %v727 = vld [vmem:[%s214 + $0x38] sm:$0xf]
      %v728 = vld [vmem:[%s214 + $0x3c] sm:$0xf]
      %v729 = vld [vmem:[%s214 + $0x40] sm:$0xf]
      %v730 = vld [vmem:[%s214 + $0x44] sm:$0xf]
      %v731 = vld [vmem:[%s214 + $0x48] sm:$0x1]
      %s732 = scalar_lea.vmem %s2, 128
      %v733 = vld [vmem:[%s732] sm:$0xf]
      %v734 = vld [vmem:[%s732 + $0x4] sm:$0xf]
      %v735 = vld [vmem:[%s732 + $0x8] sm:$0xf]
      %v736 = vld [vmem:[%s732 + $0xc] sm:$0xf]
      %v737 = vld [vmem:[%s732 + $0x10] sm:$0xf]
      %v738 = vld [vmem:[%s732 + $0x14] sm:$0xf]
      %v739 = vld [vmem:[%s732 + $0x18] sm:$0xf]
      %v740 = vld [vmem:[%s732 + $0x1c] sm:$0xf]
      %v741 = vld [vmem:[%s732 + $0x20] sm:$0xf]
      %v742 = vld [vmem:[%s732 + $0x24] sm:$0xf]
      %v743 = vld [vmem:[%s732 + $0x28] sm:$0xf]
      %v744 = vld [vmem:[%s732 + $0x2c] sm:$0xf]
      %v745 = vld [vmem:[%s732 + $0x30] sm:$0xf]
      %v746 = vld [vmem:[%s732 + $0x34] sm:$0xf]
      %v747 = vld [vmem:[%s732 + $0x38] sm:$0xf]
      %v748 = vld [vmem:[%s732 + $0x3c] sm:$0xf]
      %v768 = vunpack.c.l.b16 %v713
      %v769 = vunpack.c.l.b16 %v714
      %v770 = vunpack.c.l.b16 %v715
      %v771 = vunpack.c.l.b16 %v716
      %v772 = vunpack.c.l.b16 %v717
      %v773 = vunpack.c.l.b16 %v718
      %v774 = vunpack.c.l.b16 %v719
      %v775 = vunpack.c.l.b16 %v720
      %v776 = vunpack.c.l.b16 %v721
      %v777 = vunpack.c.l.b16 %v722
      %v778 = vunpack.c.l.b16 %v723
      %v779 = vunpack.c.l.b16 %v724
      %v780 = vunpack.c.l.b16 %v725
      %v781 = vunpack.c.l.b16 %v726
      %v782 = vunpack.c.l.b16 %v727
      %v783 = vunpack.c.l.b16 %v728
      %v784 = vunpack.c.l.b16 %v729
      %v785 = vunpack.c.l.b16 %v730
      %v786 = vunpack.c.l.b16 %v731
      %v787 = vpack.c.b16 %v769, %v768
      %v788 = vpack.c.b16 %v771, %v770
      %v789 = vpack.c.b16 %v773, %v772
      %v790 = vpack.c.b16 %v775, %v774
      %v791 = vpack.c.b16 %v777, %v776
      %v792 = vpack.c.b16 %v779, %v778
      %v793 = vpack.c.b16 %v781, %v780
      %v794 = vpack.c.b16 %v783, %v782
      %v795 = vpack.c.b16 %v785, %v784
      %v796 = vpack.c.b16 %v786, %v786
      %vm797 = vsmask.f32 7424
      %v799 = vshrl.u32 %v787, 16
      %v801 = vshll.u32 %v787, 16
      %v803 = vrot.slane %v801, 1
      %v804 = vor.u32 %v799, %v803
      %v806 = vshll.u32 %v788, 16
      %v808 = vrot.slane %v806, 1
      %v809 = vsel %vm797, %v804, %v808
      %v810 = vshrl.u32 %v788, 16
      %v812 = vor.u32 %v810, %v808
      %v814 = vshll.u32 %v789, 16
      %v816 = vrot.slane %v814, 1
      %v817 = vsel %vm797, %v812, %v816
      %v818 = vshrl.u32 %v789, 16
      %v820 = vor.u32 %v818, %v816
      %v822 = vshll.u32 %v790, 16
      %v824 = vrot.slane %v822, 1
      %v825 = vsel %vm797, %v820, %v824
      %v826 = vshrl.u32 %v790, 16
      %v828 = vor.u32 %v826, %v824
      %v830 = vshll.u32 %v791, 16
      %v832 = vrot.slane %v830, 1
      %v833 = vsel %vm797, %v828, %v832
      %v834 = vshrl.u32 %v791, 16
      %v836 = vor.u32 %v834, %v832
      %v838 = vshll.u32 %v792, 16
      %v840 = vrot.slane %v838, 1
      %v841 = vsel %vm797, %v836, %v840
      %v842 = vshrl.u32 %v792, 16
      %v844 = vor.u32 %v842, %v840
      %v846 = vshll.u32 %v793, 16
      %v848 = vrot.slane %v846, 1
      %v849 = vsel %vm797, %v844, %v848
      %v850 = vshrl.u32 %v793, 16
      %v852 = vor.u32 %v850, %v848
      %v854 = vshll.u32 %v794, 16
      %v856 = vrot.slane %v854, 1
      %v857 = vsel %vm797, %v852, %v856
      %v858 = vshrl.u32 %v794, 16
      %v860 = vor.u32 %v858, %v856
      %v862 = vshll.u32 %v795, 16
      %v864 = vrot.slane %v862, 1
      %v865 = vsel %vm797, %v860, %v864
      %v866 = vshrl.u32 %v795, 16
      %v868 = vor.u32 %v866, %v864
      %v870 = vshll.u32 %v796, 16
      %v872 = vrot.slane %v870, 1
      %v873 = vsel %vm797, %v868, %v872
      %v899 = vunpack.c.l.b16 %v733
      %v900 = vunpack.c.l.b16 %v734
      %v901 = vunpack.c.l.b16 %v735
      %v902 = vunpack.c.l.b16 %v736
      %v903 = vunpack.c.l.b16 %v737
      %v904 = vunpack.c.l.b16 %v738
      %v905 = vunpack.c.l.b16 %v739
      %v906 = vunpack.c.l.b16 %v740
      %v907 = vunpack.c.l.b16 %v741
      %v908 = vunpack.c.l.b16 %v742
      %v909 = vunpack.c.l.b16 %v743
      %v910 = vunpack.c.l.b16 %v744
      %v911 = vunpack.c.l.b16 %v745
      %v912 = vunpack.c.l.b16 %v746
      %v913 = vunpack.c.l.b16 %v747
      %v914 = vunpack.c.l.b16 %v748
      %v915 = vpack.c.b16 %v900, %v899
      %v916 = vpack.c.b16 %v902, %v901
      %v917 = vpack.c.b16 %v904, %v903
      %v918 = vpack.c.b16 %v906, %v905
      %v919 = vpack.c.b16 %v908, %v907
      %v920 = vpack.c.b16 %v910, %v909
      %v921 = vpack.c.b16 %v912, %v911
      %v922 = vpack.c.b16 %v914, %v913
      %931 = vmatprep.subr.bf16.mxu0 0
      %932 = vmatpush1.bf16.msra.mxu0 %v915
      %933 = vmatprep.subr.bf16.mxu0 0
      %934 = vmatpush1.bf16.msra.mxu0 %v916
      %935 = vmatprep.subr.bf16.mxu0 0
      %936 = vmatpush1.bf16.msra.mxu0 %v917
      %937 = vmatprep.subr.bf16.mxu0 0
      %938 = vmatpush1.bf16.msra.mxu0 %v918
      %939 = vmatprep.subr.bf16.mxu0 0
      %940 = vmatpush1.bf16.msra.mxu0 %v919
      %941 = vmatprep.subr.bf16.mxu0 0
      %942 = vmatpush1.bf16.msra.mxu0 %v920
      %943 = vmatprep.subr.bf16.mxu0 0
      %944 = vmatpush1.bf16.msra.mxu0 %v921
      %945 = vmatprep.subr.bf16.mxu0 0
      %946 = vmatpush1.bf16.msra.mxu0 %v922
      %947 = vmatprep.subr.bf16.mxu0 0
      %948 = vmatpush1.bf16.msra.mxu0 0
      %949 = vmatprep.subr.bf16.mxu0 0
      %950 = vmatpush1.bf16.msra.mxu0 0
      %951 = vmatprep.subr.bf16.mxu0 0
      %952 = vmatpush1.bf16.msra.mxu0 0
      %953 = vmatprep.subr.bf16.mxu0 0
      %954 = vmatpush1.bf16.msra.mxu0 0
      %955 = vmatprep.subr.bf16.mxu0 0
      %956 = vmatpush1.bf16.msra.mxu0 0
      %957 = vmatprep.subr.bf16.mxu0 0
      %958 = vmatpush1.bf16.msra.mxu0 0
      %959 = vmatprep.subr.bf16.mxu0 0
      %960 = vmatpush1.bf16.msra.mxu0 0
      %961 = vmatprep.subr.bf16.mxu0 0
      %962 = vmatpush1.bf16.msra.mxu0 0
      %963 = vmatprep.mubr.bf16.mxu0 0
      %964 = vmatmul.mubr.bf16.gmra.mrb[0].mxu0 %v809
      %v965 = vpop.f32.mrb[0].mxu0
      %v966 = vadd.f32 0.0, %v965
      %v967 = vpop.f32.mrb[0].mxu0
      %v968 = vpop.f32.mrb[0].mxu0
      %v969 = vadd.f32 0.0, %v968
      %v970 = vpop.f32.mrb[0].mxu0
      %971 = vmatprep.mubr.bf16.mxu0 0
      %972 = vmatmul.mubr.bf16.gmra.mrb[0].mxu0 %v817
      %v973 = vpop.f32.mrb[0].mxu0
      %v974 = vadd.f32 0.0, %v973
      %v975 = vpop.f32.mrb[0].mxu0
      %v976 = vpop.f32.mrb[0].mxu0
      %v977 = vadd.f32 0.0, %v976
      %v978 = vpop.f32.mrb[0].mxu0
      %979 = vmatprep.mubr.bf16.mxu0 0
      %980 = vmatmul.mubr.bf16.gmra.mrb[0].mxu0 %v825
      %v981 = vpop.f32.mrb[0].mxu0
      %v982 = vadd.f32 0.0, %v981
      %v983 = vpop.f32.mrb[0].mxu0
      %v984 = vpop.f32.mrb[0].mxu0
      %v985 = vadd.f32 0.0, %v984
      %v986 = vpop.f32.mrb[0].mxu0
      %987 = vmatprep.mubr.bf16.mxu0 0
      %988 = vmatmul.mubr.bf16.gmra.mrb[0].mxu0 %v833
      %v989 = vpop.f32.mrb[0].mxu0
      %v990 = vadd.f32 0.0, %v989
      %v991 = vpop.f32.mrb[0].mxu0
      %v992 = vpop.f32.mrb[0].mxu0
      %v993 = vadd.f32 0.0, %v992
      %v994 = vpop.f32.mrb[0].mxu0
      %995 = vmatprep.mubr.bf16.mxu0 0
      %996 = vmatmul.mubr.bf16.gmra.mrb[0].mxu0 %v841
      %v997 = vpop.f32.mrb[0].mxu0
      %v998 = vadd.f32 0.0, %v997
      %v999 = vpop.f32.mrb[0].mxu0
      %v1000 = vpop.f32.mrb[0].mxu0
      %v1001 = vadd.f32 0.0, %v1000
      %v1002 = vpop.f32.mrb[0].mxu0
      %1003 = vmatprep.mubr.bf16.mxu0 0
      %1004 = vmatmul.mubr.bf16.gmra.mrb[0].mxu0 %v849
      %v1005 = vpop.f32.mrb[0].mxu0
      %v1006 = vadd.f32 0.0, %v1005
      %v1007 = vpop.f32.mrb[0].mxu0
      %v1008 = vpop.f32.mrb[0].mxu0
      %v1009 = vadd.f32 0.0, %v1008
      %v1010 = vpop.f32.mrb[0].mxu0
      %1011 = vmatprep.mubr.bf16.mxu0 0
      %1012 = vmatmul.mubr.bf16.gmra.mrb[0].mxu0 %v857
      %v1013 = vpop.f32.mrb[0].mxu0
      %v1014 = vadd.f32 0.0, %v1013
      %v1015 = vpop.f32.mrb[0].mxu0
      %v1016 = vpop.f32.mrb[0].mxu0
      %v1017 = vadd.f32 0.0, %v1016
      %v1018 = vpop.f32.mrb[0].mxu0
      %1019 = vmatprep.mubr.bf16.mxu0 0
      %1020 = vmatmul.mubr.bf16.gmra.mrb[0].mxu0 %v865
      %v1021 = vpop.f32.mrb[0].mxu0
      %v1022 = vadd.f32 0.0, %v1021
      %v1023 = vpop.f32.mrb[0].mxu0
      %v1024 = vpop.f32.mrb[0].mxu0
      %v1025 = vadd.f32 0.0, %v1024
      %v1026 = vpop.f32.mrb[0].mxu0
      %1027 = vmatprep.mubr.bf16.mxu0 0
      %1028 = vmatmul.mubr.bf16.gmra.mrb[0].mxu0 %v873
      %v1029 = vpop.f32.mrb[0].mxu0
      %v1030 = vadd.f32 0.0, %v1029
      %v1031 = vpop.f32.mrb[0].mxu0
      %v1032 = vpop.f32.mrb[0].mxu0
      %v1033 = vadd.f32 0.0, %v1032
      %v1034 = vpop.f32.mrb[0].mxu0
      %1035 = vdwg.mxu0
      %v1036 = vadd.f32 %v643, %v966
      %v1037 = vadd.f32 %v646, %v969
      %v1038 = vadd.f32 %v651, %v974
      %v1039 = vadd.f32 %v654, %v977
      %v1040 = vadd.f32 %v659, %v982
      %v1041 = vadd.f32 %v662, %v985
      %v1042 = vadd.f32 %v667, %v990
      %v1043 = vadd.f32 %v670, %v993
      %v1044 = vadd.f32 %v675, %v998
      %v1045 = vadd.f32 %v678, %v1001
      %v1046 = vadd.f32 %v683, %v1006
      %v1047 = vadd.f32 %v686, %v1009
      %v1048 = vadd.f32 %v691, %v1014
      %v1049 = vadd.f32 %v694, %v1017
      %v1050 = vadd.f32 %v699, %v1022
      %v1051 = vadd.f32 %v702, %v1025
      %v1052 = vadd.f32 %v707, %v1030
      %v1053 = vadd.f32 %v710, %v1033
      %v1054 = vld [vmem:[%s214 + $0x4] sm:$0xf]
      %v1055 = vld [vmem:[%s214 + $0x8] sm:$0xf]
      %v1056 = vld [vmem:[%s214 + $0xc] sm:$0xf]
      %v1057 = vld [vmem:[%s214 + $0x10] sm:$0xf]
      %v1058 = vld [vmem:[%s214 + $0x14] sm:$0xf]
      %v1059 = vld [vmem:[%s214 + $0x18] sm:$0xf]
      %v1060 = vld [vmem:[%s214 + $0x1c] sm:$0xf]
      %v1061 = vld [vmem:[%s214 + $0x20] sm:$0xf]
      %v1062 = vld [vmem:[%s214 + $0x24] sm:$0xf]
      %v1063 = vld [vmem:[%s214 + $0x28] sm:$0xf]
      %v1064 = vld [vmem:[%s214 + $0x2c] sm:$0xf]
      %v1065 = vld [vmem:[%s214 + $0x30] sm:$0xf]
      %v1066 = vld [vmem:[%s214 + $0x34] sm:$0xf]
      %v1067 = vld [vmem:[%s214 + $0x38] sm:$0xf]
      %v1068 = vld [vmem:[%s214 + $0x3c] sm:$0xf]
      %v1069 = vld [vmem:[%s214 + $0x40] sm:$0xf]
      %v1070 = vld [vmem:[%s214 + $0x44] sm:$0xf]
      %v1071 = vld [vmem:[%s214 + $0x48] sm:$0xf]
      %v1072 = vld [vmem:[%s214 + $0x4c] sm:$0x1]
      %s1073 = scalar_lea.vmem %s2, 192
      %v1074 = vld [vmem:[%s1073] sm:$0xf]
      %v1075 = vld [vmem:[%s1073 + $0x4] sm:$0xf]
      %v1076 = vld [vmem:[%s1073 + $0x8] sm:$0xf]
      %v1077 = vld [vmem:[%s1073 + $0xc] sm:$0xf]
      %v1078 = vld [vmem:[%s1073 + $0x10] sm:$0xf]
      %v1079 = vld [vmem:[%s1073 + $0x14] sm:$0xf]
      %v1080 = vld [vmem:[%s1073 + $0x18] sm:$0xf]
      %v1081 = vld [vmem:[%s1073 + $0x1c] sm:$0xf]
      %v1082 = vld [vmem:[%s1073 + $0x20] sm:$0xf]
      %v1083 = vld [vmem:[%s1073 + $0x24] sm:$0xf]
      %v1084 = vld [vmem:[%s1073 + $0x28] sm:$0xf]
      %v1085 = vld [vmem:[%s1073 + $0x2c] sm:$0xf]
      %v1086 = vld [vmem:[%s1073 + $0x30] sm:$0xf]
      %v1087 = vld [vmem:[%s1073 + $0x34] sm:$0xf]
      %v1088 = vld [vmem:[%s1073 + $0x38] sm:$0xf]
      %v1089 = vld [vmem:[%s1073 + $0x3c] sm:$0xf]
      %v1109 = vunpack.c.l.b16 %v1054
      %v1110 = vunpack.c.l.b16 %v1055
      %v1111 = vunpack.c.l.b16 %v1056
      %v1112 = vunpack.c.l.b16 %v1057
      %v1113 = vunpack.c.l.b16 %v1058
      %v1114 = vunpack.c.l.b16 %v1059
      %v1115 = vunpack.c.l.b16 %v1060
      %v1116 = vunpack.c.l.b16 %v1061
      %v1117 = vunpack.c.l.b16 %v1062
      %v1118 = vunpack.c.l.b16 %v1063
      %v1119 = vunpack.c.l.b16 %v1064
      %v1120 = vunpack.c.l.b16 %v1065
      %v1121 = vunpack.c.l.b16 %v1066
      %v1122 = vunpack.c.l.b16 %v1067
      %v1123 = vunpack.c.l.b16 %v1068
      %v1124 = vunpack.c.l.b16 %v1069
      %v1125 = vunpack.c.l.b16 %v1070
      %v1126 = vunpack.c.l.b16 %v1071
      %v1127 = vunpack.c.l.b16 %v1072
      %v1128 = vpack.c.b16 %v1110, %v1109
      %v1129 = vpack.c.b16 %v1112, %v1111
      %v1130 = vpack.c.b16 %v1114, %v1113
      %v1131 = vpack.c.b16 %v1116, %v1115
      %v1132 = vpack.c.b16 %v1118, %v1117
      %v1133 = vpack.c.b16 %v1120, %v1119
      %v1134 = vpack.c.b16 %v1122, %v1121
      %v1135 = vpack.c.b16 %v1124, %v1123
      %v1136 = vpack.c.b16 %v1126, %v1125
      %v1137 = vpack.c.b16 %v1127, %v1127
      %v1139 = vshrl.u32 %v1128, 16
      %v1141 = vshll.u32 %v1128, 16
      %v1143 = vrot.slane %v1141, 1
      %v1144 = vor.u32 %v1139, %v1143
      %v1146 = vshll.u32 %v1129, 16
      %v1148 = vrot.slane %v1146, 1
      %v1149 = vsel %vm797, %v1144, %v1148
      %v1150 = vshrl.u32 %v1129, 16
      %v1152 = vor.u32 %v1150, %v1148
      %v1154 = vshll.u32 %v1130, 16
      %v1156 = vrot.slane %v1154, 1
      %v1157 = vsel %vm797, %v1152, %v1156
      %v1158 = vshrl.u32 %v1130, 16
      %v1160 = vor.u32 %v1158, %v1156
      %v1162 = vshll.u32 %v1131, 16
      %v1164 = vrot.slane %v1162, 1
      %v1165 = vsel %vm797, %v1160, %v1164
      %v1166 = vshrl.u32 %v1131, 16
      %v1168 = vor.u32 %v1166, %v1164
      %v1170 = vshll.u32 %v1132, 16
      %v1172 = vrot.slane %v1170, 1
      %v1173 = vsel %vm797, %v1168, %v1172
      %v1174 = vshrl.u32 %v1132, 16
      %v1176 = vor.u32 %v1174, %v1172
      %v1178 = vshll.u32 %v1133, 16
      %v1180 = vrot.slane %v1178, 1
      %v1181 = vsel %vm797, %v1176, %v1180
      %v1182 = vshrl.u32 %v1133, 16
      %v1184 = vor.u32 %v1182, %v1180
      %v1186 = vshll.u32 %v1134, 16
      %v1188 = vrot.slane %v1186, 1
      %v1189 = vsel %vm797, %v1184, %v1188
      %v1190 = vshrl.u32 %v1134, 16
      %v1192 = vor.u32 %v1190, %v1188
      %v1194 = vshll.u32 %v1135, 16
      %v1196 = vrot.slane %v1194, 1
      %v1197 = vsel %vm797, %v1192, %v1196
      %v1198 = vshrl.u32 %v1135, 16
      %v1200 = vor.u32 %v1198, %v1196
      %v1202 = vshll.u32 %v1136, 16
      %v1204 = vrot.slane %v1202, 1
      %v1205 = vsel %vm797, %v1200, %v1204
      %v1206 = vshrl.u32 %v1136, 16
      %v1208 = vor.u32 %v1206, %v1204
      %v1210 = vshll.u32 %v1137, 16
      %v1212 = vrot.slane %v1210, 1
      %v1213 = vsel %vm797, %v1208, %v1212
      %v1239 = vunpack.c.l.b16 %v1074
      %v1240 = vunpack.c.l.b16 %v1075
      %v1241 = vunpack.c.l.b16 %v1076
      %v1242 = vunpack.c.l.b16 %v1077
      %v1243 = vunpack.c.l.b16 %v1078
      %v1244 = vunpack.c.l.b16 %v1079
      %v1245 = vunpack.c.l.b16 %v1080
      %v1246 = vunpack.c.l.b16 %v1081
      %v1247 = vunpack.c.l.b16 %v1082
      %v1248 = vunpack.c.l.b16 %v1083
      %v1249 = vunpack.c.l.b16 %v1084
      %v1250 = vunpack.c.l.b16 %v1085
      %v1251 = vunpack.c.l.b16 %v1086
      %v1252 = vunpack.c.l.b16 %v1087
      %v1253 = vunpack.c.l.b16 %v1088
      %v1254 = vunpack.c.l.b16 %v1089
      %v1255 = vpack.c.b16 %v1240, %v1239
      %v1256 = vpack.c.b16 %v1242, %v1241
      %v1257 = vpack.c.b16 %v1244, %v1243
      %v1258 = vpack.c.b16 %v1246, %v1245
      %v1259 = vpack.c.b16 %v1248, %v1247
      %v1260 = vpack.c.b16 %v1250, %v1249
      %v1261 = vpack.c.b16 %v1252, %v1251
      %v1262 = vpack.c.b16 %v1254, %v1253
      %1271 = vmatprep.subr.bf16.mxu0 0
      %1272 = vmatpush1.bf16.msra.mxu0 %v1255
      %1273 = vmatprep.subr.bf16.mxu0 0
      %1274 = vmatpush1.bf16.msra.mxu0 %v1256
      %1275 = vmatprep.subr.bf16.mxu0 0
      %1276 = vmatpush1.bf16.msra.mxu0 %v1257
      %1277 = vmatprep.subr.bf16.mxu0 0
      %1278 = vmatpush1.bf16.msra.mxu0 %v1258
      %1279 = vmatprep.subr.bf16.mxu0 0
      %1280 = vmatpush1.bf16.msra.mxu0 %v1259
      %1281 = vmatprep.subr.bf16.mxu0 0
      %1282 = vmatpush1.bf16.msra.mxu0 %v1260
      %1283 = vmatprep.subr.bf16.mxu0 0
      %1284 = vmatpush1.bf16.msra.mxu0 %v1261
      %1285 = vmatprep.subr.bf16.mxu0 0
      %1286 = vmatpush1.bf16.msra.mxu0 %v1262
      %1287 = vmatprep.subr.bf16.mxu0 0
      %1288 = vmatpush1.bf16.msra.mxu0 0
      %1289 = vmatprep.subr.bf16.mxu0 0
      %1290 = vmatpush1.bf16.msra.mxu0 0
      %1291 = vmatprep.subr.bf16.mxu0 0
      %1292 = vmatpush1.bf16.msra.mxu0 0
      %1293 = vmatprep.subr.bf16.mxu0 0
      %1294 = vmatpush1.bf16.msra.mxu0 0
      %1295 = vmatprep.subr.bf16.mxu0 0
      %1296 = vmatpush1.bf16.msra.mxu0 0
      %1297 = vmatprep.subr.bf16.mxu0 0
      %1298 = vmatpush1.bf16.msra.mxu0 0
      %1299 = vmatprep.subr.bf16.mxu0 0
      %1300 = vmatpush1.bf16.msra.mxu0 0
      %1301 = vmatprep.subr.bf16.mxu0 0
      %1302 = vmatpush1.bf16.msra.mxu0 0
      %1303 = vmatprep.mubr.bf16.mxu0 0
      %1304 = vmatmul.mubr.bf16.gmra.mrb[0].mxu0 %v1149
      %v1305 = vpop.f32.mrb[0].mxu0
      %v1306 = vadd.f32 0.0, %v1305
      %v1307 = vpop.f32.mrb[0].mxu0
      %v1308 = vpop.f32.mrb[0].mxu0
      %v1309 = vadd.f32 0.0, %v1308
      %v1310 = vpop.f32.mrb[0].mxu0
      %1311 = vmatprep.mubr.bf16.mxu0 0
      %1312 = vmatmul.mubr.bf16.gmra.mrb[0].mxu0 %v1157
      %v1313 = vpop.f32.mrb[0].mxu0
      %v1314 = vadd.f32 0.0, %v1313
      %v1315 = vpop.f32.mrb[0].mxu0
      %v1316 = vpop.f32.mrb[0].mxu0
      %v1317 = vadd.f32 0.0, %v1316
      %v1318 = vpop.f32.mrb[0].mxu0
      %1319 = vmatprep.mubr.bf16.mxu0 0
      %1320 = vmatmul.mubr.bf16.gmra.mrb[0].mxu0 %v1165
      %v1321 = vpop.f32.mrb[0].mxu0
      %v1322 = vadd.f32 0.0, %v1321
      %v1323 = vpop.f32.mrb[0].mxu0
      %v1324 = vpop.f32.mrb[0].mxu0
      %v1325 = vadd.f32 0.0, %v1324
      %v1326 = vpop.f32.mrb[0].mxu0
      %1327 = vmatprep.mubr.bf16.mxu0 0
      %1328 = vmatmul.mubr.bf16.gmra.mrb[0].mxu0 %v1173
      %v1329 = vpop.f32.mrb[0].mxu0
      %v1330 = vadd.f32 0.0, %v1329
      %v1331 = vpop.f32.mrb[0].mxu0
      %v1332 = vpop.f32.mrb[0].mxu0
      %v1333 = vadd.f32 0.0, %v1332
      %v1334 = vpop.f32.mrb[0].mxu0
      %1335 = vmatprep.mubr.bf16.mxu0 0
      %1336 = vmatmul.mubr.bf16.gmra.mrb[0].mxu0 %v1181
      %v1337 = vpop.f32.mrb[0].mxu0
      %v1338 = vadd.f32 0.0, %v1337
      %v1339 = vpop.f32.mrb[0].mxu0
      %v1340 = vpop.f32.mrb[0].mxu0
      %v1341 = vadd.f32 0.0, %v1340
      %v1342 = vpop.f32.mrb[0].mxu0
      %1343 = vmatprep.mubr.bf16.mxu0 0
      %1344 = vmatmul.mubr.bf16.gmra.mrb[0].mxu0 %v1189
      %v1345 = vpop.f32.mrb[0].mxu0
      %v1346 = vadd.f32 0.0, %v1345
      %v1347 = vpop.f32.mrb[0].mxu0
      %v1348 = vpop.f32.mrb[0].mxu0
      %v1349 = vadd.f32 0.0, %v1348
      %v1350 = vpop.f32.mrb[0].mxu0
      %1351 = vmatprep.mubr.bf16.mxu0 0
      %1352 = vmatmul.mubr.bf16.gmra.mrb[0].mxu0 %v1197
      %v1353 = vpop.f32.mrb[0].mxu0
      %v1354 = vadd.f32 0.0, %v1353
      %v1355 = vpop.f32.mrb[0].mxu0
      %v1356 = vpop.f32.mrb[0].mxu0
      %v1357 = vadd.f32 0.0, %v1356
      %v1358 = vpop.f32.mrb[0].mxu0
      %1359 = vmatprep.mubr.bf16.mxu0 0
      %1360 = vmatmul.mubr.bf16.gmra.mrb[0].mxu0 %v1205
      %v1361 = vpop.f32.mrb[0].mxu0
      %v1362 = vadd.f32 0.0, %v1361
      %v1363 = vpop.f32.mrb[0].mxu0
      %v1364 = vpop.f32.mrb[0].mxu0
      %v1365 = vadd.f32 0.0, %v1364
      %v1366 = vpop.f32.mrb[0].mxu0
      %1367 = vmatprep.mubr.bf16.mxu0 0
      %1368 = vmatmul.mubr.bf16.gmra.mrb[0].mxu0 %v1213
      %v1369 = vpop.f32.mrb[0].mxu0
      %v1370 = vadd.f32 0.0, %v1369
      %v1371 = vpop.f32.mrb[0].mxu0
      %v1372 = vpop.f32.mrb[0].mxu0
      %v1373 = vadd.f32 0.0, %v1372
      %v1374 = vpop.f32.mrb[0].mxu0
      %1375 = vdwg.mxu0
      %v1376 = vadd.f32 %v1036, %v1306
      %v1377 = vadd.f32 %v1037, %v1309
      %v1378 = vadd.f32 %v1038, %v1314
      %v1379 = vadd.f32 %v1039, %v1317
      %v1380 = vadd.f32 %v1040, %v1322
      %v1381 = vadd.f32 %v1041, %v1325
      %v1382 = vadd.f32 %v1042, %v1330
      %v1383 = vadd.f32 %v1043, %v1333
      %v1384 = vadd.f32 %v1044, %v1338
      %v1385 = vadd.f32 %v1045, %v1341
      %v1386 = vadd.f32 %v1046, %v1346
      %v1387 = vadd.f32 %v1047, %v1349
      %v1388 = vadd.f32 %v1048, %v1354
      %v1389 = vadd.f32 %v1049, %v1357
      %v1390 = vadd.f32 %v1050, %v1362
      %v1391 = vadd.f32 %v1051, %v1365
      %v1392 = vadd.f32 %v1052, %v1370
      %v1393 = vadd.f32 %v1053, %v1373
      %v1394 = vld [vmem:[%s219 + $0x4] sm:$0xf]
      %v1395 = vld [vmem:[%s219 + $0x8] sm:$0xf]
      %v1396 = vld [vmem:[%s219 + $0xc] sm:$0xf]
      %v1397 = vld [vmem:[%s219 + $0x10] sm:$0xf]
      %v1398 = vld [vmem:[%s219 + $0x14] sm:$0xf]
      %v1399 = vld [vmem:[%s219 + $0x18] sm:$0xf]
      %v1400 = vld [vmem:[%s219 + $0x1c] sm:$0xf]
      %v1401 = vld [vmem:[%s219 + $0x20] sm:$0xf]
      %v1402 = vld [vmem:[%s219 + $0x24] sm:$0xf]
      %v1403 = vld [vmem:[%s219 + $0x28] sm:$0xf]
      %v1404 = vld [vmem:[%s219 + $0x2c] sm:$0xf]
      %v1405 = vld [vmem:[%s219 + $0x30] sm:$0xf]
      %v1406 = vld [vmem:[%s219 + $0x34] sm:$0xf]
      %v1407 = vld [vmem:[%s219 + $0x38] sm:$0xf]
      %v1408 = vld [vmem:[%s219 + $0x3c] sm:$0xf]
      %v1409 = vld [vmem:[%s219 + $0x40] sm:$0xf]
      %v1410 = vld [vmem:[%s219 + $0x44] sm:$0xf]
      %v1411 = vld [vmem:[%s219 + $0x48] sm:$0xf]
      %v1412 = vld [vmem:[%s219 + $0x4c] sm:$0x1]
      %s1413 = scalar_lea.vmem %s2, 256
      %v1414 = vld [vmem:[%s1413] sm:$0xf]
      %v1415 = vld [vmem:[%s1413 + $0x4] sm:$0xf]
      %v1416 = vld [vmem:[%s1413 + $0x8] sm:$0xf]
      %v1417 = vld [vmem:[%s1413 + $0xc] sm:$0xf]
      %v1418 = vld [vmem:[%s1413 + $0x10] sm:$0xf]
      %v1419 = vld [vmem:[%s1413 + $0x14] sm:$0xf]
      %v1420 = vld [vmem:[%s1413 + $0x18] sm:$0xf]
      %v1421 = vld [vmem:[%s1413 + $0x1c] sm:$0xf]
      %v1422 = vld [vmem:[%s1413 + $0x20] sm:$0xf]
      %v1423 = vld [vmem:[%s1413 + $0x24] sm:$0xf]
      %v1424 = vld [vmem:[%s1413 + $0x28] sm:$0xf]
      %v1425 = vld [vmem:[%s1413 + $0x2c] sm:$0xf]
      %v1426 = vld [vmem:[%s1413 + $0x30] sm:$0xf]
      %v1427 = vld [vmem:[%s1413 + $0x34] sm:$0xf]
      %v1428 = vld [vmem:[%s1413 + $0x38] sm:$0xf]
      %v1429 = vld [vmem:[%s1413 + $0x3c] sm:$0xf]
      %v1449 = vunpack.c.l.b16 %v1394
      %v1450 = vunpack.c.l.b16 %v1395
      %v1451 = vunpack.c.l.b16 %v1396
      %v1452 = vunpack.c.l.b16 %v1397
      %v1453 = vunpack.c.l.b16 %v1398
      %v1454 = vunpack.c.l.b16 %v1399
      %v1455 = vunpack.c.l.b16 %v1400
      %v1456 = vunpack.c.l.b16 %v1401
      %v1457 = vunpack.c.l.b16 %v1402
      %v1458 = vunpack.c.l.b16 %v1403
      %v1459 = vunpack.c.l.b16 %v1404
      %v1460 = vunpack.c.l.b16 %v1405
      %v1461 = vunpack.c.l.b16 %v1406
      %v1462 = vunpack.c.l.b16 %v1407
      %v1463 = vunpack.c.l.b16 %v1408
      %v1464 = vunpack.c.l.b16 %v1409
      %v1465 = vunpack.c.l.b16 %v1410
      %v1466 = vunpack.c.l.b16 %v1411
      %v1467 = vunpack.c.l.b16 %v1412
      %v1468 = vpack.c.b16 %v1450, %v1449
      %v1469 = vpack.c.b16 %v1452, %v1451
      %v1470 = vpack.c.b16 %v1454, %v1453
      %v1471 = vpack.c.b16 %v1456, %v1455
      %v1472 = vpack.c.b16 %v1458, %v1457
      %v1473 = vpack.c.b16 %v1460, %v1459
      %v1474 = vpack.c.b16 %v1462, %v1461
      %v1475 = vpack.c.b16 %v1464, %v1463
      %v1476 = vpack.c.b16 %v1466, %v1465
      %v1477 = vpack.c.b16 %v1467, %v1467
      %v1479 = vshrl.u32 %v1468, 16
      %v1481 = vshll.u32 %v1468, 16
      %v1483 = vrot.slane %v1481, 1
      %v1484 = vor.u32 %v1479, %v1483
      %v1486 = vshll.u32 %v1469, 16
      %v1488 = vrot.slane %v1486, 1
      %v1489 = vsel %vm797, %v1484, %v1488
      %v1490 = vshrl.u32 %v1469, 16
      %v1492 = vor.u32 %v1490, %v1488
      %v1494 = vshll.u32 %v1470, 16
      %v1496 = vrot.slane %v1494, 1
      %v1497 = vsel %vm797, %v1492, %v1496
      %v1498 = vshrl.u32 %v1470, 16
      %v1500 = vor.u32 %v1498, %v1496
      %v1502 = vshll.u32 %v1471, 16
      %v1504 = vrot.slane %v1502, 1
      %v1505 = vsel %vm797, %v1500, %v1504
      %v1506 = vshrl.u32 %v1471, 16
      %v1508 = vor.u32 %v1506, %v1504
      %v1510 = vshll.u32 %v1472, 16
      %v1512 = vrot.slane %v1510, 1
      %v1513 = vsel %vm797, %v1508, %v1512
      %v1514 = vshrl.u32 %v1472, 16
      %v1516 = vor.u32 %v1514, %v1512
      %v1518 = vshll.u32 %v1473, 16
      %v1520 = vrot.slane %v1518, 1
      %v1521 = vsel %vm797, %v1516, %v1520
      %v1522 = vshrl.u32 %v1473, 16
      %v1524 = vor.u32 %v1522, %v1520
      %v1526 = vshll.u32 %v1474, 16
      %v1528 = vrot.slane %v1526, 1
      %v1529 = vsel %vm797, %v1524, %v1528
      %v1530 = vshrl.u32 %v1474, 16
      %v1532 = vor.u32 %v1530, %v1528
      %v1534 = vshll.u32 %v1475, 16
      %v1536 = vrot.slane %v1534, 1
      %v1537 = vsel %vm797, %v1532, %v1536
      %v1538 = vshrl.u32 %v1475, 16
      %v1540 = vor.u32 %v1538, %v1536
      %v1542 = vshll.u32 %v1476, 16
      %v1544 = vrot.slane %v1542, 1
      %v1545 = vsel %vm797, %v1540, %v1544
      %v1546 = vshrl.u32 %v1476, 16
      %v1548 = vor.u32 %v1546, %v1544
      %v1550 = vshll.u32 %v1477, 16
      %v1552 = vrot.slane %v1550, 1
      %v1553 = vsel %vm797, %v1548, %v1552
      %v1579 = vunpack.c.l.b16 %v1414
      %v1580 = vunpack.c.l.b16 %v1415
      %v1581 = vunpack.c.l.b16 %v1416
      %v1582 = vunpack.c.l.b16 %v1417
      %v1583 = vunpack.c.l.b16 %v1418
      %v1584 = vunpack.c.l.b16 %v1419
      %v1585 = vunpack.c.l.b16 %v1420
      %v1586 = vunpack.c.l.b16 %v1421
      %v1587 = vunpack.c.l.b16 %v1422
      %v1588 = vunpack.c.l.b16 %v1423
      %v1589 = vunpack.c.l.b16 %v1424
      %v1590 = vunpack.c.l.b16 %v1425
      %v1591 = vunpack.c.l.b16 %v1426
      %v1592 = vunpack.c.l.b16 %v1427
      %v1593 = vunpack.c.l.b16 %v1428
      %v1594 = vunpack.c.l.b16 %v1429
      %v1595 = vpack.c.b16 %v1580, %v1579
      %v1596 = vpack.c.b16 %v1582, %v1581
      %v1597 = vpack.c.b16 %v1584, %v1583
      %v1598 = vpack.c.b16 %v1586, %v1585
      %v1599 = vpack.c.b16 %v1588, %v1587
      %v1600 = vpack.c.b16 %v1590, %v1589
      %v1601 = vpack.c.b16 %v1592, %v1591
      %v1602 = vpack.c.b16 %v1594, %v1593
      %1611 = vmatprep.subr.bf16.mxu0 0
      %1612 = vmatpush1.bf16.msra.mxu0 %v1595
      %1613 = vmatprep.subr.bf16.mxu0 0
      %1614 = vmatpush1.bf16.msra.mxu0 %v1596
      %1615 = vmatprep.subr.bf16.mxu0 0
      %1616 = vmatpush1.bf16.msra.mxu0 %v1597
      %1617 = vmatprep.subr.bf16.mxu0 0
      %1618 = vmatpush1.bf16.msra.mxu0 %v1598
      %1619 = vmatprep.subr.bf16.mxu0 0
      %1620 = vmatpush1.bf16.msra.mxu0 %v1599
      %1621 = vmatprep.subr.bf16.mxu0 0
      %1622 = vmatpush1.bf16.msra.mxu0 %v1600
      %1623 = vmatprep.subr.bf16.mxu0 0
      %1624 = vmatpush1.bf16.msra.mxu0 %v1601
      %1625 = vmatprep.subr.bf16.mxu0 0
      %1626 = vmatpush1.bf16.msra.mxu0 %v1602
      %1627 = vmatprep.subr.bf16.mxu0 0
      %1628 = vmatpush1.bf16.msra.mxu0 0
      %1629 = vmatprep.subr.bf16.mxu0 0
      %1630 = vmatpush1.bf16.msra.mxu0 0
      %1631 = vmatprep.subr.bf16.mxu0 0
      %1632 = vmatpush1.bf16.msra.mxu0 0
      %1633 = vmatprep.subr.bf16.mxu0 0
      %1634 = vmatpush1.bf16.msra.mxu0 0
      %1635 = vmatprep.subr.bf16.mxu0 0
      %1636 = vmatpush1.bf16.msra.mxu0 0
      %1637 = vmatprep.subr.bf16.mxu0 0
      %1638 = vmatpush1.bf16.msra.mxu0 0
      %1639 = vmatprep.subr.bf16.mxu0 0
      %1640 = vmatpush1.bf16.msra.mxu0 0
      %1641 = vmatprep.subr.bf16.mxu0 0
      %1642 = vmatpush1.bf16.msra.mxu0 0
      %1643 = vmatprep.mubr.bf16.mxu0 0
      %1644 = vmatmul.mubr.bf16.gmra.mrb[0].mxu0 %v1489
      %v1645 = vpop.f32.mrb[0].mxu0
      %v1646 = vadd.f32 0.0, %v1645
      %v1647 = vpop.f32.mrb[0].mxu0
      %v1648 = vpop.f32.mrb[0].mxu0
      %v1649 = vadd.f32 0.0, %v1648
      %v1650 = vpop.f32.mrb[0].mxu0
      %1651 = vmatprep.mubr.bf16.mxu0 0
      %1652 = vmatmul.mubr.bf16.gmra.mrb[0].mxu0 %v1497
      %v1653 = vpop.f32.mrb[0].mxu0
      %v1654 = vadd.f32 0.0, %v1653
      %v1655 = vpop.f32.mrb[0].mxu0
      %v1656 = vpop.f32.mrb[0].mxu0
      %v1657 = vadd.f32 0.0, %v1656
      %v1658 = vpop.f32.mrb[0].mxu0
      %1659 = vmatprep.mubr.bf16.mxu0 0
      %1660 = vmatmul.mubr.bf16.gmra.mrb[0].mxu0 %v1505
      %v1661 = vpop.f32.mrb[0].mxu0
      %v1662 = vadd.f32 0.0, %v1661
      %v1663 = vpop.f32.mrb[0].mxu0
      %v1664 = vpop.f32.mrb[0].mxu0
      %v1665 = vadd.f32 0.0, %v1664
      %v1666 = vpop.f32.mrb[0].mxu0
      %1667 = vmatprep.mubr.bf16.mxu0 0
      %1668 = vmatmul.mubr.bf16.gmra.mrb[0].mxu0 %v1513
      %v1669 = vpop.f32.mrb[0].mxu0
      %v1670 = vadd.f32 0.0, %v1669
      %v1671 = vpop.f32.mrb[0].mxu0
      %v1672 = vpop.f32.mrb[0].mxu0
      %v1673 = vadd.f32 0.0, %v1672
      %v1674 = vpop.f32.mrb[0].mxu0
      %1675 = vmatprep.mubr.bf16.mxu0 0
      %1676 = vmatmul.mubr.bf16.gmra.mrb[0].mxu0 %v1521
      %v1677 = vpop.f32.mrb[0].mxu0
      %v1678 = vadd.f32 0.0, %v1677
      %v1679 = vpop.f32.mrb[0].mxu0
      %v1680 = vpop.f32.mrb[0].mxu0
      %v1681 = vadd.f32 0.0, %v1680
      %v1682 = vpop.f32.mrb[0].mxu0
      %1683 = vmatprep.mubr.bf16.mxu0 0
      %1684 = vmatmul.mubr.bf16.gmra.mrb[0].mxu0 %v1529
      %v1685 = vpop.f32.mrb[0].mxu0
      %v1686 = vadd.f32 0.0, %v1685
      %v1687 = vpop.f32.mrb[0].mxu0
      %v1688 = vpop.f32.mrb[0].mxu0
      %v1689 = vadd.f32 0.0, %v1688
      %v1690 = vpop.f32.mrb[0].mxu0
      %1691 = vmatprep.mubr.bf16.mxu0 0
      %1692 = vmatmul.mubr.bf16.gmra.mrb[0].mxu0 %v1537
      %v1693 = vpop.f32.mrb[0].mxu0
      %v1694 = vadd.f32 0.0, %v1693
      %v1695 = vpop.f32.mrb[0].mxu0
      %v1696 = vpop.f32.mrb[0].mxu0
      %v1697 = vadd.f32 0.0, %v1696
      %v1698 = vpop.f32.mrb[0].mxu0
      %1699 = vmatprep.mubr.bf16.mxu0 0
      %1700 = vmatmul.mubr.bf16.gmra.mrb[0].mxu0 %v1545
      %v1701 = vpop.f32.mrb[0].mxu0
      %v1702 = vadd.f32 0.0, %v1701
      %v1703 = vpop.f32.mrb[0].mxu0
      %v1704 = vpop.f32.mrb[0].mxu0
      %v1705 = vadd.f32 0.0, %v1704
      %v1706 = vpop.f32.mrb[0].mxu0
      %1707 = vmatprep.mubr.bf16.mxu0 0
      %1708 = vmatmul.mubr.bf16.gmra.mrb[0].mxu0 %v1553
      %v1709 = vpop.f32.mrb[0].mxu0
      %v1710 = vadd.f32 0.0, %v1709
      %v1711 = vpop.f32.mrb[0].mxu0
      %v1712 = vpop.f32.mrb[0].mxu0
      %v1713 = vadd.f32 0.0, %v1712
      %v1714 = vpop.f32.mrb[0].mxu0
      %1715 = vdwg.mxu0
      %v1716 = vadd.f32 %v1376, %v1646
      %v1717 = vadd.f32 %v1377, %v1649
      %v1718 = vadd.f32 %v1378, %v1654
      %v1719 = vadd.f32 %v1379, %v1657
      %v1720 = vadd.f32 %v1380, %v1662
      %v1721 = vadd.f32 %v1381, %v1665
      %v1722 = vadd.f32 %v1382, %v1670
      %v1723 = vadd.f32 %v1383, %v1673
      %v1724 = vadd.f32 %v1384, %v1678
      %v1725 = vadd.f32 %v1385, %v1681
      %v1726 = vadd.f32 %v1386, %v1686
      %v1727 = vadd.f32 %v1387, %v1689
      %v1728 = vadd.f32 %v1388, %v1694
      %v1729 = vadd.f32 %v1389, %v1697
      %v1730 = vadd.f32 %v1390, %v1702
      %v1731 = vadd.f32 %v1391, %v1705
      %v1732 = vadd.f32 %v1392, %v1710
      %v1733 = vadd.f32 %v1393, %v1713
      %v1734 = vld [vmem:[%s214 + $0x4] sm:$0xe]
      %s1735 = scalar_lea.vmem %s2, 320
      %v1736 = vld [vmem:[%s1735] sm:$0xf]
      %v1737 = vld [vmem:[%s1735 + $0x4] sm:$0xf]
      %v1738 = vld [vmem:[%s1735 + $0x8] sm:$0xf]
      %v1739 = vld [vmem:[%s1735 + $0xc] sm:$0xf]
      %v1740 = vld [vmem:[%s1735 + $0x10] sm:$0xf]
      %v1741 = vld [vmem:[%s1735 + $0x14] sm:$0xf]
      %v1742 = vld [vmem:[%s1735 + $0x18] sm:$0xf]
      %v1743 = vld [vmem:[%s1735 + $0x1c] sm:$0xf]
      %v1744 = vld [vmem:[%s1735 + $0x20] sm:$0xf]
      %v1745 = vld [vmem:[%s1735 + $0x24] sm:$0xf]
      %v1746 = vld [vmem:[%s1735 + $0x28] sm:$0xf]
      %v1747 = vld [vmem:[%s1735 + $0x2c] sm:$0xf]
      %v1748 = vld [vmem:[%s1735 + $0x30] sm:$0xf]
      %v1749 = vld [vmem:[%s1735 + $0x34] sm:$0xf]
      %v1750 = vld [vmem:[%s1735 + $0x38] sm:$0xf]
      %v1751 = vld [vmem:[%s1735 + $0x3c] sm:$0xf]
      %v1753 = vunpack.c.l.b16 %v1734
      %v1754 = vpack.c.b16 %v1110, %v1753
      %vm1755 = vcmask 1046528
      %v1756 = vrot.slane %v1754, 1
      %v1757 = vrot.slane %v1129, 1
      %v1758 = vsel %vm1755, %v1756, %v1757
      %v1759 = vrot.slane %v1130, 1
      %v1760 = vsel %vm1755, %v1757, %v1759
      %v1761 = vrot.slane %v1131, 1
      %v1762 = vsel %vm1755, %v1759, %v1761
      %v1763 = vrot.slane %v1132, 1
      %v1764 = vsel %vm1755, %v1761, %v1763
      %v1765 = vrot.slane %v1133, 1
      %v1766 = vsel %vm1755, %v1763, %v1765
      %v1767 = vrot.slane %v1134, 1
      %v1768 = vsel %vm1755, %v1765, %v1767
      %v1769 = vrot.slane %v1135, 1
      %v1770 = vsel %vm1755, %v1767, %v1769
      %v1771 = vrot.slane %v1136, 1
      %v1772 = vsel %vm1755, %v1769, %v1771
      %v1773 = vrot.slane %v1137, 1
      %v1774 = vsel %vm1755, %v1771, %v1773
      %v1800 = vunpack.c.l.b16 %v1736
      %v1801 = vunpack.c.l.b16 %v1737
      %v1802 = vunpack.c.l.b16 %v1738
      %v1803 = vunpack.c.l.b16 %v1739
      %v1804 = vunpack.c.l.b16 %v1740
      %v1805 = vunpack.c.l.b16 %v1741
      %v1806 = vunpack.c.l.b16 %v1742
      %v1807 = vunpack.c.l.b16 %v1743
      %v1808 = vunpack.c.l.b16 %v1744
      %v1809 = vunpack.c.l.b16 %v1745
      %v1810 = vunpack.c.l.b16 %v1746
      %v1811 = vunpack.c.l.b16 %v1747
      %v1812 = vunpack.c.l.b16 %v1748
      %v1813 = vunpack.c.l.b16 %v1749
      %v1814 = vunpack.c.l.b16 %v1750
      %v1815 = vunpack.c.l.b16 %v1751
      %v1816 = vpack.c.b16 %v1801, %v1800
      %v1817 = vpack.c.b16 %v1803, %v1802
      %v1818 = vpack.c.b16 %v1805, %v1804
      %v1819 = vpack.c.b16 %v1807, %v1806
      %v1820 = vpack.c.b16 %v1809, %v1808
      %v1821 = vpack.c.b16 %v1811, %v1810
      %v1822 = vpack.c.b16 %v1813, %v1812
      %v1823 = vpack.c.b16 %v1815, %v1814
      %1832 = vmatprep.subr.bf16.mxu0 0
      %1833 = vmatpush1.bf16.msra.mxu0 %v1816
      %1834 = vmatprep.subr.bf16.mxu0 0
      %1835 = vmatpush1.bf16.msra.mxu0 %v1817
      %1836 = vmatprep.subr.bf16.mxu0 0
      %1837 = vmatpush1.bf16.msra.mxu0 %v1818
      %1838 = vmatprep.subr.bf16.mxu0 0
      %1839 = vmatpush1.bf16.msra.mxu0 %v1819
      %1840 = vmatprep.subr.bf16.mxu0 0
      %1841 = vmatpush1.bf16.msra.mxu0 %v1820
      %1842 = vmatprep.subr.bf16.mxu0 0
      %1843 = vmatpush1.bf16.msra.mxu0 %v1821
      %1844 = vmatprep.subr.bf16.mxu0 0
      %1845 = vmatpush1.bf16.msra.mxu0 %v1822
      %1846 = vmatprep.subr.bf16.mxu0 0
      %1847 = vmatpush1.bf16.msra.mxu0 %v1823
      %1848 = vmatprep.subr.bf16.mxu0 0
      %1849 = vmatpush1.bf16.msra.mxu0 0
      %1850 = vmatprep.subr.bf16.mxu0 0
      %1851 = vmatpush1.bf16.msra.mxu0 0
      %1852 = vmatprep.subr.bf16.mxu0 0
      %1853 = vmatpush1.bf16.msra.mxu0 0
      %1854 = vmatprep.subr.bf16.mxu0 0
      %1855 = vmatpush1.bf16.msra.mxu0 0
      %1856 = vmatprep.subr.bf16.mxu0 0
      %1857 = vmatpush1.bf16.msra.mxu0 0
      %1858 = vmatprep.subr.bf16.mxu0 0
      %1859 = vmatpush1.bf16.msra.mxu0 0
      %1860 = vmatprep.subr.bf16.mxu0 0
      %1861 = vmatpush1.bf16.msra.mxu0 0
      %1862 = vmatprep.subr.bf16.mxu0 0
      %1863 = vmatpush1.bf16.msra.mxu0 0
      %1864 = vmatprep.mubr.bf16.mxu0 0
      %1865 = vmatmul.mubr.bf16.gmra.mrb[0].mxu0 %v1758
      %v1866 = vpop.f32.mrb[0].mxu0
      %v1867 = vadd.f32 0.0, %v1866
      %v1868 = vpop.f32.mrb[0].mxu0
      %v1869 = vpop.f32.mrb[0].mxu0
      %v1870 = vadd.f32 0.0, %v1869
      %v1871 = vpop.f32.mrb[0].mxu0
      %1872 = vmatprep.mubr.bf16.mxu0 0
      %1873 = vmatmul.mubr.bf16.gmra.mrb[0].mxu0 %v1760
      %v1874 = vpop.f32.mrb[0].mxu0
      %v1875 = vadd.f32 0.0, %v1874
      %v1876 = vpop.f32.mrb[0].mxu0
      %v1877 = vpop.f32.mrb[0].mxu0
      %v1878 = vadd.f32 0.0, %v1877
      %v1879 = vpop.f32.mrb[0].mxu0
      %1880 = vmatprep.mubr.bf16.mxu0 0
      %1881 = vmatmul.mubr.bf16.gmra.mrb[0].mxu0 %v1762
      %v1882 = vpop.f32.mrb[0].mxu0
      %v1883 = vadd.f32 0.0, %v1882
      %v1884 = vpop.f32.mrb[0].mxu0
      %v1885 = vpop.f32.mrb[0].mxu0
      %v1886 = vadd.f32 0.0, %v1885
      %v1887 = vpop.f32.mrb[0].mxu0
      %1888 = vmatprep.mubr.bf16.mxu0 0
      %1889 = vmatmul.mubr.bf16.gmra.mrb[0].mxu0 %v1764
      %v1890 = vpop.f32.mrb[0].mxu0
      %v1891 = vadd.f32 0.0, %v1890
      %v1892 = vpop.f32.mrb[0].mxu0
      %v1893 = vpop.f32.mrb[0].mxu0
      %v1894 = vadd.f32 0.0, %v1893
      %v1895 = vpop.f32.mrb[0].mxu0
      %1896 = vmatprep.mubr.bf16.mxu0 0
      %1897 = vmatmul.mubr.bf16.gmra.mrb[0].mxu0 %v1766
      %v1898 = vpop.f32.mrb[0].mxu0
      %v1899 = vadd.f32 0.0, %v1898
      %v1900 = vpop.f32.mrb[0].mxu0
      %v1901 = vpop.f32.mrb[0].mxu0
      %v1902 = vadd.f32 0.0, %v1901
      %v1903 = vpop.f32.mrb[0].mxu0
      %1904 = vmatprep.mubr.bf16.mxu0 0
      %1905 = vmatmul.mubr.bf16.gmra.mrb[0].mxu0 %v1768
      %v1906 = vpop.f32.mrb[0].mxu0
      %v1907 = vadd.f32 0.0, %v1906
      %v1908 = vpop.f32.mrb[0].mxu0
      %v1909 = vpop.f32.mrb[0].mxu0
      %v1910 = vadd.f32 0.0, %v1909
      %v1911 = vpop.f32.mrb[0].mxu0
      %1912 = vmatprep.mubr.bf16.mxu0 0
      %1913 = vmatmul.mubr.bf16.gmra.mrb[0].mxu0 %v1770
      %v1914 = vpop.f32.mrb[0].mxu0
      %v1915 = vadd.f32 0.0, %v1914
      %v1916 = vpop.f32.mrb[0].mxu0
      %v1917 = vpop.f32.mrb[0].mxu0
      %v1918 = vadd.f32 0.0, %v1917
      %v1919 = vpop.f32.mrb[0].mxu0
      %1920 = vmatprep.mubr.bf16.mxu0 0
      %1921 = vmatmul.mubr.bf16.gmra.mrb[0].mxu0 %v1772
      %v1922 = vpop.f32.mrb[0].mxu0
      %v1923 = vadd.f32 0.0, %v1922
      %v1924 = vpop.f32.mrb[0].mxu0
      %v1925 = vpop.f32.mrb[0].mxu0
      %v1926 = vadd.f32 0.0, %v1925
      %v1927 = vpop.f32.mrb[0].mxu0
      %1928 = vmatprep.mubr.bf16.mxu0 0
      %1929 = vmatmul.mubr.bf16.gmra.mrb[0].mxu0 %v1774
      %v1930 = vpop.f32.mrb[0].mxu0
      %v1931 = vadd.f32 0.0, %v1930
      %v1932 = vpop.f32.mrb[0].mxu0
      %v1933 = vpop.f32.mrb[0].mxu0
      %v1934 = vadd.f32 0.0, %v1933
      %v1935 = vpop.f32.mrb[0].mxu0
      %1936 = vdwg.mxu0
      %v1937 = vadd.f32 %v1716, %v1867
      %v1938 = vadd.f32 %v1717, %v1870
      %v1939 = vadd.f32 %v1718, %v1875
      %v1940 = vadd.f32 %v1719, %v1878
      %v1941 = vadd.f32 %v1720, %v1883
      %v1942 = vadd.f32 %v1721, %v1886
      %v1943 = vadd.f32 %v1722, %v1891
      %v1944 = vadd.f32 %v1723, %v1894
      %v1945 = vadd.f32 %v1724, %v1899
      %v1946 = vadd.f32 %v1725, %v1902
      %v1947 = vadd.f32 %v1726, %v1907
      %v1948 = vadd.f32 %v1727, %v1910
      %v1949 = vadd.f32 %v1728, %v1915
      %v1950 = vadd.f32 %v1729, %v1918
      %v1951 = vadd.f32 %v1730, %v1923
      %v1952 = vadd.f32 %v1731, %v1926
      %v1953 = vadd.f32 %v1732, %v1931
      %v1954 = vadd.f32 %v1733, %v1934
      %v1955 = vld [vmem:[%s214 + $0x8] sm:$0xe]
      %v1956 = vld [vmem:[%s214 + $0xc] sm:$0xf]
      %v1957 = vld [vmem:[%s214 + $0x10] sm:$0xf]
      %v1958 = vld [vmem:[%s214 + $0x14] sm:$0xf]
      %v1959 = vld [vmem:[%s214 + $0x18] sm:$0xf]
      %v1960 = vld [vmem:[%s214 + $0x1c] sm:$0xf]
      %v1961 = vld [vmem:[%s214 + $0x20] sm:$0xf]
      %v1962 = vld [vmem:[%s214 + $0x24] sm:$0xf]
      %v1963 = vld [vmem:[%s214 + $0x28] sm:$0xf]
      %v1964 = vld [vmem:[%s214 + $0x2c] sm:$0xf]
      %v1965 = vld [vmem:[%s214 + $0x30] sm:$0xf]
      %v1966 = vld [vmem:[%s214 + $0x34] sm:$0xf]
      %v1967 = vld [vmem:[%s214 + $0x38] sm:$0xf]
      %v1968 = vld [vmem:[%s214 + $0x3c] sm:$0xf]
      %v1969 = vld [vmem:[%s214 + $0x40] sm:$0xf]
      %v1970 = vld [vmem:[%s214 + $0x44] sm:$0xf]
      %v1971 = vld [vmem:[%s214 + $0x48] sm:$0xf]
      %v1972 = vld [vmem:[%s214 + $0x4c] sm:$0xf]
      %v1973 = vld [vmem:[%s214 + $0x50] sm:$0x1]
      %s1974 = scalar_lea.vmem %s2, 384
      %v1975 = vld [vmem:[%s1974] sm:$0xf]
      %v1976 = vld [vmem:[%s1974 + $0x4] sm:$0xf]
      %v1977 = vld [vmem:[%s1974 + $0x8] sm:$0xf]
      %v1978 = vld [vmem:[%s1974 + $0xc] sm:$0xf]
      %v1979 = vld [vmem:[%s1974 + $0x10] sm:$0xf]
      %v1980 = vld [vmem:[%s1974 + $0x14] sm:$0xf]
      %v1981 = vld [vmem:[%s1974 + $0x18] sm:$0xf]
      %v1982 = vld [vmem:[%s1974 + $0x1c] sm:$0xf]
      %v1983 = vld [vmem:[%s1974 + $0x20] sm:$0xf]
      %v1984 = vld [vmem:[%s1974 + $0x24] sm:$0xf]
      %v1985 = vld [vmem:[%s1974 + $0x28] sm:$0xf]
      %v1986 = vld [vmem:[%s1974 + $0x2c] sm:$0xf]
      %v1987 = vld [vmem:[%s1974 + $0x30] sm:$0xf]
      %v1988 = vld [vmem:[%s1974 + $0x34] sm:$0xf]
      %v1989 = vld [vmem:[%s1974 + $0x38] sm:$0xf]
      %v1990 = vld [vmem:[%s1974 + $0x3c] sm:$0xf]
      %v2010 = vunpack.c.l.b16 %v1955
      %v2011 = vunpack.c.l.b16 %v1956
      %v2012 = vunpack.c.l.b16 %v1957
      %v2013 = vunpack.c.l.b16 %v1958
      %v2014 = vunpack.c.l.b16 %v1959
      %v2015 = vunpack.c.l.b16 %v1960
      %v2016 = vunpack.c.l.b16 %v1961
      %v2017 = vunpack.c.l.b16 %v1962
      %v2018 = vunpack.c.l.b16 %v1963
      %v2019 = vunpack.c.l.b16 %v1964
      %v2020 = vunpack.c.l.b16 %v1965
      %v2021 = vunpack.c.l.b16 %v1966
      %v2022 = vunpack.c.l.b16 %v1967
      %v2023 = vunpack.c.l.b16 %v1968
      %v2024 = vunpack.c.l.b16 %v1969
      %v2025 = vunpack.c.l.b16 %v1970
      %v2026 = vunpack.c.l.b16 %v1971
      %v2027 = vunpack.c.l.b16 %v1972
      %v2028 = vunpack.c.l.b16 %v1973
      %v2029 = vpack.c.b16 %v2011, %v2010
      %v2030 = vpack.c.b16 %v2013, %v2012
      %v2031 = vpack.c.b16 %v2015, %v2014
      %v2032 = vpack.c.b16 %v2017, %v2016
      %v2033 = vpack.c.b16 %v2019, %v2018
      %v2034 = vpack.c.b16 %v2021, %v2020
      %v2035 = vpack.c.b16 %v2023, %v2022
      %v2036 = vpack.c.b16 %v2025, %v2024
      %v2037 = vpack.c.b16 %v2027, %v2026
      %v2038 = vpack.c.b16 %v2028, %v2028
      %v2039 = vrot.slane %v2029, 1
      %v2040 = vrot.slane %v2030, 1
      %v2041 = vsel %vm1755, %v2039, %v2040
      %v2042 = vrot.slane %v2031, 1
      %v2043 = vsel %vm1755, %v2040, %v2042
      %v2044 = vrot.slane %v2032, 1
      %v2045 = vsel %vm1755, %v2042, %v2044
      %v2046 = vrot.slane %v2033, 1
      %v2047 = vsel %vm1755, %v2044, %v2046
      %v2048 = vrot.slane %v2034, 1
      %v2049 = vsel %vm1755, %v2046, %v2048
      %v2050 = vrot.slane %v2035, 1
      %v2051 = vsel %vm1755, %v2048, %v2050
      %v2052 = vrot.slane %v2036, 1
      %v2053 = vsel %vm1755, %v2050, %v2052
      %v2054 = vrot.slane %v2037, 1
      %v2055 = vsel %vm1755, %v2052, %v2054
      %v2056 = vrot.slane %v2038, 1
      %v2057 = vsel %vm1755, %v2054, %v2056
      %v2083 = vunpack.c.l.b16 %v1975
      %v2084 = vunpack.c.l.b16 %v1976
      %v2085 = vunpack.c.l.b16 %v1977
      %v2086 = vunpack.c.l.b16 %v1978
      %v2087 = vunpack.c.l.b16 %v1979
      %v2088 = vunpack.c.l.b16 %v1980
      %v2089 = vunpack.c.l.b16 %v1981
      %v2090 = vunpack.c.l.b16 %v1982
      %v2091 = vunpack.c.l.b16 %v1983
      %v2092 = vunpack.c.l.b16 %v1984
      %v2093 = vunpack.c.l.b16 %v1985
      %v2094 = vunpack.c.l.b16 %v1986
      %v2095 = vunpack.c.l.b16 %v1987
      %v2096 = vunpack.c.l.b16 %v1988
      %v2097 = vunpack.c.l.b16 %v1989
      %v2098 = vunpack.c.l.b16 %v1990
      %v2099 = vpack.c.b16 %v2084, %v2083
      %v2100 = vpack.c.b16 %v2086, %v2085
      %v2101 = vpack.c.b16 %v2088, %v2087
      %v2102 = vpack.c.b16 %v2090, %v2089
      %v2103 = vpack.c.b16 %v2092, %v2091
      %v2104 = vpack.c.b16 %v2094, %v2093
      %v2105 = vpack.c.b16 %v2096, %v2095
      %v2106 = vpack.c.b16 %v2098, %v2097
      %2115 = vmatprep.subr.bf16.mxu0 0
      %2116 = vmatpush1.bf16.msra.mxu0 %v2099
      %2117 = vmatprep.subr.bf16.mxu0 0
      %2118 = vmatpush1.bf16.msra.mxu0 %v2100
      %2119 = vmatprep.subr.bf16.mxu0 0
      %2120 = vmatpush1.bf16.msra.mxu0 %v2101
      %2121 = vmatprep.subr.bf16.mxu0 0
      %2122 = vmatpush1.bf16.msra.mxu0 %v2102
      %2123 = vmatprep.subr.bf16.mxu0 0
      %2124 = vmatpush1.bf16.msra.mxu0 %v2103
      %2125 = vmatprep.subr.bf16.mxu0 0
      %2126 = vmatpush1.bf16.msra.mxu0 %v2104
      %2127 = vmatprep.subr.bf16.mxu0 0
      %2128 = vmatpush1.bf16.msra.mxu0 %v2105
      %2129 = vmatprep.subr.bf16.mxu0 0
      %2130 = vmatpush1.bf16.msra.mxu0 %v2106
      %2131 = vmatprep.subr.bf16.mxu0 0
      %2132 = vmatpush1.bf16.msra.mxu0 0
      %2133 = vmatprep.subr.bf16.mxu0 0
      %2134 = vmatpush1.bf16.msra.mxu0 0
      %2135 = vmatprep.subr.bf16.mxu0 0
      %2136 = vmatpush1.bf16.msra.mxu0 0
      %2137 = vmatprep.subr.bf16.mxu0 0
      %2138 = vmatpush1.bf16.msra.mxu0 0
      %2139 = vmatprep.subr.bf16.mxu0 0
      %2140 = vmatpush1.bf16.msra.mxu0 0
      %2141 = vmatprep.subr.bf16.mxu0 0
      %2142 = vmatpush1.bf16.msra.mxu0 0
      %2143 = vmatprep.subr.bf16.mxu0 0
      %2144 = vmatpush1.bf16.msra.mxu0 0
      %2145 = vmatprep.subr.bf16.mxu0 0
      %2146 = vmatpush1.bf16.msra.mxu0 0
      %2147 = vmatprep.mubr.bf16.mxu0 0
      %2148 = vmatmul.mubr.bf16.gmra.mrb[0].mxu0 %v2041
      %v2149 = vpop.f32.mrb[0].mxu0
      %v2150 = vadd.f32 0.0, %v2149
      %v2151 = vpop.f32.mrb[0].mxu0
      %v2152 = vpop.f32.mrb[0].mxu0
      %v2153 = vadd.f32 0.0, %v2152
      %v2154 = vpop.f32.mrb[0].mxu0
      %2155 = vmatprep.mubr.bf16.mxu0 0
      %2156 = vmatmul.mubr.bf16.gmra.mrb[0].mxu0 %v2043
      %v2157 = vpop.f32.mrb[0].mxu0
      %v2158 = vadd.f32 0.0, %v2157
      %v2159 = vpop.f32.mrb[0].mxu0
      %v2160 = vpop.f32.mrb[0].mxu0
      %v2161 = vadd.f32 0.0, %v2160
      %v2162 = vpop.f32.mrb[0].mxu0
      %2163 = vmatprep.mubr.bf16.mxu0 0
      %2164 = vmatmul.mubr.bf16.gmra.mrb[0].mxu0 %v2045
      %v2165 = vpop.f32.mrb[0].mxu0
      %v2166 = vadd.f32 0.0, %v2165
      %v2167 = vpop.f32.mrb[0].mxu0
      %v2168 = vpop.f32.mrb[0].mxu0
      %v2169 = vadd.f32 0.0, %v2168
      %v2170 = vpop.f32.mrb[0].mxu0
      %2171 = vmatprep.mubr.bf16.mxu0 0
      %2172 = vmatmul.mubr.bf16.gmra.mrb[0].mxu0 %v2047
      %v2173 = vpop.f32.mrb[0].mxu0
      %v2174 = vadd.f32 0.0, %v2173
      %v2175 = vpop.f32.mrb[0].mxu0
      %v2176 = vpop.f32.mrb[0].mxu0
      %v2177 = vadd.f32 0.0, %v2176
      %v2178 = vpop.f32.mrb[0].mxu0
      %2179 = vmatprep.mubr.bf16.mxu0 0
      %2180 = vmatmul.mubr.bf16.gmra.mrb[0].mxu0 %v2049
      %v2181 = vpop.f32.mrb[0].mxu0
      %v2182 = vadd.f32 0.0, %v2181
      %v2183 = vpop.f32.mrb[0].mxu0
      %v2184 = vpop.f32.mrb[0].mxu0
      %v2185 = vadd.f32 0.0, %v2184
      %v2186 = vpop.f32.mrb[0].mxu0
      %2187 = vmatprep.mubr.bf16.mxu0 0
      %2188 = vmatmul.mubr.bf16.gmra.mrb[0].mxu0 %v2051
      %v2189 = vpop.f32.mrb[0].mxu0
      %v2190 = vadd.f32 0.0, %v2189
      %v2191 = vpop.f32.mrb[0].mxu0
      %v2192 = vpop.f32.mrb[0].mxu0
      %v2193 = vadd.f32 0.0, %v2192
      %v2194 = vpop.f32.mrb[0].mxu0
      %2195 = vmatprep.mubr.bf16.mxu0 0
      %2196 = vmatmul.mubr.bf16.gmra.mrb[0].mxu0 %v2053
      %v2197 = vpop.f32.mrb[0].mxu0
      %v2198 = vadd.f32 0.0, %v2197
      %v2199 = vpop.f32.mrb[0].mxu0
      %v2200 = vpop.f32.mrb[0].mxu0
      %v2201 = vadd.f32 0.0, %v2200
      %v2202 = vpop.f32.mrb[0].mxu0
      %2203 = vmatprep.mubr.bf16.mxu0 0
      %2204 = vmatmul.mubr.bf16.gmra.mrb[0].mxu0 %v2055
      %v2205 = vpop.f32.mrb[0].mxu0
      %v2206 = vadd.f32 0.0, %v2205
      %v2207 = vpop.f32.mrb[0].mxu0
      %v2208 = vpop.f32.mrb[0].mxu0
      %v2209 = vadd.f32 0.0, %v2208
      %v2210 = vpop.f32.mrb[0].mxu0
      %2211 = vmatprep.mubr.bf16.mxu0 0
      %2212 = vmatmul.mubr.bf16.gmra.mrb[0].mxu0 %v2057
      %v2213 = vpop.f32.mrb[0].mxu0
      %v2214 = vadd.f32 0.0, %v2213
      %v2215 = vpop.f32.mrb[0].mxu0
      %v2216 = vpop.f32.mrb[0].mxu0
      %v2217 = vadd.f32 0.0, %v2216
      %v2218 = vpop.f32.mrb[0].mxu0
      %2219 = vdwg.mxu0
      %v2220 = vadd.f32 %v1937, %v2150
      %v2221 = vadd.f32 %v1938, %v2153
      %v2222 = vadd.f32 %v1939, %v2158
      %v2223 = vadd.f32 %v1940, %v2161
      %v2224 = vadd.f32 %v1941, %v2166
      %v2225 = vadd.f32 %v1942, %v2169
      %v2226 = vadd.f32 %v1943, %v2174
      %v2227 = vadd.f32 %v1944, %v2177
      %v2228 = vadd.f32 %v1945, %v2182
      %v2229 = vadd.f32 %v1946, %v2185
      %v2230 = vadd.f32 %v1947, %v2190
      %v2231 = vadd.f32 %v1948, %v2193
      %v2232 = vadd.f32 %v1949, %v2198
      %v2233 = vadd.f32 %v1950, %v2201
      %v2234 = vadd.f32 %v1951, %v2206
      %v2235 = vadd.f32 %v1952, %v2209
      %v2236 = vadd.f32 %v1953, %v2214
      %v2237 = vadd.f32 %v1954, %v2217
      %v2238 = vld [vmem:[%s219 + $0x8] sm:$0xe]
      %v2239 = vld [vmem:[%s219 + $0xc] sm:$0xf]
      %v2240 = vld [vmem:[%s219 + $0x10] sm:$0xf]
      %v2241 = vld [vmem:[%s219 + $0x14] sm:$0xf]
      %v2242 = vld [vmem:[%s219 + $0x18] sm:$0xf]
      %v2243 = vld [vmem:[%s219 + $0x1c] sm:$0xf]
      %v2244 = vld [vmem:[%s219 + $0x20] sm:$0xf]
      %v2245 = vld [vmem:[%s219 + $0x24] sm:$0xf]
      %v2246 = vld [vmem:[%s219 + $0x28] sm:$0xf]
      %v2247 = vld [vmem:[%s219 + $0x2c] sm:$0xf]
      %v2248 = vld [vmem:[%s219 + $0x30] sm:$0xf]
      %v2249 = vld [vmem:[%s219 + $0x34] sm:$0xf]
      %v2250 = vld [vmem:[%s219 + $0x38] sm:$0xf]
      %v2251 = vld [vmem:[%s219 + $0x3c] sm:$0xf]
      %v2252 = vld [vmem:[%s219 + $0x40] sm:$0xf]
      %v2253 = vld [vmem:[%s219 + $0x44] sm:$0xf]
      %v2254 = vld [vmem:[%s219 + $0x48] sm:$0xf]
      %v2255 = vld [vmem:[%s219 + $0x4c] sm:$0xf]
      %v2256 = vld [vmem:[%s219 + $0x50] sm:$0x1]
      %s2257 = scalar_lea.vmem %s2, 448
      %v2258 = vld [vmem:[%s2257] sm:$0xf]
      %v2259 = vld [vmem:[%s2257 + $0x4] sm:$0xf]
      %v2260 = vld [vmem:[%s2257 + $0x8] sm:$0xf]
      %v2261 = vld [vmem:[%s2257 + $0xc] sm:$0xf]
      %v2262 = vld [vmem:[%s2257 + $0x10] sm:$0xf]
      %v2263 = vld [vmem:[%s2257 + $0x14] sm:$0xf]
      %v2264 = vld [vmem:[%s2257 + $0x18] sm:$0xf]
      %v2265 = vld [vmem:[%s2257 + $0x1c] sm:$0xf]
      %v2266 = vld [vmem:[%s2257 + $0x20] sm:$0xf]
      %v2267 = vld [vmem:[%s2257 + $0x24] sm:$0xf]
      %v2268 = vld [vmem:[%s2257 + $0x28] sm:$0xf]
      %v2269 = vld [vmem:[%s2257 + $0x2c] sm:$0xf]
      %v2270 = vld [vmem:[%s2257 + $0x30] sm:$0xf]
      %v2271 = vld [vmem:[%s2257 + $0x34] sm:$0xf]
      %v2272 = vld [vmem:[%s2257 + $0x38] sm:$0xf]
      %v2273 = vld [vmem:[%s2257 + $0x3c] sm:$0xf]
      %v2293 = vunpack.c.l.b16 %v2238
      %v2294 = vunpack.c.l.b16 %v2239
      %v2295 = vunpack.c.l.b16 %v2240
      %v2296 = vunpack.c.l.b16 %v2241
      %v2297 = vunpack.c.l.b16 %v2242
      %v2298 = vunpack.c.l.b16 %v2243
      %v2299 = vunpack.c.l.b16 %v2244
      %v2300 = vunpack.c.l.b16 %v2245
      %v2301 = vunpack.c.l.b16 %v2246
      %v2302 = vunpack.c.l.b16 %v2247
      %v2303 = vunpack.c.l.b16 %v2248
      %v2304 = vunpack.c.l.b16 %v2249
      %v2305 = vunpack.c.l.b16 %v2250
      %v2306 = vunpack.c.l.b16 %v2251
      %v2307 = vunpack.c.l.b16 %v2252
      %v2308 = vunpack.c.l.b16 %v2253
      %v2309 = vunpack.c.l.b16 %v2254
      %v2310 = vunpack.c.l.b16 %v2255
      %v2311 = vunpack.c.l.b16 %v2256
      %v2312 = vpack.c.b16 %v2294, %v2293
      %v2313 = vpack.c.b16 %v2296, %v2295
      %v2314 = vpack.c.b16 %v2298, %v2297
      %v2315 = vpack.c.b16 %v2300, %v2299
      %v2316 = vpack.c.b16 %v2302, %v2301
      %v2317 = vpack.c.b16 %v2304, %v2303
      %v2318 = vpack.c.b16 %v2306, %v2305
      %v2319 = vpack.c.b16 %v2308, %v2307
      %v2320 = vpack.c.b16 %v2310, %v2309
      %v2321 = vpack.c.b16 %v2311, %v2311
      %v2322 = vrot.slane %v2312, 1
      %v2323 = vrot.slane %v2313, 1
      %v2324 = vsel %vm1755, %v2322, %v2323
      %v2325 = vrot.slane %v2314, 1
      %v2326 = vsel %vm1755, %v2323, %v2325
      %v2327 = vrot.slane %v2315, 1
      %v2328 = vsel %vm1755, %v2325, %v2327
      %v2329 = vrot.slane %v2316, 1
      %v2330 = vsel %vm1755, %v2327, %v2329
      %v2331 = vrot.slane %v2317, 1
      %v2332 = vsel %vm1755, %v2329, %v2331
      %v2333 = vrot.slane %v2318, 1
      %v2334 = vsel %vm1755, %v2331, %v2333
      %v2335 = vrot.slane %v2319, 1
      %v2336 = vsel %vm1755, %v2333, %v2335
      %v2337 = vrot.slane %v2320, 1
      %v2338 = vsel %vm1755, %v2335, %v2337
      %v2339 = vrot.slane %v2321, 1
      %v2340 = vsel %vm1755, %v2337, %v2339
      %v2366 = vunpack.c.l.b16 %v2258
      %v2367 = vunpack.c.l.b16 %v2259
      %v2368 = vunpack.c.l.b16 %v2260
      %v2369 = vunpack.c.l.b16 %v2261
      %v2370 = vunpack.c.l.b16 %v2262
      %v2371 = vunpack.c.l.b16 %v2263
      %v2372 = vunpack.c.l.b16 %v2264
      %v2373 = vunpack.c.l.b16 %v2265
      %v2374 = vunpack.c.l.b16 %v2266
      %v2375 = vunpack.c.l.b16 %v2267
      %v2376 = vunpack.c.l.b16 %v2268
      %v2377 = vunpack.c.l.b16 %v2269
      %v2378 = vunpack.c.l.b16 %v2270
      %v2379 = vunpack.c.l.b16 %v2271
      %v2380 = vunpack.c.l.b16 %v2272
      %v2381 = vunpack.c.l.b16 %v2273
      %v2382 = vpack.c.b16 %v2367, %v2366
      %v2383 = vpack.c.b16 %v2369, %v2368
      %v2384 = vpack.c.b16 %v2371, %v2370
      %v2385 = vpack.c.b16 %v2373, %v2372
      %v2386 = vpack.c.b16 %v2375, %v2374
      %v2387 = vpack.c.b16 %v2377, %v2376
      %v2388 = vpack.c.b16 %v2379, %v2378
      %v2389 = vpack.c.b16 %v2381, %v2380
      %2398 = vmatprep.subr.bf16.mxu0 0
      %2399 = vmatpush1.bf16.msra.mxu0 %v2382
      %2400 = vmatprep.subr.bf16.mxu0 0
      %2401 = vmatpush1.bf16.msra.mxu0 %v2383
      %2402 = vmatprep.subr.bf16.mxu0 0
      %2403 = vmatpush1.bf16.msra.mxu0 %v2384
      %2404 = vmatprep.subr.bf16.mxu0 0
      %2405 = vmatpush1.bf16.msra.mxu0 %v2385
      %2406 = vmatprep.subr.bf16.mxu0 0
      %2407 = vmatpush1.bf16.msra.mxu0 %v2386
      %2408 = vmatprep.subr.bf16.mxu0 0
      %2409 = vmatpush1.bf16.msra.mxu0 %v2387
      %2410 = vmatprep.subr.bf16.mxu0 0
      %2411 = vmatpush1.bf16.msra.mxu0 %v2388
      %2412 = vmatprep.subr.bf16.mxu0 0
      %2413 = vmatpush1.bf16.msra.mxu0 %v2389
      %2414 = vmatprep.subr.bf16.mxu0 0
      %2415 = vmatpush1.bf16.msra.mxu0 0
      %2416 = vmatprep.subr.bf16.mxu0 0
      %2417 = vmatpush1.bf16.msra.mxu0 0
      %2418 = vmatprep.subr.bf16.mxu0 0
      %2419 = vmatpush1.bf16.msra.mxu0 0
      %2420 = vmatprep.subr.bf16.mxu0 0
      %2421 = vmatpush1.bf16.msra.mxu0 0
      %2422 = vmatprep.subr.bf16.mxu0 0
      %2423 = vmatpush1.bf16.msra.mxu0 0
      %2424 = vmatprep.subr.bf16.mxu0 0
      %2425 = vmatpush1.bf16.msra.mxu0 0
      %2426 = vmatprep.subr.bf16.mxu0 0
      %2427 = vmatpush1.bf16.msra.mxu0 0
      %2428 = vmatprep.subr.bf16.mxu0 0
      %2429 = vmatpush1.bf16.msra.mxu0 0
      %2430 = vmatprep.mubr.bf16.mxu0 0
      %2431 = vmatmul.mubr.bf16.gmra.mrb[0].mxu0 %v2324
      %v2432 = vpop.f32.mrb[0].mxu0
      %v2433 = vadd.f32 0.0, %v2432
      %v2434 = vpop.f32.mrb[0].mxu0
      %v2435 = vpop.f32.mrb[0].mxu0
      %v2436 = vadd.f32 0.0, %v2435
      %v2437 = vpop.f32.mrb[0].mxu0
      %2438 = vmatprep.mubr.bf16.mxu0 0
      %2439 = vmatmul.mubr.bf16.gmra.mrb[0].mxu0 %v2326
      %v2440 = vpop.f32.mrb[0].mxu0
      %v2441 = vadd.f32 0.0, %v2440
      %v2442 = vpop.f32.mrb[0].mxu0
      %v2443 = vpop.f32.mrb[0].mxu0
      %v2444 = vadd.f32 0.0, %v2443
      %v2445 = vpop.f32.mrb[0].mxu0
      %2446 = vmatprep.mubr.bf16.mxu0 0
      %2447 = vmatmul.mubr.bf16.gmra.mrb[0].mxu0 %v2328
      %v2448 = vpop.f32.mrb[0].mxu0
      %v2449 = vadd.f32 0.0, %v2448
      %v2450 = vpop.f32.mrb[0].mxu0
      %v2451 = vpop.f32.mrb[0].mxu0
      %v2452 = vadd.f32 0.0, %v2451
      %v2453 = vpop.f32.mrb[0].mxu0
      %2454 = vmatprep.mubr.bf16.mxu0 0
      %2455 = vmatmul.mubr.bf16.gmra.mrb[0].mxu0 %v2330
      %v2456 = vpop.f32.mrb[0].mxu0
      %v2457 = vadd.f32 0.0, %v2456
      %v2458 = vpop.f32.mrb[0].mxu0
      %v2459 = vpop.f32.mrb[0].mxu0
      %v2460 = vadd.f32 0.0, %v2459
      %v2461 = vpop.f32.mrb[0].mxu0
      %2462 = vmatprep.mubr.bf16.mxu0 0
      %2463 = vmatmul.mubr.bf16.gmra.mrb[0].mxu0 %v2332
      %v2464 = vpop.f32.mrb[0].mxu0
      %v2465 = vadd.f32 0.0, %v2464
      %v2466 = vpop.f32.mrb[0].mxu0
      %v2467 = vpop.f32.mrb[0].mxu0
      %v2468 = vadd.f32 0.0, %v2467
      %v2469 = vpop.f32.mrb[0].mxu0
      %2470 = vmatprep.mubr.bf16.mxu0 0
      %2471 = vmatmul.mubr.bf16.gmra.mrb[0].mxu0 %v2334
      %v2472 = vpop.f32.mrb[0].mxu0
      %v2473 = vadd.f32 0.0, %v2472
      %v2474 = vpop.f32.mrb[0].mxu0
      %v2475 = vpop.f32.mrb[0].mxu0
      %v2476 = vadd.f32 0.0, %v2475
      %v2477 = vpop.f32.mrb[0].mxu0
      %2478 = vmatprep.mubr.bf16.mxu0 0
      %2479 = vmatmul.mubr.bf16.gmra.mrb[0].mxu0 %v2336
      %v2480 = vpop.f32.mrb[0].mxu0
      %v2481 = vadd.f32 0.0, %v2480
      %v2482 = vpop.f32.mrb[0].mxu0
      %v2483 = vpop.f32.mrb[0].mxu0
      %v2484 = vadd.f32 0.0, %v2483
      %v2485 = vpop.f32.mrb[0].mxu0
      %2486 = vmatprep.mubr.bf16.mxu0 0
      %2487 = vmatmul.mubr.bf16.gmra.mrb[0].mxu0 %v2338
      %v2488 = vpop.f32.mrb[0].mxu0
      %v2489 = vadd.f32 0.0, %v2488
      %v2490 = vpop.f32.mrb[0].mxu0
      %v2491 = vpop.f32.mrb[0].mxu0
      %v2492 = vadd.f32 0.0, %v2491
      %v2493 = vpop.f32.mrb[0].mxu0
      %2494 = vmatprep.mubr.bf16.mxu0 0
      %2495 = vmatmul.mubr.bf16.gmra.mrb[0].mxu0 %v2340
      %v2496 = vpop.f32.mrb[0].mxu0
      %v2497 = vadd.f32 0.0, %v2496
      %v2498 = vpop.f32.mrb[0].mxu0
      %v2499 = vpop.f32.mrb[0].mxu0
      %v2500 = vadd.f32 0.0, %v2499
      %v2501 = vpop.f32.mrb[0].mxu0
      %2502 = vdwg.mxu0
      %v2503 = vadd.f32 %v2220, %v2433
      %v2504 = vadd.f32 %v2221, %v2436
      %v2505 = vadd.f32 %v2222, %v2441
      %v2506 = vadd.f32 %v2223, %v2444
      %v2507 = vadd.f32 %v2224, %v2449
      %v2508 = vadd.f32 %v2225, %v2452
      %v2509 = vadd.f32 %v2226, %v2457
      %v2510 = vadd.f32 %v2227, %v2460
      %v2511 = vadd.f32 %v2228, %v2465
      %v2512 = vadd.f32 %v2229, %v2468
      %v2513 = vadd.f32 %v2230, %v2473
      %v2514 = vadd.f32 %v2231, %v2476
      %v2515 = vadd.f32 %v2232, %v2481
      %v2516 = vadd.f32 %v2233, %v2484
      %v2517 = vadd.f32 %v2234, %v2489
      %v2518 = vadd.f32 %v2235, %v2492
      %v2519 = vadd.f32 %v2236, %v2497
      %v2520 = vadd.f32 %v2237, %v2500
      %v2521 = vld [vmem:[%s214 + $0x50] sm:$0x3]
      %s2522 = scalar_lea.vmem %s2, 512
      %v2523 = vld [vmem:[%s2522] sm:$0xf]
      %v2524 = vld [vmem:[%s2522 + $0x4] sm:$0xf]
      %v2525 = vld [vmem:[%s2522 + $0x8] sm:$0xf]
      %v2526 = vld [vmem:[%s2522 + $0xc] sm:$0xf]
      %v2527 = vld [vmem:[%s2522 + $0x10] sm:$0xf]
      %v2528 = vld [vmem:[%s2522 + $0x14] sm:$0xf]
      %v2529 = vld [vmem:[%s2522 + $0x18] sm:$0xf]
      %v2530 = vld [vmem:[%s2522 + $0x1c] sm:$0xf]
      %v2531 = vld [vmem:[%s2522 + $0x20] sm:$0xf]
      %v2532 = vld [vmem:[%s2522 + $0x24] sm:$0xf]
      %v2533 = vld [vmem:[%s2522 + $0x28] sm:$0xf]
      %v2534 = vld [vmem:[%s2522 + $0x2c] sm:$0xf]
      %v2535 = vld [vmem:[%s2522 + $0x30] sm:$0xf]
      %v2536 = vld [vmem:[%s2522 + $0x34] sm:$0xf]
      %v2537 = vld [vmem:[%s2522 + $0x38] sm:$0xf]
      %v2538 = vld [vmem:[%s2522 + $0x3c] sm:$0xf]
      %v2540 = vunpack.c.l.b16 %v2521
      %v2541 = vpack.c.b16 %v2540, %v2540
      %vm2542 = vsmask.f32 6400
      %v2544 = vshrl.u32 %v2029, 16
      %v2546 = vrot.slane %v2544, 1
      %v2547 = vshll.u32 %v2029, 16
      %v2549 = vrot.slane %v2547, 2
      %v2550 = vor.u32 %v2546, %v2549
      %v2552 = vshrl.u32 %v2030, 16
      %v2554 = vrot.slane %v2552, 1
      %v2555 = vshll.u32 %v2030, 16
      %v2557 = vrot.slane %v2555, 2
      %v2558 = vor.u32 %v2554, %v2557
      %v2559 = vsel %vm2542, %v2550, %v2558
      %v2561 = vshrl.u32 %v2031, 16
      %v2563 = vrot.slane %v2561, 1
      %v2564 = vshll.u32 %v2031, 16
      %v2566 = vrot.slane %v2564, 2
      %v2567 = vor.u32 %v2563, %v2566
      %v2568 = vsel %vm2542, %v2558, %v2567
      %v2570 = vshrl.u32 %v2032, 16
      %v2572 = vrot.slane %v2570, 1
      %v2573 = vshll.u32 %v2032, 16
      %v2575 = vrot.slane %v2573, 2
      %v2576 = vor.u32 %v2572, %v2575
      %v2577 = vsel %vm2542, %v2567, %v2576
      %v2579 = vshrl.u32 %v2033, 16
      %v2581 = vrot.slane %v2579, 1
      %v2582 = vshll.u32 %v2033, 16
      %v2584 = vrot.slane %v2582, 2
      %v2585 = vor.u32 %v2581, %v2584
      %v2586 = vsel %vm2542, %v2576, %v2585
      %v2588 = vshrl.u32 %v2034, 16
      %v2590 = vrot.slane %v2588, 1
      %v2591 = vshll.u32 %v2034, 16
      %v2593 = vrot.slane %v2591, 2
      %v2594 = vor.u32 %v2590, %v2593
      %v2595 = vsel %vm2542, %v2585, %v2594
      %v2597 = vshrl.u32 %v2035, 16
      %v2599 = vrot.slane %v2597, 1
      %v2600 = vshll.u32 %v2035, 16
      %v2602 = vrot.slane %v2600, 2
      %v2603 = vor.u32 %v2599, %v2602
      %v2604 = vsel %vm2542, %v2594, %v2603
      %v2606 = vshrl.u32 %v2036, 16
      %v2608 = vrot.slane %v2606, 1
      %v2609 = vshll.u32 %v2036, 16
      %v2611 = vrot.slane %v2609, 2
      %v2612 = vor.u32 %v2608, %v2611
      %v2613 = vsel %vm2542, %v2603, %v2612
      %v2615 = vshrl.u32 %v2037, 16
      %v2617 = vrot.slane %v2615, 1
      %v2618 = vshll.u32 %v2037, 16
      %v2620 = vrot.slane %v2618, 2
      %v2621 = vor.u32 %v2617, %v2620
      %v2622 = vsel %vm2542, %v2612, %v2621
      %v2624 = vshrl.u32 %v2541, 16
      %v2626 = vrot.slane %v2624, 1
      %v2627 = vshll.u32 %v2541, 16
      %v2629 = vrot.slane %v2627, 2
      %v2630 = vor.u32 %v2626, %v2629
      %v2631 = vsel %vm2542, %v2621, %v2630
      %v2657 = vunpack.c.l.b16 %v2523
      %v2658 = vunpack.c.l.b16 %v2524
      %v2659 = vunpack.c.l.b16 %v2525
      %v2660 = vunpack.c.l.b16 %v2526
      %v2661 = vunpack.c.l.b16 %v2527
      %v2662 = vunpack.c.l.b16 %v2528
      %v2663 = vunpack.c.l.b16 %v2529
      %v2664 = vunpack.c.l.b16 %v2530
      %v2665 = vunpack.c.l.b16 %v2531
      %v2666 = vunpack.c.l.b16 %v2532
      %v2667 = vunpack.c.l.b16 %v2533
      %v2668 = vunpack.c.l.b16 %v2534
      %v2669 = vunpack.c.l.b16 %v2535
      %v2670 = vunpack.c.l.b16 %v2536
      %v2671 = vunpack.c.l.b16 %v2537
      %v2672 = vunpack.c.l.b16 %v2538
      %v2673 = vpack.c.b16 %v2658, %v2657
      %v2674 = vpack.c.b16 %v2660, %v2659
      %v2675 = vpack.c.b16 %v2662, %v2661
      %v2676 = vpack.c.b16 %v2664, %v2663
      %v2677 = vpack.c.b16 %v2666, %v2665
      %v2678 = vpack.c.b16 %v2668, %v2667
      %v2679 = vpack.c.b16 %v2670, %v2669
      %v2680 = vpack.c.b16 %v2672, %v2671
      %2689 = vmatprep.subr.bf16.mxu0 0
      %2690 = vmatpush1.bf16.msra.mxu0 %v2673
      %2691 = vmatprep.subr.bf16.mxu0 0
      %2692 = vmatpush1.bf16.msra.mxu0 %v2674
      %2693 = vmatprep.subr.bf16.mxu0 0
      %2694 = vmatpush1.bf16.msra.mxu0 %v2675
      %2695 = vmatprep.subr.bf16.mxu0 0
      %2696 = vmatpush1.bf16.msra.mxu0 %v2676
      %2697 = vmatprep.subr.bf16.mxu0 0
      %2698 = vmatpush1.bf16.msra.mxu0 %v2677
      %2699 = vmatprep.subr.bf16.mxu0 0
      %2700 = vmatpush1.bf16.msra.mxu0 %v2678
      %2701 = vmatprep.subr.bf16.mxu0 0
      %2702 = vmatpush1.bf16.msra.mxu0 %v2679
      %2703 = vmatprep.subr.bf16.mxu0 0
      %2704 = vmatpush1.bf16.msra.mxu0 %v2680
      %2705 = vmatprep.subr.bf16.mxu0 0
      %2706 = vmatpush1.bf16.msra.mxu0 0
      %2707 = vmatprep.subr.bf16.mxu0 0
      %2708 = vmatpush1.bf16.msra.mxu0 0
      %2709 = vmatprep.subr.bf16.mxu0 0
      %2710 = vmatpush1.bf16.msra.mxu0 0
      %2711 = vmatprep.subr.bf16.mxu0 0
      %2712 = vmatpush1.bf16.msra.mxu0 0
      %2713 = vmatprep.subr.bf16.mxu0 0
      %2714 = vmatpush1.bf16.msra.mxu0 0
      %2715 = vmatprep.subr.bf16.mxu0 0
      %2716 = vmatpush1.bf16.msra.mxu0 0
      %2717 = vmatprep.subr.bf16.mxu0 0
      %2718 = vmatpush1.bf16.msra.mxu0 0
      %2719 = vmatprep.subr.bf16.mxu0 0
      %2720 = vmatpush1.bf16.msra.mxu0 0
      %2721 = vmatprep.mubr.bf16.mxu0 0
      %2722 = vmatmul.mubr.bf16.gmra.mrb[0].mxu0 %v2559
      %v2723 = vpop.f32.mrb[0].mxu0
      %v2724 = vadd.f32 0.0, %v2723
      %v2725 = vpop.f32.mrb[0].mxu0
      %v2726 = vpop.f32.mrb[0].mxu0
      %v2727 = vadd.f32 0.0, %v2726
      %v2728 = vpop.f32.mrb[0].mxu0
      %2729 = vmatprep.mubr.bf16.mxu0 0
      %2730 = vmatmul.mubr.bf16.gmra.mrb[0].mxu0 %v2568
      %v2731 = vpop.f32.mrb[0].mxu0
      %v2732 = vadd.f32 0.0, %v2731
      %v2733 = vpop.f32.mrb[0].mxu0
      %v2734 = vpop.f32.mrb[0].mxu0
      %v2735 = vadd.f32 0.0, %v2734
      %v2736 = vpop.f32.mrb[0].mxu0
      %2737 = vmatprep.mubr.bf16.mxu0 0
      %2738 = vmatmul.mubr.bf16.gmra.mrb[0].mxu0 %v2577
      %v2739 = vpop.f32.mrb[0].mxu0
      %v2740 = vadd.f32 0.0, %v2739
      %v2741 = vpop.f32.mrb[0].mxu0
      %v2742 = vpop.f32.mrb[0].mxu0
      %v2743 = vadd.f32 0.0, %v2742
      %v2744 = vpop.f32.mrb[0].mxu0
      %2745 = vmatprep.mubr.bf16.mxu0 0
      %2746 = vmatmul.mubr.bf16.gmra.mrb[0].mxu0 %v2586
      %v2747 = vpop.f32.mrb[0].mxu0
      %v2748 = vadd.f32 0.0, %v2747
      %v2749 = vpop.f32.mrb[0].mxu0
      %v2750 = vpop.f32.mrb[0].mxu0
      %v2751 = vadd.f32 0.0, %v2750
      %v2752 = vpop.f32.mrb[0].mxu0
      %2753 = vmatprep.mubr.bf16.mxu0 0
      %2754 = vmatmul.mubr.bf16.gmra.mrb[0].mxu0 %v2595
      %v2755 = vpop.f32.mrb[0].mxu0
      %v2756 = vadd.f32 0.0, %v2755
      %v2757 = vpop.f32.mrb[0].mxu0
      %v2758 = vpop.f32.mrb[0].mxu0
      %v2759 = vadd.f32 0.0, %v2758
      %v2760 = vpop.f32.mrb[0].mxu0
      %2761 = vmatprep.mubr.bf16.mxu0 0
      %2762 = vmatmul.mubr.bf16.gmra.mrb[0].mxu0 %v2604
      %v2763 = vpop.f32.mrb[0].mxu0
      %v2764 = vadd.f32 0.0, %v2763
      %v2765 = vpop.f32.mrb[0].mxu0
      %v2766 = vpop.f32.mrb[0].mxu0
      %v2767 = vadd.f32 0.0, %v2766
      %v2768 = vpop.f32.mrb[0].mxu0
      %2769 = vmatprep.mubr.bf16.mxu0 0
      %2770 = vmatmul.mubr.bf16.gmra.mrb[0].mxu0 %v2613
      %v2771 = vpop.f32.mrb[0].mxu0
      %v2772 = vadd.f32 0.0, %v2771
      %v2773 = vpop.f32.mrb[0].mxu0
      %v2774 = vpop.f32.mrb[0].mxu0
      %v2775 = vadd.f32 0.0, %v2774
      %v2776 = vpop.f32.mrb[0].mxu0
      %2777 = vmatprep.mubr.bf16.mxu0 0
      %2778 = vmatmul.mubr.bf16.gmra.mrb[0].mxu0 %v2622
      %v2779 = vpop.f32.mrb[0].mxu0
      %v2780 = vadd.f32 0.0, %v2779
      %v2781 = vpop.f32.mrb[0].mxu0
      %v2782 = vpop.f32.mrb[0].mxu0
      %v2783 = vadd.f32 0.0, %v2782
      %v2784 = vpop.f32.mrb[0].mxu0
      %2785 = vmatprep.mubr.bf16.mxu0 0
      %2786 = vmatmul.mubr.bf16.gmra.mrb[0].mxu0 %v2631
      %v2787 = vpop.f32.mrb[0].mxu0
      %v2788 = vadd.f32 0.0, %v2787
      %v2789 = vpop.f32.mrb[0].mxu0
      %v2790 = vpop.f32.mrb[0].mxu0
      %v2791 = vadd.f32 0.0, %v2790
      %v2792 = vpop.f32.mrb[0].mxu0
      %2793 = vdwg.mxu0
      %v2794 = vadd.f32 %v2503, %v2724
      %v2795 = vadd.f32 %v2504, %v2727
      %v2796 = vadd.f32 %v2505, %v2732
      %v2797 = vadd.f32 %v2506, %v2735
      %v2798 = vadd.f32 %v2507, %v2740
      %v2799 = vadd.f32 %v2508, %v2743
      %v2800 = vadd.f32 %v2509, %v2748
      %v2801 = vadd.f32 %v2510, %v2751
      %v2802 = vadd.f32 %v2511, %v2756
      %v2803 = vadd.f32 %v2512, %v2759
      %v2804 = vadd.f32 %v2513, %v2764
      %v2805 = vadd.f32 %v2514, %v2767
      %v2806 = vadd.f32 %v2515, %v2772
      %v2807 = vadd.f32 %v2516, %v2775
      %v2808 = vadd.f32 %v2517, %v2780
      %v2809 = vadd.f32 %v2518, %v2783
      %v2810 = vadd.f32 %v2519, %v2788
      %v2811 = vadd.f32 %v2520, %v2791
      %v2812 = vlaneseq
      %v2813 = vshrl.u32 %v2812, 7
      %v2814 = vadd.s32 %v2813, 8
      %v2815 = vadd.s32 %v2813, 16
      %v2816 = vadd.s32 %v2813, 24
      %v2817 = vadd.s32 %v2813, 32
      %v2818 = vadd.s32 %v2813, 40
      %v2819 = vadd.s32 %v2813, 48
      %v2820 = vadd.s32 %v2813, 56
      %v2821 = vadd.s32 %v2813, 64
      %v2822 = vadd.s32 %v2813, 72
      %v2823 = vadd.s32 %v2813, 80
      %v2824 = vadd.s32 %v2813, 88
      %v2825 = vadd.s32 %v2813, 96
      %v2826 = vadd.s32 %v2813, 104
      %v2827 = vadd.s32 %v2813, 112
      %v2828 = vadd.s32 %v2813, 120
      %v2829 = vadd.s32 %v2813, 128
      %v2830 = vadd.s32 %v2813, 136
      %vm2831 = vcmp.lt.s32.totalorder %v2813, 0
      %v2832 = vsub.s32 0, %v2813
      %v2833 = vsel %vm2831, %v2832, %v2813
      %v2834 = vmul.u32.u64.compose %v2833, 3817748708
      %v2835 = vextract.low.u32 %v2834
      %v2836 = vextract.high.u32 %v2834
      %v2837 = vshrl.u32 %v2836, 4
      %v2838 = vmul.u32 %v2837, 18
      %v2839 = vsub.s32 %v2833, %v2838
      %v2840 = vsub.s32 0, %v2839
      %v2841 = vsel %vm2831, %v2840, %v2839
      %vm2842 = vcmp.lt.s32.totalorder %v2814, 0
      %v2843 = vsub.s32 0, %v2814
      %v2844 = vsel %vm2842, %v2843, %v2814
      %v2845 = vmul.u32.u64.compose %v2844, 3817748708
      %v2846 = vextract.low.u32 %v2845
      %v2847 = vextract.high.u32 %v2845
      %v2848 = vshrl.u32 %v2847, 4
      %v2849 = vmul.u32 %v2848, 18
      %v2850 = vsub.s32 %v2844, %v2849
      %v2851 = vsub.s32 0, %v2850
      %v2852 = vsel %vm2842, %v2851, %v2850
      %vm2853 = vcmp.lt.s32.totalorder %v2815, 0
      %v2854 = vsub.s32 0, %v2815
      %v2855 = vsel %vm2853, %v2854, %v2815
      %v2856 = vmul.u32.u64.compose %v2855, 3817748708
      %v2857 = vextract.low.u32 %v2856
      %v2858 = vextract.high.u32 %v2856
      %v2859 = vshrl.u32 %v2858, 4
      %v2860 = vmul.u32 %v2859, 18
      %v2861 = vsub.s32 %v2855, %v2860
      %v2862 = vsub.s32 0, %v2861
      %v2863 = vsel %vm2853, %v2862, %v2861
      %vm2864 = vcmp.lt.s32.totalorder %v2816, 0
      %v2865 = vsub.s32 0, %v2816
      %v2866 = vsel %vm2864, %v2865, %v2816
      %v2867 = vmul.u32.u64.compose %v2866, 3817748708
      %v2868 = vextract.low.u32 %v2867
      %v2869 = vextract.high.u32 %v2867
      %v2870 = vshrl.u32 %v2869, 4
      %v2871 = vmul.u32 %v2870, 18
      %v2872 = vsub.s32 %v2866, %v2871
      %v2873 = vsub.s32 0, %v2872
      %v2874 = vsel %vm2864, %v2873, %v2872
      %vm2875 = vcmp.lt.s32.totalorder %v2817, 0
      %v2876 = vsub.s32 0, %v2817
      %v2877 = vsel %vm2875, %v2876, %v2817
      %v2878 = vmul.u32.u64.compose %v2877, 3817748708
      %v2879 = vextract.low.u32 %v2878
      %v2880 = vextract.high.u32 %v2878
      %v2881 = vshrl.u32 %v2880, 4
      %v2882 = vmul.u32 %v2881, 18
      %v2883 = vsub.s32 %v2877, %v2882
      %v2884 = vsub.s32 0, %v2883
      %v2885 = vsel %vm2875, %v2884, %v2883
      %vm2886 = vcmp.lt.s32.totalorder %v2818, 0
      %v2887 = vsub.s32 0, %v2818
      %v2888 = vsel %vm2886, %v2887, %v2818
      %v2889 = vmul.u32.u64.compose %v2888, 3817748708
      %v2890 = vextract.low.u32 %v2889
      %v2891 = vextract.high.u32 %v2889
      %v2892 = vshrl.u32 %v2891, 4
      %v2893 = vmul.u32 %v2892, 18
      %v2894 = vsub.s32 %v2888, %v2893
      %v2895 = vsub.s32 0, %v2894
      %v2896 = vsel %vm2886, %v2895, %v2894
      %vm2897 = vcmp.lt.s32.totalorder %v2819, 0
      %v2898 = vsub.s32 0, %v2819
      %v2899 = vsel %vm2897, %v2898, %v2819
      %v2900 = vmul.u32.u64.compose %v2899, 3817748708
      %v2901 = vextract.low.u32 %v2900
      %v2902 = vextract.high.u32 %v2900
      %v2903 = vshrl.u32 %v2902, 4
      %v2904 = vmul.u32 %v2903, 18
      %v2905 = vsub.s32 %v2899, %v2904
      %v2906 = vsub.s32 0, %v2905
      %v2907 = vsel %vm2897, %v2906, %v2905
      %vm2908 = vcmp.lt.s32.totalorder %v2820, 0
      %v2909 = vsub.s32 0, %v2820
      %v2910 = vsel %vm2908, %v2909, %v2820
      %v2911 = vmul.u32.u64.compose %v2910, 3817748708
      %v2912 = vextract.low.u32 %v2911
      %v2913 = vextract.high.u32 %v2911
      %v2914 = vshrl.u32 %v2913, 4
      %v2915 = vmul.u32 %v2914, 18
      %v2916 = vsub.s32 %v2910, %v2915
      %v2917 = vsub.s32 0, %v2916
      %v2918 = vsel %vm2908, %v2917, %v2916
      %vm2919 = vcmp.lt.s32.totalorder %v2821, 0
      %v2920 = vsub.s32 0, %v2821
      %v2921 = vsel %vm2919, %v2920, %v2821
      %v2922 = vmul.u32.u64.compose %v2921, 3817748708
      %v2923 = vextract.low.u32 %v2922
      %v2924 = vextract.high.u32 %v2922
      %v2925 = vshrl.u32 %v2924, 4
      %v2926 = vmul.u32 %v2925, 18
      %v2927 = vsub.s32 %v2921, %v2926
      %v2928 = vsub.s32 0, %v2927
      %v2929 = vsel %vm2919, %v2928, %v2927
      %vm2930 = vcmp.lt.s32.totalorder %v2822, 0
      %v2931 = vsub.s32 0, %v2822
      %v2932 = vsel %vm2930, %v2931, %v2822
      %v2933 = vmul.u32.u64.compose %v2932, 3817748708
      %v2934 = vextract.low.u32 %v2933
      %v2935 = vextract.high.u32 %v2933
      %v2936 = vshrl.u32 %v2935, 4
      %v2937 = vmul.u32 %v2936, 18
      %v2938 = vsub.s32 %v2932, %v2937
      %v2939 = vsub.s32 0, %v2938
      %v2940 = vsel %vm2930, %v2939, %v2938
      %vm2941 = vcmp.lt.s32.totalorder %v2823, 0
      %v2942 = vsub.s32 0, %v2823
      %v2943 = vsel %vm2941, %v2942, %v2823
      %v2944 = vmul.u32.u64.compose %v2943, 3817748708
      %v2945 = vextract.low.u32 %v2944
      %v2946 = vextract.high.u32 %v2944
      %v2947 = vshrl.u32 %v2946, 4
      %v2948 = vmul.u32 %v2947, 18
      %v2949 = vsub.s32 %v2943, %v2948
      %v2950 = vsub.s32 0, %v2949
      %v2951 = vsel %vm2941, %v2950, %v2949
      %vm2952 = vcmp.lt.s32.totalorder %v2824, 0
      %v2953 = vsub.s32 0, %v2824
      %v2954 = vsel %vm2952, %v2953, %v2824
      %v2955 = vmul.u32.u64.compose %v2954, 3817748708
      %v2956 = vextract.low.u32 %v2955
      %v2957 = vextract.high.u32 %v2955
      %v2958 = vshrl.u32 %v2957, 4
      %v2959 = vmul.u32 %v2958, 18
      %v2960 = vsub.s32 %v2954, %v2959
      %v2961 = vsub.s32 0, %v2960
      %v2962 = vsel %vm2952, %v2961, %v2960
      %vm2963 = vcmp.lt.s32.totalorder %v2825, 0
      %v2964 = vsub.s32 0, %v2825
      %v2965 = vsel %vm2963, %v2964, %v2825
      %v2966 = vmul.u32.u64.compose %v2965, 3817748708
      %v2967 = vextract.low.u32 %v2966
      %v2968 = vextract.high.u32 %v2966
      %v2969 = vshrl.u32 %v2968, 4
      %v2970 = vmul.u32 %v2969, 18
      %v2971 = vsub.s32 %v2965, %v2970
      %v2972 = vsub.s32 0, %v2971
      %v2973 = vsel %vm2963, %v2972, %v2971
      %vm2974 = vcmp.lt.s32.totalorder %v2826, 0
      %v2975 = vsub.s32 0, %v2826
      %v2976 = vsel %vm2974, %v2975, %v2826
      %v2977 = vmul.u32.u64.compose %v2976, 3817748708
      %v2978 = vextract.low.u32 %v2977
      %v2979 = vextract.high.u32 %v2977
      %v2980 = vshrl.u32 %v2979, 4
      %v2981 = vmul.u32 %v2980, 18
      %v2982 = vsub.s32 %v2976, %v2981
      %v2983 = vsub.s32 0, %v2982
      %v2984 = vsel %vm2974, %v2983, %v2982
      %vm2985 = vcmp.lt.s32.totalorder %v2827, 0
      %v2986 = vsub.s32 0, %v2827
      %v2987 = vsel %vm2985, %v2986, %v2827
      %v2988 = vmul.u32.u64.compose %v2987, 3817748708
      %v2989 = vextract.low.u32 %v2988
      %v2990 = vextract.high.u32 %v2988
      %v2991 = vshrl.u32 %v2990, 4
      %v2992 = vmul.u32 %v2991, 18
      %v2993 = vsub.s32 %v2987, %v2992
      %v2994 = vsub.s32 0, %v2993
      %v2995 = vsel %vm2985, %v2994, %v2993
      %vm2996 = vcmp.lt.s32.totalorder %v2828, 0
      %v2997 = vsub.s32 0, %v2828
      %v2998 = vsel %vm2996, %v2997, %v2828
      %v2999 = vmul.u32.u64.compose %v2998, 3817748708
      %v3000 = vextract.low.u32 %v2999
      %v3001 = vextract.high.u32 %v2999
      %v3002 = vshrl.u32 %v3001, 4
      %v3003 = vmul.u32 %v3002, 18
      %v3004 = vsub.s32 %v2998, %v3003
      %v3005 = vsub.s32 0, %v3004
      %v3006 = vsel %vm2996, %v3005, %v3004
      %vm3007 = vcmp.lt.s32.totalorder %v2829, 0
      %v3008 = vsub.s32 0, %v2829
      %v3009 = vsel %vm3007, %v3008, %v2829
      %v3010 = vmul.u32.u64.compose %v3009, 3817748708
      %v3011 = vextract.low.u32 %v3010
      %v3012 = vextract.high.u32 %v3010
      %v3013 = vshrl.u32 %v3012, 4
      %v3014 = vmul.u32 %v3013, 18
      %v3015 = vsub.s32 %v3009, %v3014
      %v3016 = vsub.s32 0, %v3015
      %v3017 = vsel %vm3007, %v3016, %v3015
      %vm3018 = vcmp.lt.s32.totalorder %v2830, 0
      %v3019 = vsub.s32 0, %v2830
      %v3020 = vsel %vm3018, %v3019, %v2830
      %v3021 = vmul.u32.u64.compose %v3020, 3817748708
      %v3022 = vextract.low.u32 %v3021
      %v3023 = vextract.high.u32 %v3021
      %v3024 = vshrl.u32 %v3023, 4
      %v3025 = vmul.u32 %v3024, 18
      %v3026 = vsub.s32 %v3020, %v3025
      %v3027 = vsub.s32 0, %v3026
      %v3028 = vsel %vm3018, %v3027, %v3026
      %vm3029 = vcmp.ne.s32.totalorder %v2841, 0
      %vm3030 = vcmp.ne.s32.totalorder %v2852, 0
      %vm3031 = vcmp.ne.s32.totalorder %v2863, 0
      %vm3032 = vcmp.ne.s32.totalorder %v2874, 0
      %vm3033 = vcmp.ne.s32.totalorder %v2885, 0
      %vm3034 = vcmp.ne.s32.totalorder %v2896, 0
      %vm3035 = vcmp.ne.s32.totalorder %v2907, 0
      %vm3036 = vcmp.ne.s32.totalorder %v2918, 0
      %vm3037 = vcmp.ne.s32.totalorder %v2929, 0
      %vm3038 = vcmp.ne.s32.totalorder %v2940, 0
      %vm3039 = vcmp.ne.s32.totalorder %v2951, 0
      %vm3040 = vcmp.ne.s32.totalorder %v2962, 0
      %vm3041 = vcmp.ne.s32.totalorder %v2973, 0
      %vm3042 = vcmp.ne.s32.totalorder %v2984, 0
      %vm3043 = vcmp.ne.s32.totalorder %v2995, 0
      %vm3044 = vcmp.ne.s32.totalorder %v3006, 0
      %vm3045 = vcmp.ne.s32.totalorder %v3017, 0
      %vm3046 = vcmp.ne.s32.totalorder %v3028, 0
      %vm3047 = vcmp.lt.s32.totalorder %v2841, 0
      %vm3048 = vcmp.lt.s32.totalorder %v2852, 0
      %vm3049 = vcmp.lt.s32.totalorder %v2863, 0
      %vm3050 = vcmp.lt.s32.totalorder %v2874, 0
      %vm3051 = vcmp.lt.s32.totalorder %v2885, 0
      %vm3052 = vcmp.lt.s32.totalorder %v2896, 0
      %vm3053 = vcmp.lt.s32.totalorder %v2907, 0
      %vm3054 = vcmp.lt.s32.totalorder %v2918, 0
      %vm3055 = vcmp.lt.s32.totalorder %v2929, 0
      %vm3056 = vcmp.lt.s32.totalorder %v2940, 0
      %vm3057 = vcmp.lt.s32.totalorder %v2951, 0
      %vm3058 = vcmp.lt.s32.totalorder %v2962, 0
      %vm3059 = vcmp.lt.s32.totalorder %v2973, 0
      %vm3060 = vcmp.lt.s32.totalorder %v2984, 0
      %vm3061 = vcmp.lt.s32.totalorder %v2995, 0
      %vm3062 = vcmp.lt.s32.totalorder %v3006, 0
      %vm3063 = vcmp.lt.s32.totalorder %v3017, 0
      %vm3064 = vcmp.lt.s32.totalorder %v3028, 0
      %vm3065 = vmand %vm3047, %vm3029
      %vm3066 = vmand %vm3048, %vm3030
      %vm3067 = vmand %vm3049, %vm3031
      %vm3068 = vmand %vm3050, %vm3032
      %vm3069 = vmand %vm3051, %vm3033
      %vm3070 = vmand %vm3052, %vm3034
      %vm3071 = vmand %vm3053, %vm3035
      %vm3072 = vmand %vm3054, %vm3036
      %vm3073 = vmand %vm3055, %vm3037
      %vm3074 = vmand %vm3056, %vm3038
      %vm3075 = vmand %vm3057, %vm3039
      %vm3076 = vmand %vm3058, %vm3040
      %vm3077 = vmand %vm3059, %vm3041
      %vm3078 = vmand %vm3060, %vm3042
      %vm3079 = vmand %vm3061, %vm3043
      %vm3080 = vmand %vm3062, %vm3044
      %vm3081 = vmand %vm3063, %vm3045
      %vm3082 = vmand %vm3064, %vm3046
      %v3083 = vadd.s32 %v2841, 18
      %v3084 = vadd.s32 %v2852, 18
      %v3085 = vadd.s32 %v2863, 18
      %v3086 = vadd.s32 %v2874, 18
      %v3087 = vadd.s32 %v2885, 18
      %v3088 = vadd.s32 %v2896, 18
      %v3089 = vadd.s32 %v2907, 18
      %v3090 = vadd.s32 %v2918, 18
      %v3091 = vadd.s32 %v2929, 18
      %v3092 = vadd.s32 %v2940, 18
      %v3093 = vadd.s32 %v2951, 18
      %v3094 = vadd.s32 %v2962, 18
      %v3095 = vadd.s32 %v2973, 18
      %v3096 = vadd.s32 %v2984, 18
      %v3097 = vadd.s32 %v2995, 18
      %v3098 = vadd.s32 %v3006, 18
      %v3099 = vadd.s32 %v3017, 18
      %v3100 = vadd.s32 %v3028, 18
      %v3101 = vsel %vm3065, %v3083, %v2841
      %v3102 = vsel %vm3066, %v3084, %v2852
      %v3103 = vsel %vm3067, %v3085, %v2863
      %v3104 = vsel %vm3068, %v3086, %v2874
      %v3105 = vsel %vm3069, %v3087, %v2885
      %v3106 = vsel %vm3070, %v3088, %v2896
      %v3107 = vsel %vm3071, %v3089, %v2907
      %v3108 = vsel %vm3072, %v3090, %v2918
      %v3109 = vsel %vm3073, %v3091, %v2929
      %v3110 = vsel %vm3074, %v3092, %v2940
      %v3111 = vsel %vm3075, %v3093, %v2951
      %v3112 = vsel %vm3076, %v3094, %v2962
      %v3113 = vsel %vm3077, %v3095, %v2973
      %v3114 = vsel %vm3078, %v3096, %v2984
      %v3115 = vsel %vm3079, %v3097, %v2995
      %v3116 = vsel %vm3080, %v3098, %v3006
      %v3117 = vsel %vm3081, %v3099, %v3017
      %v3118 = vsel %vm3082, %v3100, %v3028
      %vm3119 = vcmp.lt.s32.totalorder %v3101, 8
      %vm3120 = vcmp.lt.s32.totalorder %v3102, 8
      %vm3121 = vcmp.lt.s32.totalorder %v3103, 8
      %vm3122 = vcmp.lt.s32.totalorder %v3104, 8
      %vm3123 = vcmp.lt.s32.totalorder %v3105, 8
      %vm3124 = vcmp.lt.s32.totalorder %v3106, 8
      %vm3125 = vcmp.lt.s32.totalorder %v3107, 8
      %vm3126 = vcmp.lt.s32.totalorder %v3108, 8
      %vm3127 = vcmp.lt.s32.totalorder %v3109, 8
      %vm3128 = vcmp.lt.s32.totalorder %v3110, 8
      %vm3129 = vcmp.lt.s32.totalorder %v3111, 8
      %vm3130 = vcmp.lt.s32.totalorder %v3112, 8
      %vm3131 = vcmp.lt.s32.totalorder %v3113, 8
      %vm3132 = vcmp.lt.s32.totalorder %v3114, 8
      %vm3133 = vcmp.lt.s32.totalorder %v3115, 8
      %vm3134 = vcmp.lt.s32.totalorder %v3116, 8
      %vm3135 = vcmp.lt.s32.totalorder %v3117, 8
      %vm3136 = vcmp.lt.s32.totalorder %v3118, 8
      %v3137 = vsel %vm3119, 1, 0
      %v3138 = vsel %vm3120, 1, 0
      %v3139 = vsel %vm3121, 1, 0
      %v3140 = vsel %vm3122, 1, 0
      %v3141 = vsel %vm3123, 1, 0
      %v3142 = vsel %vm3124, 1, 0
      %v3143 = vsel %vm3125, 1, 0
      %v3144 = vsel %vm3126, 1, 0
      %v3145 = vsel %vm3127, 1, 0
      %v3146 = vsel %vm3128, 1, 0
      %v3147 = vsel %vm3129, 1, 0
      %v3148 = vsel %vm3130, 1, 0
      %v3149 = vsel %vm3131, 1, 0
      %v3150 = vsel %vm3132, 1, 0
      %v3151 = vsel %vm3133, 1, 0
      %v3152 = vsel %vm3134, 1, 0
      %v3153 = vsel %vm3135, 1, 0
      %v3154 = vsel %vm3136, 1, 0
      %v3155 = vcvt.s32.f32 %v3137
      %v3156 = vcvt.s32.f32 %v3138
      %v3157 = vcvt.s32.f32 %v3139
      %v3158 = vcvt.s32.f32 %v3140
      %v3159 = vcvt.s32.f32 %v3141
      %v3160 = vcvt.s32.f32 %v3142
      %v3161 = vcvt.s32.f32 %v3143
      %v3162 = vcvt.s32.f32 %v3144
      %v3163 = vcvt.s32.f32 %v3145
      %v3164 = vcvt.s32.f32 %v3146
      %v3165 = vcvt.s32.f32 %v3147
      %v3166 = vcvt.s32.f32 %v3148
      %v3167 = vcvt.s32.f32 %v3149
      %v3168 = vcvt.s32.f32 %v3150
      %v3169 = vcvt.s32.f32 %v3151
      %v3170 = vcvt.s32.f32 %v3152
      %v3171 = vcvt.s32.f32 %v3153
      %v3172 = vcvt.s32.f32 %v3154
      %v3173 = vpack.c.bf16 %v2795, %v2794
      %v3174 = vpack.c.bf16 %v2797, %v2796
      %v3175 = vpack.c.bf16 %v2799, %v2798
      %v3176 = vpack.c.bf16 %v2801, %v2800
      %v3177 = vpack.c.bf16 %v2803, %v2802
      %v3178 = vpack.c.bf16 %v2805, %v2804
      %v3179 = vpack.c.bf16 %v2807, %v2806
      %v3180 = vpack.c.bf16 %v2809, %v2808
      %v3181 = vpack.c.bf16 %v2811, %v2810
      %v3191 = vunpack.c.l.b16 %v3173
      %v3192 = vunpack.c.h.b16 %v3173
      %v3193 = vunpack.c.l.b16 %v3174
      %v3194 = vunpack.c.h.b16 %v3174
      %v3195 = vunpack.c.l.b16 %v3175
      %v3196 = vunpack.c.h.b16 %v3175
      %v3197 = vunpack.c.l.b16 %v3176
      %v3198 = vunpack.c.h.b16 %v3176
      %v3199 = vunpack.c.l.b16 %v3177
      %v3200 = vunpack.c.h.b16 %v3177
      %v3201 = vunpack.c.l.b16 %v3178
      %v3202 = vunpack.c.h.b16 %v3178
      %v3203 = vunpack.c.l.b16 %v3179
      %v3204 = vunpack.c.h.b16 %v3179
      %v3205 = vunpack.c.l.b16 %v3180
      %v3206 = vunpack.c.h.b16 %v3180
      %v3207 = vunpack.c.l.b16 %v3181
      %v3208 = vunpack.c.h.b16 %v3181
      %v3209 = vpack.c.b16 %v3191, %v3191
      %v3210 = vpack.c.b16 %v3192, %v3192
      %v3211 = vpack.c.b16 %v3193, %v3193
      %v3212 = vpack.c.b16 %v3194, %v3194
      %v3213 = vpack.c.b16 %v3195, %v3195
      %v3214 = vpack.c.b16 %v3196, %v3196
      %v3215 = vpack.c.b16 %v3197, %v3197
      %v3216 = vpack.c.b16 %v3198, %v3198
      %v3217 = vpack.c.b16 %v3199, %v3199
      %v3218 = vpack.c.b16 %v3200, %v3200
      %v3219 = vpack.c.b16 %v3201, %v3201
      %v3220 = vpack.c.b16 %v3202, %v3202
      %v3221 = vpack.c.b16 %v3203, %v3203
      %v3222 = vpack.c.b16 %v3204, %v3204
      %v3223 = vpack.c.b16 %v3205, %v3205
      %v3224 = vpack.c.b16 %v3206, %v3206
      %v3225 = vpack.c.b16 %v3207, %v3207
      %v3226 = vpack.c.b16 %v3208, %v3208
      %3245 = vst [vmem:[%s224] sm:$0xf] %v3209
      %3246 = vst [vmem:[%s224 + $0x4] sm:$0xf] %v3210
      %3247 = vst [vmem:[%s224 + $0x8] sm:$0xf] %v3211
      %3248 = vst [vmem:[%s224 + $0xc] sm:$0xf] %v3212
      %3249 = vst [vmem:[%s224 + $0x10] sm:$0xf] %v3213
      %3250 = vst [vmem:[%s224 + $0x14] sm:$0xf] %v3214
      %3251 = vst [vmem:[%s224 + $0x18] sm:$0xf] %v3215
      %3252 = vst [vmem:[%s224 + $0x1c] sm:$0xf] %v3216
      %3253 = vst [vmem:[%s224 + $0x20] sm:$0xf] %v3217
      %3254 = vst [vmem:[%s224 + $0x24] sm:$0xf] %v3218
      %3255 = vst [vmem:[%s224 + $0x28] sm:$0xf] %v3219
      %3256 = vst [vmem:[%s224 + $0x2c] sm:$0xf] %v3220
      %3257 = vst [vmem:[%s224 + $0x30] sm:$0xf] %v3221
      %3258 = vst [vmem:[%s224 + $0x34] sm:$0xf] %v3222
      %3259 = vst [vmem:[%s224 + $0x38] sm:$0xf] %v3223
      %3260 = vst [vmem:[%s224 + $0x3c] sm:$0xf] %v3224
      %3261 = vst [vmem:[%s224 + $0x40] sm:$0xf] %v3225
      %3262 = vst [vmem:[%s224 + $0x44] sm:$0xf] %v3226
      %v3263 = vmul.f32 %v2794, %v3155
      %v3264 = vmul.f32 %v2795, %v3156
      %v3265 = vmul.f32 %v2796, %v3157
      %v3266 = vmul.f32 %v2797, %v3158
      %v3267 = vmul.f32 %v2798, %v3159
      %v3268 = vmul.f32 %v2799, %v3160
      %v3269 = vmul.f32 %v2800, %v3161
      %v3270 = vmul.f32 %v2801, %v3162
      %v3271 = vmul.f32 %v2802, %v3163
      %v3272 = vmul.f32 %v2803, %v3164
      %v3273 = vmul.f32 %v2804, %v3165
      %v3274 = vmul.f32 %v2805, %v3166
      %v3275 = vmul.f32 %v2806, %v3167
      %v3276 = vmul.f32 %v2807, %v3168
      %v3277 = vmul.f32 %v2808, %v3169
      %v3278 = vmul.f32 %v2809, %v3170
      %v3279 = vmul.f32 %v2810, %v3171
      %v3280 = vmul.f32 %v2811, %v3172
      %v3281 = vadd.f32 %v3263, %v3264
      %v3282 = vadd.f32 %v3281, %v3265
      %v3283 = vadd.f32 %v3282, %v3266
      %v3284 = vadd.f32 %v3283, %v3267
      %v3285 = vadd.f32 %v3284, %v3268
      %v3286 = vadd.f32 %v3285, %v3269
      %v3287 = vadd.f32 %v3286, %v3270
      %v3288 = vadd.f32 %v3287, %v3271
      %v3289 = vadd.f32 %v3288, %v3272
      %v3290 = vadd.f32 %v3289, %v3273
      %v3291 = vadd.f32 %v3290, %v3274
      %v3292 = vadd.f32 %v3291, %v3275
      %v3293 = vadd.f32 %v3292, %v3276
      %v3294 = vadd.f32 %v3293, %v3277
      %v3295 = vadd.f32 %v3294, %v3278
      %v3296 = vadd.f32 %v3295, %v3279
      %v3297 = vadd.f32 %v3296, %v3280
      %v3298 = vrot.slane %v3297, 4
      %v3299 = vadd.f32 %v3297, %v3298
      %v3300 = vrot.slane %v3299, 2
      %v3301 = vadd.f32 %v3299, %v3300
      %v3302 = vrot.slane %v3301, 1
      %v3303 = vadd.f32 %v3301, %v3302
      %v3304 = vmul.f32 %v3263, %v2794
      %v3305 = vmul.f32 %v3264, %v2795
      %v3306 = vmul.f32 %v3265, %v2796
      %v3307 = vmul.f32 %v3266, %v2797
      %v3308 = vmul.f32 %v3267, %v2798
      %v3309 = vmul.f32 %v3268, %v2799
      %v3310 = vmul.f32 %v3269, %v2800
      %v3311 = vmul.f32 %v3270, %v2801
      %v3312 = vmul.f32 %v3271, %v2802
      %v3313 = vmul.f32 %v3272, %v2803
      %v3314 = vmul.f32 %v3273, %v2804
      %v3315 = vmul.f32 %v3274, %v2805
      %v3316 = vmul.f32 %v3275, %v2806
      %v3317 = vmul.f32 %v3276, %v2807
      %v3318 = vmul.f32 %v3277, %v2808
      %v3319 = vmul.f32 %v3278, %v2809
      %v3320 = vmul.f32 %v3279, %v2810
      %v3321 = vmul.f32 %v3280, %v2811
      %v3322 = vadd.f32 %v3304, %v3305
      %v3323 = vadd.f32 %v3322, %v3306
      %v3324 = vadd.f32 %v3323, %v3307
      %v3325 = vadd.f32 %v3324, %v3308
      %v3326 = vadd.f32 %v3325, %v3309
      %v3327 = vadd.f32 %v3326, %v3310
      %v3328 = vadd.f32 %v3327, %v3311
      %v3329 = vadd.f32 %v3328, %v3312
      %v3330 = vadd.f32 %v3329, %v3313
      %v3331 = vadd.f32 %v3330, %v3314
      %v3332 = vadd.f32 %v3331, %v3315
      %v3333 = vadd.f32 %v3332, %v3316
      %v3334 = vadd.f32 %v3333, %v3317
      %v3335 = vadd.f32 %v3334, %v3318
      %v3336 = vadd.f32 %v3335, %v3319
      %v3337 = vadd.f32 %v3336, %v3320
      %v3338 = vadd.f32 %v3337, %v3321
      %v3339 = vrot.slane %v3338, 4
      %v3340 = vadd.f32 %v3338, %v3339
      %v3341 = vrot.slane %v3340, 2
      %v3342 = vadd.f32 %v3340, %v3341
      %v3343 = vrot.slane %v3342, 1
      %v3344 = vadd.f32 %v3342, %v3343
      %vm3345 = vcmask 1040384
      %v3346 = vsel %vm3345, %v3303, %v3344
      %3347 = vst [vmem:[%s228] sm:$0x3] %v3346
      %p3348 = scmp.lt.s32.totalorder %s16, 1
      %s3349 = scalar_select %p3348, %s16, 1
      %s3350 = smul.addr %s3349, 18
      %s3351 = smul.addr %s3350, 4
      %s3352 = scalar_lea.vmem %s3, %s3351
      %p3353 = scmp.lt.s32.totalorder %s16, 1
      %s3354 = scalar_select %p3353, %s16, 1
      %s3355 = smul.addr %s3354, 2
      %s3356 = scalar_lea.vmem %s4, %s3355
      // Predicated region
      $region33: #{basic_block_forward.3} parent=31 // pred_check
        %p3357 = pneg %p107
      $region34: #{basic_block_forward.3} parent=31 // pred_check_branch
        %3359 = sbr.rel (%p3357) target = $region36
      $region35: #{basic_block_forward.3} parent=31 // pred_region
        _
      $region36: #{basic_block_forward.3} parent=31 // pred_fallthru
        _
      // Predicated region
      $region37: #{basic_block_forward.3} parent=31 // pred_check
        %p3360 = pneg %p133
      $region38: #{basic_block_forward.3} parent=31 // pred_check_branch
        %3362 = sbr.rel (%p3360) target = $region40
      $region39: #{basic_block_forward.3} parent=31 // pred_region
        _
      $region40: #{basic_block_forward.3} parent=31 // pred_fallthru
        _
    $region32: #{basic_block_forward.3} parent=5 // pred_fallthru
      _
    %p3363 = scmp.le.s32.totalorder 2, %s11
    // Predicated region
    $region41: #{basic_block_forward.3} parent=5 // pred_check
      %p3364 = pneg %p3363
    $region42: #{basic_block_forward.3} parent=5 // pred_check_branch
      %3366 = sbr.rel (%p3364) target = $region44
    $region43: #{basic_block_forward.3} parent=5 // pred_region
      %s3367 = ssub.s32 %s11, 2
      // Predicated region
      $region45: #{basic_block_forward.3} parent=43 // pred_check
        %p3368 = pneg %p113
      $region46: #{basic_block_forward.3} parent=43 // pred_check_branch
        %3370 = sbr.rel (%p3368) target = $region48
      $region47: #{basic_block_forward.3} parent=43 // pred_region
        %p3371 = scmp.lt.s32.totalorder %s17, 1
        %s3372 = scalar_select %p3371, %s17, 1
        %s3373 = smul.addr %s3372, 18
        %s3374 = smul.addr %s3373, 4
        %s3375 = scalar_lea.vmem %s3, %s3374
      $region48: #{basic_block_forward.3} parent=43 // pred_fallthru
        _
      // Predicated region
      $region49: #{basic_block_forward.3} parent=43 // pred_check
        %p3376 = pneg %p139
      $region50: #{basic_block_forward.3} parent=43 // pred_check_branch
        %3378 = sbr.rel (%p3376) target = $region52
      $region51: #{basic_block_forward.3} parent=43 // pred_region
        %p3379 = scmp.lt.s32.totalorder %s17, 1
        %s3380 = scalar_select %p3379, %s17, 1
        %s3381 = smul.addr %s3380, 2
        %s3382 = scalar_lea.vmem %s4, %s3381
      $region52: #{basic_block_forward.3} parent=43 // pred_fallthru
        _
    $region44: #{basic_block_forward.3} parent=5 // pred_fallthru
      _
  $region6: #{basic_block_forward.3} parent=0 // loop_footer
    %s15 = sadd.s32 1, %s11
  $region7: #{basic_block_forward.3} parent=0 // loop_footer_branch
    %10 = sbr.rel target = $region3
  $region8: #{basic_block_forward.3} parent=0 // loop_exit
    _

// kernel: basic_block_forward.5
$region0: #{basic_block_forward.5}
  #allocation0 [shape = 'u32[]', space=smem, size = 0x4, offset = 0x4, fixed_abs, tag = 'smem constant byte address 0x4 - core index']
  #allocation1 [shape = 'u32[144,128]{1,0:T(1,128)}', space=vmem, size = 0x12000, scoped, tag = 'internal scratch']
  %s0 = inlined_call_operand.vmem [shape: bf16[160,128], index: 0, kind: input, shape index: {}]
  %s1 = inlined_call_operand.vmem [shape: bf16[160,128], index: 1, kind: input, shape index: {}]
  %s2 = inlined_call_operand.vmem [shape: f32[8,128], index: 2, kind: input, shape index: {}]
  %s3 = inlined_call_operand.vmem [shape: f32[160,128], index: 3, kind: output, shape index: {}]
  %s4 = sld [smem:[#allocation0]]
  $region22: #{basic_block_forward.5} parent=0
    _
  %s6 = ssub.s32 1, %s4
  %s7 = scalar_select 0, %s6, %s4
  // Predicated region
  $region2: #{basic_block_forward.5} parent=0 // pred_check
    _
  $region3: #{basic_block_forward.5} parent=0 // pred_check_branch
    %9 = sbr.rel (0) target = $region5
  $region4: #{basic_block_forward.5} parent=0 // pred_region
    _
  $region5: #{basic_block_forward.5} parent=0 // pred_fallthru
    _
  // Predicated region
  $region6: #{basic_block_forward.5} parent=0 // pred_check
    _
  $region7: #{basic_block_forward.5} parent=0 // pred_check_branch
    %11 = sbr.rel (0) target = $region9
  $region8: #{basic_block_forward.5} parent=0 // pred_region
    _
  $region9: #{basic_block_forward.5} parent=0 // pred_fallthru
    _
  // Predicated region
  $region10: #{basic_block_forward.5} parent=0 // pred_check
    _
  $region11: #{basic_block_forward.5} parent=0 // pred_check_branch
    %13 = sbr.rel (0) target = $region13
  $region12: #{basic_block_forward.5} parent=0 // pred_region
    _
  $region13: #{basic_block_forward.5} parent=0 // pred_fallthru
    _
  %v14 = vld [vmem:[%s0] sm:$0xf]
  %v15 = vld [vmem:[%s0 + $0x4] sm:$0xf]
  %v16 = vld [vmem:[%s0 + $0x8] sm:$0xf]
  %v17 = vld [vmem:[%s0 + $0xc] sm:$0xf]
  %v18 = vld [vmem:[%s0 + $0x10] sm:$0xf]
  %v19 = vld [vmem:[%s0 + $0x14] sm:$0xf]
  %v20 = vld [vmem:[%s0 + $0x18] sm:$0xf]
  %v21 = vld [vmem:[%s0 + $0x1c] sm:$0xf]
  %v22 = vld [vmem:[%s0 + $0x20] sm:$0xf]
  %v23 = vld [vmem:[%s0 + $0x24] sm:$0xf]
  %v24 = vld [vmem:[%s0 + $0x28] sm:$0xf]
  %v25 = vld [vmem:[%s0 + $0x2c] sm:$0xf]
  %v26 = vld [vmem:[%s0 + $0x30] sm:$0xf]
  %v27 = vld [vmem:[%s0 + $0x34] sm:$0xf]
  %v28 = vld [vmem:[%s0 + $0x38] sm:$0xf]
  %v29 = vld [vmem:[%s0 + $0x3c] sm:$0xf]
  %v30 = vld [vmem:[%s0 + $0x40] sm:$0xf]
  %v31 = vld [vmem:[%s0 + $0x44] sm:$0xf]
  %v32 = vld [vmem:[%s0 + $0x48] sm:$0xf]
  %v33 = vld [vmem:[%s0 + $0x4c] sm:$0xf]
  %v34 = vunpack.c.l.bf16 %v14
  %v35 = vunpack.c.l.bf16 %v15
  %v36 = vunpack.c.l.bf16 %v16
  %v37 = vunpack.c.l.bf16 %v17
  %v38 = vunpack.c.l.bf16 %v18
  %v39 = vunpack.c.l.bf16 %v19
  %v40 = vunpack.c.l.bf16 %v20
  %v41 = vunpack.c.l.bf16 %v21
  %v42 = vunpack.c.l.bf16 %v22
  %v43 = vunpack.c.l.bf16 %v23
  %v44 = vunpack.c.l.bf16 %v24
  %v45 = vunpack.c.l.bf16 %v25
  %v46 = vunpack.c.l.bf16 %v26
  %v47 = vunpack.c.l.bf16 %v27
  %v48 = vunpack.c.l.bf16 %v28
  %v49 = vunpack.c.l.bf16 %v29
  %v50 = vunpack.c.l.bf16 %v30
  %v51 = vunpack.c.l.bf16 %v31
  %v52 = vunpack.c.l.bf16 %v32
  %v53 = vunpack.c.l.bf16 %v33
  %v54 = vld [vmem:[%s1] sm:$0xf]
  %v55 = vld [vmem:[%s1 + $0x4] sm:$0xf]
  %v56 = vld [vmem:[%s1 + $0x8] sm:$0xf]
  %v57 = vld [vmem:[%s1 + $0xc] sm:$0xf]
  %v58 = vld [vmem:[%s1 + $0x10] sm:$0xf]
  %v59 = vld [vmem:[%s1 + $0x14] sm:$0xf]
  %v60 = vld [vmem:[%s1 + $0x18] sm:$0xf]
  %v61 = vld [vmem:[%s1 + $0x1c] sm:$0xf]
  %v62 = vld [vmem:[%s1 + $0x20] sm:$0xf]
  %v63 = vld [vmem:[%s1 + $0x24] sm:$0xf]
  %v64 = vld [vmem:[%s1 + $0x28] sm:$0xf]
  %v65 = vld [vmem:[%s1 + $0x2c] sm:$0xf]
  %v66 = vld [vmem:[%s1 + $0x30] sm:$0xf]
  %v67 = vld [vmem:[%s1 + $0x34] sm:$0xf]
  %v68 = vld [vmem:[%s1 + $0x38] sm:$0xf]
  %v69 = vld [vmem:[%s1 + $0x3c] sm:$0xf]
  %v70 = vld [vmem:[%s1 + $0x40] sm:$0xf]
  %v71 = vld [vmem:[%s1 + $0x44] sm:$0xf]
  %v72 = vld [vmem:[%s1 + $0x48] sm:$0xf]
  %v73 = vld [vmem:[%s1 + $0x4c] sm:$0xf]
  %v74 = vunpack.c.l.bf16 %v54
  %v75 = vunpack.c.l.bf16 %v55
  %v76 = vunpack.c.l.bf16 %v56
  %v77 = vunpack.c.l.bf16 %v57
  %v78 = vunpack.c.l.bf16 %v58
  %v79 = vunpack.c.l.bf16 %v59
  %v80 = vunpack.c.l.bf16 %v60
  %v81 = vunpack.c.l.bf16 %v61
  %v82 = vunpack.c.l.bf16 %v62
  %v83 = vunpack.c.l.bf16 %v63
  %v84 = vunpack.c.l.bf16 %v64
  %v85 = vunpack.c.l.bf16 %v65
  %v86 = vunpack.c.l.bf16 %v66
  %v87 = vunpack.c.l.bf16 %v67
  %v88 = vunpack.c.l.bf16 %v68
  %v89 = vunpack.c.l.bf16 %v69
  %v90 = vunpack.c.l.bf16 %v70
  %v91 = vunpack.c.l.bf16 %v71
  %v92 = vunpack.c.l.bf16 %v72
  %v93 = vunpack.c.l.bf16 %v73
  %v94 = vld [vmem:[%s2] sm:$0x1]
  %v95 = vlaneseq
  %v96 = vshrl.u32 %v95, 7
  %v97 = vsub.s32 0, %v96
  %v98 = vrot.slane %v94, %v97
  %v99 = vmul.f32 %v34, %v98
  %v100 = vmul.f32 %v35, %v98
  %v101 = vmul.f32 %v36, %v98
  %v102 = vmul.f32 %v37, %v98
  %v103 = vmul.f32 %v38, %v98
  %v104 = vmul.f32 %v39, %v98
  %v105 = vmul.f32 %v40, %v98
  %v106 = vmul.f32 %v41, %v98
  %v107 = vmul.f32 %v42, %v98
  %v108 = vmul.f32 %v43, %v98
  %v109 = vmul.f32 %v44, %v98
  %v110 = vmul.f32 %v45, %v98
  %v111 = vmul.f32 %v46, %v98
  %v112 = vmul.f32 %v47, %v98
  %v113 = vmul.f32 %v48, %v98
  %v114 = vmul.f32 %v49, %v98
  %v115 = vmul.f32 %v50, %v98
  %v116 = vmul.f32 %v51, %v98
  %v117 = vmul.f32 %v52, %v98
  %v118 = vmul.f32 %v53, %v98
  %v119 = vld [vmem:[%s2 + $0x1] sm:$0x1]
  %v120 = vlaneseq
  %v121 = vshrl.u32 %v120, 7
  %v122 = vsub.s32 0, %v121
  %v123 = vrot.slane %v119, %v122
  %v124 = vadd.f32 %v99, %v123
  %v125 = vadd.f32 %v100, %v123
  %v126 = vadd.f32 %v101, %v123
  %v127 = vadd.f32 %v102, %v123
  %v128 = vadd.f32 %v103, %v123
  %v129 = vadd.f32 %v104, %v123
  %v130 = vadd.f32 %v105, %v123
  %v131 = vadd.f32 %v106, %v123
  %v132 = vadd.f32 %v107, %v123
  %v133 = vadd.f32 %v108, %v123
  %v134 = vadd.f32 %v109, %v123
  %v135 = vadd.f32 %v110, %v123
  %v136 = vadd.f32 %v111, %v123
  %v137 = vadd.f32 %v112, %v123
  %v138 = vadd.f32 %v113, %v123
  %v139 = vadd.f32 %v114, %v123
  %v140 = vadd.f32 %v115, %v123
  %v141 = vadd.f32 %v116, %v123
  %v142 = vadd.f32 %v117, %v123
  %v143 = vadd.f32 %v118, %v123
  %v144 = vld [vmem:[%s2 + $0x2] sm:$0x1]
  %v145 = vlaneseq
  %v146 = vshrl.u32 %v145, 7
  %v147 = vsub.s32 0, %v146
  %v148 = vrot.slane %v144, %v147
  %v149 = vmul.f32 %v74, %v148
  %v150 = vmul.f32 %v75, %v148
  %v151 = vmul.f32 %v76, %v148
  %v152 = vmul.f32 %v77, %v148
  %v153 = vmul.f32 %v78, %v148
  %v154 = vmul.f32 %v79, %v148
  %v155 = vmul.f32 %v80, %v148
  %v156 = vmul.f32 %v81, %v148
  %v157 = vmul.f32 %v82, %v148
  %v158 = vmul.f32 %v83, %v148
  %v159 = vmul.f32 %v84, %v148
  %v160 = vmul.f32 %v85, %v148
  %v161 = vmul.f32 %v86, %v148
  %v162 = vmul.f32 %v87, %v148
  %v163 = vmul.f32 %v88, %v148
  %v164 = vmul.f32 %v89, %v148
  %v165 = vmul.f32 %v90, %v148
  %v166 = vmul.f32 %v91, %v148
  %v167 = vmul.f32 %v92, %v148
  %v168 = vmul.f32 %v93, %v148
  %v169 = vadd.f32 %v124, %v149
  %v170 = vadd.f32 %v125, %v150
  %v171 = vadd.f32 %v126, %v151
  %v172 = vadd.f32 %v127, %v152
  %v173 = vadd.f32 %v128, %v153
  %v174 = vadd.f32 %v129, %v154
  %v175 = vadd.f32 %v130, %v155
  %v176 = vadd.f32 %v131, %v156
  %v177 = vadd.f32 %v132, %v157
  %v178 = vadd.f32 %v133, %v158
  %v179 = vadd.f32 %v134, %v159
  %v180 = vadd.f32 %v135, %v160
  %v181 = vadd.f32 %v136, %v161
  %v182 = vadd.f32 %v137, %v162
  %v183 = vadd.f32 %v138, %v163
  %v184 = vadd.f32 %v139, %v164
  %v185 = vadd.f32 %v140, %v165
  %v186 = vadd.f32 %v141, %v166
  %v187 = vadd.f32 %v142, %v167
  %v188 = vadd.f32 %v143, %v168
  %v189 = vld [vmem:[%s2 + $0x3] sm:$0x1]
  %v190 = vlaneseq
  %v191 = vshrl.u32 %v190, 7
  %v192 = vsub.s32 0, %v191
  %v193 = vrot.slane %v189, %v192
  %v194 = vadd.f32 %v169, %v193
  %v195 = vadd.f32 %v170, %v193
  %v196 = vadd.f32 %v171, %v193
  %v197 = vadd.f32 %v172, %v193
  %v198 = vadd.f32 %v173, %v193
  %v199 = vadd.f32 %v174, %v193
  %v200 = vadd.f32 %v175, %v193
  %v201 = vadd.f32 %v176, %v193
  %v202 = vadd.f32 %v177, %v193
  %v203 = vadd.f32 %v178, %v193
  %v204 = vadd.f32 %v179, %v193
  %v205 = vadd.f32 %v180, %v193
  %v206 = vadd.f32 %v181, %v193
  %v207 = vadd.f32 %v182, %v193
  %v208 = vadd.f32 %v183, %v193
  %v209 = vadd.f32 %v184, %v193
  %v210 = vadd.f32 %v185, %v193
  %v211 = vadd.f32 %v186, %v193
  %v212 = vadd.f32 %v187, %v193
  %v213 = vadd.f32 %v188, %v193
  %v214 = vmax.f32 %v194, 0.0
  %v215 = vmax.f32 %v195, 0.0
  %v216 = vmax.f32 %v196, 0.0
  %v217 = vmax.f32 %v197, 0.0
  %v218 = vmax.f32 %v198, 0.0
  %v219 = vmax.f32 %v199, 0.0
  %v220 = vmax.f32 %v200, 0.0
  %v221 = vmax.f32 %v201, 0.0
  %v222 = vmax.f32 %v202, 0.0
  %v223 = vmax.f32 %v203, 0.0
  %v224 = vmax.f32 %v204, 0.0
  %v225 = vmax.f32 %v205, 0.0
  %v226 = vmax.f32 %v206, 0.0
  %v227 = vmax.f32 %v207, 0.0
  %v228 = vmax.f32 %v208, 0.0
  %v229 = vmax.f32 %v209, 0.0
  %v230 = vmax.f32 %v210, 0.0
  %v231 = vmax.f32 %v211, 0.0
  %v232 = vmax.f32 %v212, 0.0
  %v233 = vmax.f32 %v213, 0.0
  %234 = vst [vmem:[%s3] sm:$0xff] %v214
  %235 = vst [vmem:[%s3 + $0x8] sm:$0xff] %v215
  %236 = vst [vmem:[%s3 + $0x10] sm:$0xff] %v216
  %237 = vst [vmem:[%s3 + $0x18] sm:$0xff] %v217
  %238 = vst [vmem:[%s3 + $0x20] sm:$0xff] %v218
  %239 = vst [vmem:[%s3 + $0x28] sm:$0xff] %v219
  %240 = vst [vmem:[%s3 + $0x30] sm:$0xff] %v220
  %241 = vst [vmem:[%s3 + $0x38] sm:$0xff] %v221
  %242 = vst [vmem:[%s3 + $0x40] sm:$0xff] %v222
  %243 = vst [vmem:[%s3 + $0x48] sm:$0xff] %v223
  %244 = vst [vmem:[%s3 + $0x50] sm:$0xff] %v224
  %245 = vst [vmem:[%s3 + $0x58] sm:$0xff] %v225
  %246 = vst [vmem:[%s3 + $0x60] sm:$0xff] %v226
  %247 = vst [vmem:[%s3 + $0x68] sm:$0xff] %v227
  %248 = vst [vmem:[%s3 + $0x70] sm:$0xff] %v228
  %249 = vst [vmem:[%s3 + $0x78] sm:$0xff] %v229
  %250 = vst [vmem:[%s3 + $0x80] sm:$0xff] %v230
  %251 = vst [vmem:[%s3 + $0x88] sm:$0xff] %v231
  %252 = vst [vmem:[%s3 + $0x90] sm:$0xff] %v232
  %253 = vst [vmem:[%s3 + $0x98] sm:$0xff] %v233
  // Predicated region
  $region14: #{basic_block_forward.5} parent=0 // pred_check
    _
  $region15: #{basic_block_forward.5} parent=0 // pred_check_branch
    %255 = sbr.rel (0) target = $region17
  $region16: #{basic_block_forward.5} parent=0 // pred_region
    _
  $region17: #{basic_block_forward.5} parent=0 // pred_fallthru
    _
  // Predicated region
  $region18: #{basic_block_forward.5} parent=0 // pred_check
    _
  $region19: #{basic_block_forward.5} parent=0 // pred_check_branch
    %257 = sbr.rel (0) target = $region21
  $region20: #{basic_block_forward.5} parent=0 // pred_region
    _
  $region21: #{basic_block_forward.5} parent=0 // pred_fallthru
    _

// kernel: basic_block_forward.4
$region0: #{basic_block_forward.4}
  #allocation0 [shape = 'u32[]', space=smem, size = 0x4, offset = 0x4, fixed_abs, tag = 'smem constant byte address 0x4 - core index']
  #allocation1 [shape = 'u32[144,128]{1,0:T(1,128)}', space=vmem, size = 0x12000, scoped, tag = 'internal scratch']
  %s0 = inlined_call_operand.vmem [shape: bf16[2,112,128], index: 0, kind: input, shape index: {}]
  %s1 = inlined_call_operand.vmem [shape: bf16[9,128,128], index: 1, kind: input, shape index: {}]
  %s2 = inlined_call_operand.vmem [shape: bf16[2,80,128], index: 2, kind: input, shape index: {}]
  %s3 = inlined_call_operand.vmem [shape: bf16[128,128], index: 3, kind: input, shape index: {}]
  %s4 = inlined_call_operand.vmem [shape: bf16[2,80,128], index: 4, kind: output, shape index: {0}]
  %s5 = inlined_call_operand.vmem [shape: f32[2,2,128], index: 5, kind: output, shape index: {1}]
  %s6 = inlined_call_operand.vmem [shape: bf16[2,80,128], index: 6, kind: output, shape index: {2}]
  %s7 = inlined_call_operand.vmem [shape: f32[2,2,128], index: 7, kind: output, shape index: {3}]
  %8 = xla_tuple %s4, %s5, %s6, %s7
  %s9 = sld [smem:[#allocation0]]
  $region73: #{basic_block_forward.4} parent=0
    _
  %s11 = ssub.s32 1, %s9
  %s12 = scalar_select 0, %s11, %s9
  loop: start=0, step=1, limit=4
  $region2: #{basic_block_forward.4} parent=0 // loop_pre_header
    _
  $region3: #{basic_block_forward.4} parent=0 // loop_header
    %s14 = sphi 0, %s18
    %p15 = scmp.ge.s32.totalorder %s14, 4
    %s24 = sphi 0, %s26
    %s27 = sphi 0, %s24
    %s28 = sphi 0, %s27
    %s44 = sphi 0, %s28
    %s48 = sphi 0, %s48
    %s50 = sphi 0, %s48
    %s51 = sphi 0, %s50
    %s65 = sphi 0, %s51
    %s71 = sphi 0, %s73
    %s74 = sphi 0, %s71
    %s75 = sphi 0, %s74
    %s91 = sphi 0, %s75
    %s95 = sphi 0, %s95
    %s97 = sphi 0, %s95
    %s98 = sphi 0, %s97
    %s112 = sphi 0, %s98
    %s118 = sphi 0, %s120
    %s121 = sphi 0, %s118
    %s122 = sphi 0, %s121
    %s138 = sphi 0, %s122
    %s144 = sphi 0, %s146
    %s147 = sphi 0, %s144
    %s148 = sphi 0, %s147
    %s164 = sphi 0, %s148
    %s170 = sphi 0, %s172
    %s173 = sphi 0, %s170
    %s174 = sphi 0, %s173
    %s190 = sphi 0, %s174
    %s196 = sphi 0, %s198
    %s199 = sphi 0, %s196
    %s200 = sphi 0, %s199
    %s216 = sphi 0, %s200
  $region4: #{basic_block_forward.4} parent=0 // loop_header_branch
    %17 = sbr.rel (%p15) target = $region8
  $region5: #{basic_block_forward.4} parent=0 // loop_body
    %s19 = ssub.s32 %s14, 1
    %s20 = ssub.s32 %s14, 2
    %s21 = sadd.s32 %s14, 1
    %s22 = ssub.s32 %s14, %s21
    %p23 = scmp.eq.s32.totalorder %s22, 0
    %s25 = sadd.s32 %s24, 1
    %s26 = scalar_select %p23, %s24, %s25
    %p29 = pneg %p23
    %p30 = scmp.eq.s32.totalorder %s14, 1
    %p31 = por %p29, %p30
    %p32 = scmp.ne.s32.totalorder %s24, %s27
    %p33 = scmp.eq.s32.totalorder %s14, 0
    %p34 = por %p32, %p33
    %p35 = scmp.ne.s32.totalorder %s24, %s27
    %p36 = scmp.eq.s32.totalorder %s19, 1
    %p37 = por %p35, %p36
    %p38 = scmp.ne.s32.totalorder %s27, %s28
    %p39 = scmp.eq.s32.totalorder %s19, 0
    %p40 = por %p38, %p39
    %p41 = scmp.ne.s32.totalorder %s27, %s28
    %p42 = scmp.eq.s32.totalorder %s20, 1
    %p43 = por %p41, %p42
    %p45 = scmp.ne.s32.totalorder %s28, %s44
    %p46 = scmp.eq.s32.totalorder %s20, 0
    %p47 = por %p45, %p46
    %s49 = sadd.s32 %s48, 1
    %p52 = scmp.eq.s32.totalorder %s14, 1
    %p53 = scmp.ne.s32.totalorder %s48, %s50
    %p54 = scmp.eq.s32.totalorder %s14, 0
    %p55 = por %p53, %p54
    %p56 = scmp.ne.s32.totalorder %s48, %s50
    %p57 = scmp.eq.s32.totalorder %s19, 1
    %p58 = por %p56, %p57
    %p59 = scmp.ne.s32.totalorder %s50, %s51
    %p60 = scmp.eq.s32.totalorder %s19, 0
    %p61 = por %p59, %p60
    %p62 = scmp.ne.s32.totalorder %s50, %s51
    %p63 = scmp.eq.s32.totalorder %s20, 1
    %p64 = por %p62, %p63
    %p66 = scmp.ne.s32.totalorder %s51, %s65
    %p67 = scmp.eq.s32.totalorder %s20, 0
    %p68 = por %p66, %p67
    %s69 = ssub.s32 %s14, %s21
    %p70 = scmp.eq.s32.totalorder %s69, 0
    %s72 = sadd.s32 %s71, 1
    %s73 = scalar_select %p70, %s71, %s72
    %p76 = pneg %p70
    %p77 = scmp.eq.s32.totalorder %s14, 1
    %p78 = por %p76, %p77
    %p79 = scmp.ne.s32.totalorder %s71, %s74
    %p80 = scmp.eq.s32.totalorder %s14, 0
    %p81 = por %p79, %p80
    %p82 = scmp.ne.s32.totalorder %s71, %s74
    %p83 = scmp.eq.s32.totalorder %s19, 1
    %p84 = por %p82, %p83
    %p85 = scmp.ne.s32.totalorder %s74, %s75
    %p86 = scmp.eq.s32.totalorder %s19, 0
    %p87 = por %p85, %p86
    %p88 = scmp.ne.s32.totalorder %s74, %s75
    %p89 = scmp.eq.s32.totalorder %s20, 1
    %p90 = por %p88, %p89
    %p92 = scmp.ne.s32.totalorder %s75, %s91
    %p93 = scmp.eq.s32.totalorder %s20, 0
    %p94 = por %p92, %p93
    %s96 = sadd.s32 %s95, 1
    %p99 = scmp.eq.s32.totalorder %s14, 1
    %p100 = scmp.ne.s32.totalorder %s95, %s97
    %p101 = scmp.eq.s32.totalorder %s14, 0
    %p102 = por %p100, %p101
    %p103 = scmp.ne.s32.totalorder %s95, %s97
    %p104 = scmp.eq.s32.totalorder %s19, 1
    %p105 = por %p103, %p104
    %p106 = scmp.ne.s32.totalorder %s97, %s98
    %p107 = scmp.eq.s32.totalorder %s19, 0
    %p108 = por %p106, %p107
    %p109 = scmp.ne.s32.totalorder %s97, %s98
    %p110 = scmp.eq.s32.totalorder %s20, 1
    %p111 = por %p109, %p110
    %p113 = scmp.ne.s32.totalorder %s98, %s112
    %p114 = scmp.eq.s32.totalorder %s20, 0
    %p115 = por %p113, %p114
    %s116 = ssub.s32 %s14, %s21
    %p117 = scmp.eq.s32.totalorder %s116, 0
    %s119 = sadd.s32 %s118, 1
    %s120 = scalar_select %p117, %s118, %s119
    %p123 = pneg %p117
    %p124 = scmp.eq.s32.totalorder %s14, 1
    %p125 = por %p123, %p124
    %p126 = scmp.ne.s32.totalorder %s118, %s121
    %p127 = scmp.eq.s32.totalorder %s14, 0
    %p128 = por %p126, %p127
    %p129 = scmp.ne.s32.totalorder %s118, %s121
    %p130 = scmp.eq.s32.totalorder %s19, 1
    %p131 = por %p129, %p130
    %p132 = scmp.ne.s32.totalorder %s121, %s122
    %p133 = scmp.eq.s32.totalorder %s19, 0
    %p134 = por %p132, %p133
    %p135 = scmp.ne.s32.totalorder %s121, %s122
    %p136 = scmp.eq.s32.totalorder %s20, 1
    %p137 = por %p135, %p136
    %p139 = scmp.ne.s32.totalorder %s122, %s138
    %p140 = scmp.eq.s32.totalorder %s20, 0
    %p141 = por %p139, %p140
    %s142 = ssub.s32 %s14, %s21
    %p143 = scmp.eq.s32.totalorder %s142, 0
    %s145 = sadd.s32 %s144, 1
    %s146 = scalar_select %p143, %s144, %s145
    %p149 = pneg %p143
    %p150 = scmp.eq.s32.totalorder %s14, 1
    %p151 = por %p149, %p150
    %p152 = scmp.ne.s32.totalorder %s144, %s147
    %p153 = scmp.eq.s32.totalorder %s14, 0
    %p154 = por %p152, %p153
    %p155 = scmp.ne.s32.totalorder %s144, %s147
    %p156 = scmp.eq.s32.totalorder %s19, 1
    %p157 = por %p155, %p156
    %p158 = scmp.ne.s32.totalorder %s147, %s148
    %p159 = scmp.eq.s32.totalorder %s19, 0
    %p160 = por %p158, %p159
    %p161 = scmp.ne.s32.totalorder %s147, %s148
    %p162 = scmp.eq.s32.totalorder %s20, 1
    %p163 = por %p161, %p162
    %p165 = scmp.ne.s32.totalorder %s148, %s164
    %p166 = scmp.eq.s32.totalorder %s20, 0
    %p167 = por %p165, %p166
    %s168 = ssub.s32 %s14, %s21
    %p169 = scmp.eq.s32.totalorder %s168, 0
    %s171 = sadd.s32 %s170, 1
    %s172 = scalar_select %p169, %s170, %s171
    %p175 = pneg %p169
    %p176 = scmp.eq.s32.totalorder %s14, 1
    %p177 = por %p175, %p176
    %p178 = scmp.ne.s32.totalorder %s170, %s173
    %p179 = scmp.eq.s32.totalorder %s14, 0
    %p180 = por %p178, %p179
    %p181 = scmp.ne.s32.totalorder %s170, %s173
    %p182 = scmp.eq.s32.totalorder %s19, 1
    %p183 = por %p181, %p182
    %p184 = scmp.ne.s32.totalorder %s173, %s174
    %p185 = scmp.eq.s32.totalorder %s19, 0
    %p186 = por %p184, %p185
    %p187 = scmp.ne.s32.totalorder %s173, %s174
    %p188 = scmp.eq.s32.totalorder %s20, 1
    %p189 = por %p187, %p188
    %p191 = scmp.ne.s32.totalorder %s174, %s190
    %p192 = scmp.eq.s32.totalorder %s20, 0
    %p193 = por %p191, %p192
    %s194 = ssub.s32 %s14, %s21
    %p195 = scmp.eq.s32.totalorder %s194, 0
    %s197 = sadd.s32 %s196, 1
    %s198 = scalar_select %p195, %s196, %s197
    %p201 = pneg %p195
    %p202 = scmp.eq.s32.totalorder %s14, 1
    %p203 = por %p201, %p202
    %p204 = scmp.ne.s32.totalorder %s196, %s199
    %p205 = scmp.eq.s32.totalorder %s14, 0
    %p206 = por %p204, %p205
    %p207 = scmp.ne.s32.totalorder %s196, %s199
    %p208 = scmp.eq.s32.totalorder %s19, 1
    %p209 = por %p207, %p208
    %p210 = scmp.ne.s32.totalorder %s199, %s200
    %p211 = scmp.eq.s32.totalorder %s19, 0
    %p212 = por %p210, %p211
    %p213 = scmp.ne.s32.totalorder %s199, %s200
    %p214 = scmp.eq.s32.totalorder %s20, 1
    %p215 = por %p213, %p214
    %p217 = scmp.ne.s32.totalorder %s200, %s216
    %p218 = scmp.eq.s32.totalorder %s20, 0
    %p219 = por %p217, %p218
    %p220 = scmp.le.s32.totalorder 1, %s14
    %p221 = scmp.lt.s32.totalorder %s14, 3
    %p222 = pnand %p220, %p221
    %p223 = pneg %p222
    // Predicated region
    $region9: #{basic_block_forward.4} parent=5 // pred_check
      _
    $region10: #{basic_block_forward.4} parent=5 // pred_check_branch
      %225 = sbr.rel (%p222) target = $region12
    $region11: #{basic_block_forward.4} parent=5 // pred_region
      %s226 = ssub.s32 %s14, 1
      // Predicated region
      $region13: #{basic_block_forward.4} parent=11 // pred_check
        %p227 = pneg %p61
      $region14: #{basic_block_forward.4} parent=11 // pred_check_branch
        %229 = sbr.rel (%p227) target = $region16
      $region15: #{basic_block_forward.4} parent=11 // pred_region
        _
      $region16: #{basic_block_forward.4} parent=11 // pred_fallthru
        _
      // Predicated region
      $region17: #{basic_block_forward.4} parent=11 // pred_check
        %p230 = pneg %p108
      $region18: #{basic_block_forward.4} parent=11 // pred_check_branch
        %232 = sbr.rel (%p230) target = $region20
      $region19: #{basic_block_forward.4} parent=11 // pred_region
        _
      $region20: #{basic_block_forward.4} parent=11 // pred_fallthru
        _
    $region12: #{basic_block_forward.4} parent=5 // pred_fallthru
      _
    %p233 = scmp.lt.s32.totalorder %s14, 2
    // Predicated region
    $region21: #{basic_block_forward.4} parent=5 // pred_check
      %p234 = pneg %p233
    $region22: #{basic_block_forward.4} parent=5 // pred_check_branch
      %236 = sbr.rel (%p234) target = $region24
    $region23: #{basic_block_forward.4} parent=5 // pred_region
      // Predicated region
      $region25: #{basic_block_forward.4} parent=23 // pred_check
        %p237 = pneg %p34
      $region26: #{basic_block_forward.4} parent=23 // pred_check_branch
        %239 = sbr.rel (%p237) target = $region28
      $region27: #{basic_block_forward.4} parent=23 // pred_region
        %p240 = scmp.lt.s32.totalorder %s14, 1
        %s241 = scalar_select %p240, %s14, 1
        %s242 = smul.addr %s241, 14
        %s243 = smul.addr %s242, 4
        %s244 = scalar_lea.vmem %s0, %s243
      $region28: #{basic_block_forward.4} parent=23 // pred_fallthru
        _
      // Predicated region
      $region29: #{basic_block_forward.4} parent=23 // pred_check
        %p245 = pneg %p81
      $region30: #{basic_block_forward.4} parent=23 // pred_check_branch
        %247 = sbr.rel (%p245) target = $region32
      $region31: #{basic_block_forward.4} parent=23 // pred_region
        %p248 = scmp.lt.s32.totalorder %s14, 1
        %s249 = scalar_select %p248, %s14, 1
        %s250 = smul.addr %s249, 10
        %s251 = smul.addr %s250, 4
        %s252 = scalar_lea.vmem %s2, %s251
      $region32: #{basic_block_forward.4} parent=23 // pred_fallthru
        _
    $region24: #{basic_block_forward.4} parent=5 // pred_fallthru
      _
    %p253 = scmp.le.s32.totalorder 1, %s14
    %p254 = scmp.lt.s32.totalorder %s14, 3
    %p255 = pnand %p253, %p254
    %p256 = pneg %p255
    // Predicated region
    $region33: #{basic_block_forward.4} parent=5 // pred_check
      _
    $region34: #{basic_block_forward.4} parent=5 // pred_check_branch
      %258 = sbr.rel (%p255) target = $region36
    $region35: #{basic_block_forward.4} parent=5 // pred_region
      %s259 = ssub.s32 %s14, 1
      %p260 = scmp.lt.s32.totalorder %s19, 1
      %s261 = scalar_select %p260, %s19, 1
      %s262 = smul.addr %s261, 14
      %s263 = smul.addr %s262, 4
      %s264 = scalar_lea.vmem %s0, %s263
      %p265 = pneg %p40
      %p266 = pneg %p37
      %p267 = pneg %p61
      %p268 = pneg %p58
      %p269 = scmp.lt.s32.totalorder %s19, 1
      %s270 = scalar_select %p269, %s19, 1
      %s271 = smul.addr %s270, 10
      %s272 = smul.addr %s271, 4
      %s273 = scalar_lea.vmem %s2, %s272
      %p274 = pneg %p87
      %p275 = pneg %p84
      %p276 = pneg %p108
      %p277 = pneg %p105
      %p278 = pneg %p134
      %p279 = pneg %p131
      %p280 = scmp.lt.s32.totalorder %s19, 1
      %s281 = scalar_select %p280, %s19, 1
      %s282 = smul.addr %s281, 10
      %s283 = smul.addr %s282, 4
      %s284 = scalar_lea.vmem %s4, %s283
      %p285 = pneg %p160
      %p286 = pneg %p157
      %p287 = scmp.lt.s32.totalorder %s19, 1
      %s288 = scalar_select %p287, %s19, 1
      %s289 = smul.addr %s288, 2
      %s290 = scalar_lea.vmem %s5, %s289
      %p291 = pneg %p186
      %p292 = pneg %p183
      %p293 = scmp.lt.s32.totalorder %s19, 1
      %s294 = scalar_select %p293, %s19, 1
      %s295 = smul.addr %s294, 10
      %s296 = smul.addr %s295, 4
      %s297 = scalar_lea.vmem %s6, %s296
      %p298 = pneg %p212
      %p299 = pneg %p209
      %p300 = scmp.lt.s32.totalorder %s19, 1
      %s301 = scalar_select %p300, %s19, 1
      %s302 = smul.addr %s301, 2
      %s303 = scalar_lea.vmem %s7, %s302
      %p304 = scmp.lt.s32.totalorder %s19, 1
      %s305 = scalar_select %p304, %s19, 1
      %s306 = smul.addr %s305, 14
      %s307 = smul.addr %s306, 4
      %s308 = scalar_lea.vmem %s0, %s307
      %p309 = scmp.lt.s32.totalorder %s19, 1
      %s310 = scalar_select %p309, %s19, 1
      %s311 = smul.addr %s310, 10
      %s312 = smul.addr %s311, 4
      %s313 = scalar_lea.vmem %s2, %s312
      %p314 = scmp.lt.s32.totalorder %s19, 1
      %s315 = scalar_select %p314, %s19, 1
      %s316 = smul.addr %s315, 10
      %s317 = smul.addr %s316, 4
      %s318 = scalar_lea.vmem %s4, %s317
      %p319 = scmp.lt.s32.totalorder %s19, 1
      %s320 = scalar_select %p319, %s19, 1
      %s321 = smul.addr %s320, 2
      %s322 = scalar_lea.vmem %s5, %s321
      %p323 = scmp.lt.s32.totalorder %s19, 1
      %s324 = scalar_select %p323, %s19, 1
      %s325 = smul.addr %s324, 10
      %s326 = smul.addr %s325, 4
      %s327 = scalar_lea.vmem %s6, %s326
      %p328 = scmp.lt.s32.totalorder %s19, 1
      %s329 = scalar_select %p328, %s19, 1
      %s330 = smul.addr %s329, 2
      %s331 = scalar_lea.vmem %s7, %s330
      %v333 = vld [vmem:[%s308] sm:$0xf]
      %v334 = vld [vmem:[%s308 + $0x4] sm:$0xf]
      %v335 = vld [vmem:[%s308 + $0x8] sm:$0xf]
      %v336 = vld [vmem:[%s308 + $0xc] sm:$0xf]
      %v337 = vld [vmem:[%s308 + $0x10] sm:$0xf]
      %v338 = vld [vmem:[%s308 + $0x14] sm:$0xf]
      %v339 = vld [vmem:[%s308 + $0x18] sm:$0xf]
      %v340 = vld [vmem:[%s308 + $0x1c] sm:$0xf]
      %v341 = vld [vmem:[%s308 + $0x20] sm:$0xf]
      %v342 = vld [vmem:[%s308 + $0x24] sm:$0xf]
      %v343 = vld [vmem:[%s1] sm:$0xf]
      %v344 = vld [vmem:[%s1 + $0x4] sm:$0xf]
      %v345 = vld [vmem:[%s1 + $0x8] sm:$0xf]
      %v346 = vld [vmem:[%s1 + $0xc] sm:$0xf]
      %v347 = vld [vmem:[%s1 + $0x10] sm:$0xf]
      %v348 = vld [vmem:[%s1 + $0x14] sm:$0xf]
      %v349 = vld [vmem:[%s1 + $0x18] sm:$0xf]
      %v350 = vld [vmem:[%s1 + $0x1c] sm:$0xf]
      %v351 = vld [vmem:[%s1 + $0x20] sm:$0xf]
      %v352 = vld [vmem:[%s1 + $0x24] sm:$0xf]
      %v353 = vld [vmem:[%s1 + $0x28] sm:$0xf]
      %v354 = vld [vmem:[%s1 + $0x2c] sm:$0xf]
      %v355 = vld [vmem:[%s1 + $0x30] sm:$0xf]
      %v356 = vld [vmem:[%s1 + $0x34] sm:$0xf]
      %v357 = vld [vmem:[%s1 + $0x38] sm:$0xf]
      %v358 = vld [vmem:[%s1 + $0x3c] sm:$0xf]
      %v359 = vld [vmem:[%s308 + $0x28] sm:$0x1]
      %s360 = scalar_lea.vmem %s1, 64
      %v361 = vld [vmem:[%s360] sm:$0xf]
      %v362 = vld [vmem:[%s360 + $0x4] sm:$0xf]
      %v363 = vld [vmem:[%s360 + $0x8] sm:$0xf]
      %v364 = vld [vmem:[%s360 + $0xc] sm:$0xf]
      %v365 = vld [vmem:[%s360 + $0x10] sm:$0xf]
      %v366 = vld [vmem:[%s360 + $0x14] sm:$0xf]
      %v367 = vld [vmem:[%s360 + $0x18] sm:$0xf]
      %v368 = vld [vmem:[%s360 + $0x1c] sm:$0xf]
      %v369 = vld [vmem:[%s360 + $0x20] sm:$0xf]
      %v370 = vld [vmem:[%s360 + $0x24] sm:$0xf]
      %v371 = vld [vmem:[%s360 + $0x28] sm:$0xf]
      %v372 = vld [vmem:[%s360 + $0x2c] sm:$0xf]
      %v373 = vld [vmem:[%s360 + $0x30] sm:$0xf]
      %v374 = vld [vmem:[%s360 + $0x34] sm:$0xf]
      %v375 = vld [vmem:[%s360 + $0x38] sm:$0xf]
      %v376 = vld [vmem:[%s360 + $0x3c] sm:$0xf]
      %v388 = vunpack.c.l.b16 %v333
      %v389 = vunpack.c.l.b16 %v334
      %v390 = vunpack.c.l.b16 %v335
      %v391 = vunpack.c.l.b16 %v336
      %v392 = vunpack.c.l.b16 %v337
      %v393 = vunpack.c.l.b16 %v338
      %v394 = vunpack.c.l.b16 %v339
      %v395 = vunpack.c.l.b16 %v340
      %v396 = vunpack.c.l.b16 %v341
      %v397 = vunpack.c.l.b16 %v342
      %v398 = vunpack.c.l.b16 %v359
      %v399 = vpack.c.b16 %v389, %v388
      %v400 = vpack.c.b16 %v391, %v390
      %v401 = vpack.c.b16 %v393, %v392
      %v402 = vpack.c.b16 %v395, %v394
      %v403 = vpack.c.b16 %v397, %v396
      %v404 = vpack.c.b16 %v398, %v398
      %vm405 = vsmask.f32 7424
      %v407 = vshrl.u32 %v399, 16
      %v409 = vshll.u32 %v399, 16
      %v411 = vrot.slane %v409, 1
      %v412 = vor.u32 %v407, %v411
      %v414 = vshll.u32 %v400, 16
      %v416 = vrot.slane %v414, 1
      %v417 = vsel %vm405, %v412, %v416
      %v418 = vshrl.u32 %v400, 16
      %v420 = vor.u32 %v418, %v416
      %v422 = vshll.u32 %v401, 16
      %v424 = vrot.slane %v422, 1
      %v425 = vsel %vm405, %v420, %v424
      %v426 = vshrl.u32 %v401, 16
      %v428 = vor.u32 %v426, %v424
      %v430 = vshll.u32 %v402, 16
      %v432 = vrot.slane %v430, 1
      %v433 = vsel %vm405, %v428, %v432
      %v434 = vshrl.u32 %v402, 16
      %v436 = vor.u32 %v434, %v432
      %v438 = vshll.u32 %v403, 16
      %v440 = vrot.slane %v438, 1
      %v441 = vsel %vm405, %v436, %v440
      %v442 = vshrl.u32 %v403, 16
      %v444 = vor.u32 %v442, %v440
      %v446 = vshll.u32 %v404, 16
      %v448 = vrot.slane %v446, 1
      %v449 = vsel %vm405, %v444, %v448
      %v471 = vunpack.c.l.b16 %v361
      %v472 = vunpack.c.l.b16 %v362
      %v473 = vunpack.c.l.b16 %v363
      %v474 = vunpack.c.l.b16 %v364
      %v475 = vunpack.c.l.b16 %v365
      %v476 = vunpack.c.l.b16 %v366
      %v477 = vunpack.c.l.b16 %v367
      %v478 = vunpack.c.l.b16 %v368
      %v479 = vunpack.c.l.b16 %v369
      %v480 = vunpack.c.l.b16 %v370
      %v481 = vunpack.c.l.b16 %v371
      %v482 = vunpack.c.l.b16 %v372
      %v483 = vunpack.c.l.b16 %v373
      %v484 = vunpack.c.l.b16 %v374
      %v485 = vunpack.c.l.b16 %v375
      %v486 = vunpack.c.l.b16 %v376
      %v487 = vpack.c.b16 %v472, %v471
      %v488 = vpack.c.b16 %v474, %v473
      %v489 = vpack.c.b16 %v476, %v475
      %v490 = vpack.c.b16 %v478, %v477
      %v491 = vpack.c.b16 %v480, %v479
      %v492 = vpack.c.b16 %v482, %v481
      %v493 = vpack.c.b16 %v484, %v483
      %v494 = vpack.c.b16 %v486, %v485
      %503 = vmatprep.subr.bf16.mxu0 0
      %504 = vmatpush1.bf16.msra.mxu0 %v487
      %505 = vmatprep.subr.bf16.mxu0 0
      %506 = vmatpush1.bf16.msra.mxu0 %v488
      %507 = vmatprep.subr.bf16.mxu0 0
      %508 = vmatpush1.bf16.msra.mxu0 %v489
      %509 = vmatprep.subr.bf16.mxu0 0
      %510 = vmatpush1.bf16.msra.mxu0 %v490
      %511 = vmatprep.subr.bf16.mxu0 0
      %512 = vmatpush1.bf16.msra.mxu0 %v491
      %513 = vmatprep.subr.bf16.mxu0 0
      %514 = vmatpush1.bf16.msra.mxu0 %v492
      %515 = vmatprep.subr.bf16.mxu0 0
      %516 = vmatpush1.bf16.msra.mxu0 %v493
      %517 = vmatprep.subr.bf16.mxu0 0
      %518 = vmatpush1.bf16.msra.mxu0 %v494
      %519 = vmatprep.subr.bf16.mxu0 0
      %520 = vmatpush1.bf16.msra.mxu0 0
      %521 = vmatprep.subr.bf16.mxu0 0
      %522 = vmatpush1.bf16.msra.mxu0 0
      %523 = vmatprep.subr.bf16.mxu0 0
      %524 = vmatpush1.bf16.msra.mxu0 0
      %525 = vmatprep.subr.bf16.mxu0 0
      %526 = vmatpush1.bf16.msra.mxu0 0
      %527 = vmatprep.subr.bf16.mxu0 0
      %528 = vmatpush1.bf16.msra.mxu0 0
      %529 = vmatprep.subr.bf16.mxu0 0
      %530 = vmatpush1.bf16.msra.mxu0 0
      %531 = vmatprep.subr.bf16.mxu0 0
      %532 = vmatpush1.bf16.msra.mxu0 0
      %533 = vmatprep.subr.bf16.mxu0 0
      %534 = vmatpush1.bf16.msra.mxu0 0
      %535 = vmatprep.mubr.bf16.mxu0 0
      %536 = vmatmul.mubr.bf16.gmra.mrb[0].mxu0 %v417
      %v537 = vpop.f32.mrb[0].mxu0
      %v538 = vadd.f32 0.0, %v537
      %v539 = vpop.f32.mrb[0].mxu0
      %v540 = vpop.f32.mrb[0].mxu0
      %v541 = vadd.f32 0.0, %v540
      %v542 = vpop.f32.mrb[0].mxu0
      %543 = vmatprep.mubr.bf16.mxu0 0
      %544 = vmatmul.mubr.bf16.gmra.mrb[0].mxu0 %v425
      %v545 = vpop.f32.mrb[0].mxu0
      %v546 = vadd.f32 0.0, %v545
      %v547 = vpop.f32.mrb[0].mxu0
      %v548 = vpop.f32.mrb[0].mxu0
      %v549 = vadd.f32 0.0, %v548
      %v550 = vpop.f32.mrb[0].mxu0
      %551 = vmatprep.mubr.bf16.mxu0 0
      %552 = vmatmul.mubr.bf16.gmra.mrb[0].mxu0 %v433
      %v553 = vpop.f32.mrb[0].mxu0
      %v554 = vadd.f32 0.0, %v553
      %v555 = vpop.f32.mrb[0].mxu0
      %v556 = vpop.f32.mrb[0].mxu0
      %v557 = vadd.f32 0.0, %v556
      %v558 = vpop.f32.mrb[0].mxu0
      %559 = vmatprep.mubr.bf16.mxu0 0
      %560 = vmatmul.mubr.bf16.gmra.mrb[0].mxu0 %v441
      %v561 = vpop.f32.mrb[0].mxu0
      %v562 = vadd.f32 0.0, %v561
      %v563 = vpop.f32.mrb[0].mxu0
      %v564 = vpop.f32.mrb[0].mxu0
      %v565 = vadd.f32 0.0, %v564
      %v566 = vpop.f32.mrb[0].mxu0
      %567 = vmatprep.mubr.bf16.mxu0 0
      %568 = vmatmul.mubr.bf16.gmra.mrb[0].mxu0 %v449
      %v569 = vpop.f32.mrb[0].mxu0
      %v570 = vadd.f32 0.0, %v569
      %v571 = vpop.f32.mrb[0].mxu0
      %v572 = vpop.f32.mrb[0].mxu0
      %v573 = vadd.f32 0.0, %v572
      %v574 = vpop.f32.mrb[0].mxu0
      %575 = vdwg.mxu0
      %v597 = vunpack.c.l.b16 %v343
      %v598 = vunpack.c.l.b16 %v344
      %v599 = vunpack.c.l.b16 %v345
      %v600 = vunpack.c.l.b16 %v346
      %v601 = vunpack.c.l.b16 %v347
      %v602 = vunpack.c.l.b16 %v348
      %v603 = vunpack.c.l.b16 %v349
      %v604 = vunpack.c.l.b16 %v350
      %v605 = vunpack.c.l.b16 %v351
      %v606 = vunpack.c.l.b16 %v352
      %v607 = vunpack.c.l.b16 %v353
      %v608 = vunpack.c.l.b16 %v354
      %v609 = vunpack.c.l.b16 %v355
      %v610 = vunpack.c.l.b16 %v356
      %v611 = vunpack.c.l.b16 %v357
      %v612 = vunpack.c.l.b16 %v358
      %v613 = vpack.c.b16 %v598, %v597
      %v614 = vpack.c.b16 %v600, %v599
      %v615 = vpack.c.b16 %v602, %v601
      %v616 = vpack.c.b16 %v604, %v603
      %v617 = vpack.c.b16 %v606, %v605
      %v618 = vpack.c.b16 %v608, %v607
      %v619 = vpack.c.b16 %v610, %v609
      %v620 = vpack.c.b16 %v612, %v611
      %629 = vmatprep.subr.bf16.mxu0 0
      %630 = vmatpush1.bf16.msra.mxu0 %v613
      %631 = vmatprep.subr.bf16.mxu0 0
      %632 = vmatpush1.bf16.msra.mxu0 %v614
      %633 = vmatprep.subr.bf16.mxu0 0
      %634 = vmatpush1.bf16.msra.mxu0 %v615
      %635 = vmatprep.subr.bf16.mxu0 0
      %636 = vmatpush1.bf16.msra.mxu0 %v616
      %637 = vmatprep.subr.bf16.mxu0 0
      %638 = vmatpush1.bf16.msra.mxu0 %v617
      %639 = vmatprep.subr.bf16.mxu0 0
      %640 = vmatpush1.bf16.msra.mxu0 %v618
      %641 = vmatprep.subr.bf16.mxu0 0
      %642 = vmatpush1.bf16.msra.mxu0 %v619
      %643 = vmatprep.subr.bf16.mxu0 0
      %644 = vmatpush1.bf16.msra.mxu0 %v620
      %645 = vmatprep.subr.bf16.mxu0 0
      %646 = vmatpush1.bf16.msra.mxu0 0
      %647 = vmatprep.subr.bf16.mxu0 0
      %648 = vmatpush1.bf16.msra.mxu0 0
      %649 = vmatprep.subr.bf16.mxu0 0
      %650 = vmatpush1.bf16.msra.mxu0 0
      %651 = vmatprep.subr.bf16.mxu0 0
      %652 = vmatpush1.bf16.msra.mxu0 0
      %653 = vmatprep.subr.bf16.mxu0 0
      %654 = vmatpush1.bf16.msra.mxu0 0
      %655 = vmatprep.subr.bf16.mxu0 0
      %656 = vmatpush1.bf16.msra.mxu0 0
      %657 = vmatprep.subr.bf16.mxu0 0
      %658 = vmatpush1.bf16.msra.mxu0 0
      %659 = vmatprep.subr.bf16.mxu0 0
      %660 = vmatpush1.bf16.msra.mxu0 0
      %661 = vmatprep.mubr.bf16.mxu0 0
      %662 = vmatmul.mubr.bf16.gmra.mrb[0].mxu0 %v399
      %v663 = vpop.f32.mrb[0].mxu0
      %v664 = vadd.f32 %v538, %v663
      %v665 = vpop.f32.mrb[0].mxu0
      %v666 = vpop.f32.mrb[0].mxu0
      %v667 = vadd.f32 %v541, %v666
      %v668 = vpop.f32.mrb[0].mxu0
      %669 = vmatprep.mubr.bf16.mxu0 0
      %670 = vmatmul.mubr.bf16.gmra.mrb[0].mxu0 %v400
      %v671 = vpop.f32.mrb[0].mxu0
      %v672 = vadd.f32 %v546, %v671
      %v673 = vpop.f32.mrb[0].mxu0
      %v674 = vpop.f32.mrb[0].mxu0
      %v675 = vadd.f32 %v549, %v674
      %v676 = vpop.f32.mrb[0].mxu0
      %677 = vmatprep.mubr.bf16.mxu0 0
      %678 = vmatmul.mubr.bf16.gmra.mrb[0].mxu0 %v401
      %v679 = vpop.f32.mrb[0].mxu0
      %v680 = vadd.f32 %v554, %v679
      %v681 = vpop.f32.mrb[0].mxu0
      %v682 = vpop.f32.mrb[0].mxu0
      %v683 = vadd.f32 %v557, %v682
      %v684 = vpop.f32.mrb[0].mxu0
      %685 = vmatprep.mubr.bf16.mxu0 0
      %686 = vmatmul.mubr.bf16.gmra.mrb[0].mxu0 %v402
      %v687 = vpop.f32.mrb[0].mxu0
      %v688 = vadd.f32 %v562, %v687
      %v689 = vpop.f32.mrb[0].mxu0
      %v690 = vpop.f32.mrb[0].mxu0
      %v691 = vadd.f32 %v565, %v690
      %v692 = vpop.f32.mrb[0].mxu0
      %693 = vmatprep.mubr.bf16.mxu0 0
      %694 = vmatmul.mubr.bf16.gmra.mrb[0].mxu0 %v403
      %v695 = vpop.f32.mrb[0].mxu0
      %v696 = vadd.f32 %v570, %v695
      %v697 = vpop.f32.mrb[0].mxu0
      %v698 = vpop.f32.mrb[0].mxu0
      %v699 = vadd.f32 %v573, %v698
      %v700 = vpop.f32.mrb[0].mxu0
      %701 = vdwg.mxu0
      %v702 = vld [vmem:[%s308] sm:$0xe]
      %s703 = scalar_lea.vmem %s1, 128
      %v704 = vld [vmem:[%s703] sm:$0xf]
      %v705 = vld [vmem:[%s703 + $0x4] sm:$0xf]
      %v706 = vld [vmem:[%s703 + $0x8] sm:$0xf]
      %v707 = vld [vmem:[%s703 + $0xc] sm:$0xf]
      %v708 = vld [vmem:[%s703 + $0x10] sm:$0xf]
      %v709 = vld [vmem:[%s703 + $0x14] sm:$0xf]
      %v710 = vld [vmem:[%s703 + $0x18] sm:$0xf]
      %v711 = vld [vmem:[%s703 + $0x1c] sm:$0xf]
      %v712 = vld [vmem:[%s703 + $0x20] sm:$0xf]
      %v713 = vld [vmem:[%s703 + $0x24] sm:$0xf]
      %v714 = vld [vmem:[%s703 + $0x28] sm:$0xf]
      %v715 = vld [vmem:[%s703 + $0x2c] sm:$0xf]
      %v716 = vld [vmem:[%s703 + $0x30] sm:$0xf]
      %v717 = vld [vmem:[%s703 + $0x34] sm:$0xf]
      %v718 = vld [vmem:[%s703 + $0x38] sm:$0xf]
      %v719 = vld [vmem:[%s703 + $0x3c] sm:$0xf]
      %v721 = vunpack.c.l.b16 %v702
      %v722 = vpack.c.b16 %v389, %v721
      %vm723 = vcmask 1046528
      %v724 = vrot.slane %v722, 1
      %v725 = vrot.slane %v400, 1
      %v726 = vsel %vm723, %v724, %v725
      %v727 = vrot.slane %v401, 1
      %v728 = vsel %vm723, %v725, %v727
      %v729 = vrot.slane %v402, 1
      %v730 = vsel %vm723, %v727, %v729
      %v731 = vrot.slane %v403, 1
      %v732 = vsel %vm723, %v729, %v731
      %v733 = vrot.slane %v404, 1
      %v734 = vsel %vm723, %v731, %v733
      %v756 = vunpack.c.l.b16 %v704
      %v757 = vunpack.c.l.b16 %v705
      %v758 = vunpack.c.l.b16 %v706
      %v759 = vunpack.c.l.b16 %v707
      %v760 = vunpack.c.l.b16 %v708
      %v761 = vunpack.c.l.b16 %v709
      %v762 = vunpack.c.l.b16 %v710
      %v763 = vunpack.c.l.b16 %v711
      %v764 = vunpack.c.l.b16 %v712
      %v765 = vunpack.c.l.b16 %v713
      %v766 = vunpack.c.l.b16 %v714
      %v767 = vunpack.c.l.b16 %v715
      %v768 = vunpack.c.l.b16 %v716
      %v769 = vunpack.c.l.b16 %v717
      %v770 = vunpack.c.l.b16 %v718
      %v771 = vunpack.c.l.b16 %v719
      %v772 = vpack.c.b16 %v757, %v756
      %v773 = vpack.c.b16 %v759, %v758
      %v774 = vpack.c.b16 %v761, %v760
      %v775 = vpack.c.b16 %v763, %v762
      %v776 = vpack.c.b16 %v765, %v764
      %v777 = vpack.c.b16 %v767, %v766
      %v778 = vpack.c.b16 %v769, %v768
      %v779 = vpack.c.b16 %v771, %v770
      %788 = vmatprep.subr.bf16.mxu0 0
      %789 = vmatpush1.bf16.msra.mxu0 %v772
      %790 = vmatprep.subr.bf16.mxu0 0
      %791 = vmatpush1.bf16.msra.mxu0 %v773
      %792 = vmatprep.subr.bf16.mxu0 0
      %793 = vmatpush1.bf16.msra.mxu0 %v774
      %794 = vmatprep.subr.bf16.mxu0 0
      %795 = vmatpush1.bf16.msra.mxu0 %v775
      %796 = vmatprep.subr.bf16.mxu0 0
      %797 = vmatpush1.bf16.msra.mxu0 %v776
      %798 = vmatprep.subr.bf16.mxu0 0
      %799 = vmatpush1.bf16.msra.mxu0 %v777
      %800 = vmatprep.subr.bf16.mxu0 0
      %801 = vmatpush1.bf16.msra.mxu0 %v778
      %802 = vmatprep.subr.bf16.mxu0 0
      %803 = vmatpush1.bf16.msra.mxu0 %v779
      %804 = vmatprep.subr.bf16.mxu0 0
      %805 = vmatpush1.bf16.msra.mxu0 0
      %806 = vmatprep.subr.bf16.mxu0 0
      %807 = vmatpush1.bf16.msra.mxu0 0
      %808 = vmatprep.subr.bf16.mxu0 0
      %809 = vmatpush1.bf16.msra.mxu0 0
      %810 = vmatprep.subr.bf16.mxu0 0
      %811 = vmatpush1.bf16.msra.mxu0 0
      %812 = vmatprep.subr.bf16.mxu0 0
      %813 = vmatpush1.bf16.msra.mxu0 0
      %814 = vmatprep.subr.bf16.mxu0 0
      %815 = vmatpush1.bf16.msra.mxu0 0
      %816 = vmatprep.subr.bf16.mxu0 0
      %817 = vmatpush1.bf16.msra.mxu0 0
      %818 = vmatprep.subr.bf16.mxu0 0
      %819 = vmatpush1.bf16.msra.mxu0 0
      %820 = vmatprep.mubr.bf16.mxu0 0
      %821 = vmatmul.mubr.bf16.gmra.mrb[0].mxu0 %v726
      %v822 = vpop.f32.mrb[0].mxu0
      %v823 = vadd.f32 0.0, %v822
      %v824 = vpop.f32.mrb[0].mxu0
      %v825 = vpop.f32.mrb[0].mxu0
      %v826 = vadd.f32 0.0, %v825
      %v827 = vpop.f32.mrb[0].mxu0
      %828 = vmatprep.mubr.bf16.mxu0 0
      %829 = vmatmul.mubr.bf16.gmra.mrb[0].mxu0 %v728
      %v830 = vpop.f32.mrb[0].mxu0
      %v831 = vadd.f32 0.0, %v830
      %v832 = vpop.f32.mrb[0].mxu0
      %v833 = vpop.f32.mrb[0].mxu0
      %v834 = vadd.f32 0.0, %v833
      %v835 = vpop.f32.mrb[0].mxu0
      %836 = vmatprep.mubr.bf16.mxu0 0
      %837 = vmatmul.mubr.bf16.gmra.mrb[0].mxu0 %v730
      %v838 = vpop.f32.mrb[0].mxu0
      %v839 = vadd.f32 0.0, %v838
      %v840 = vpop.f32.mrb[0].mxu0
      %v841 = vpop.f32.mrb[0].mxu0
      %v842 = vadd.f32 0.0, %v841
      %v843 = vpop.f32.mrb[0].mxu0
      %844 = vmatprep.mubr.bf16.mxu0 0
      %845 = vmatmul.mubr.bf16.gmra.mrb[0].mxu0 %v732
      %v846 = vpop.f32.mrb[0].mxu0
      %v847 = vadd.f32 0.0, %v846
      %v848 = vpop.f32.mrb[0].mxu0
      %v849 = vpop.f32.mrb[0].mxu0
      %v850 = vadd.f32 0.0, %v849
      %v851 = vpop.f32.mrb[0].mxu0
      %852 = vmatprep.mubr.bf16.mxu0 0
      %853 = vmatmul.mubr.bf16.gmra.mrb[0].mxu0 %v734
      %v854 = vpop.f32.mrb[0].mxu0
      %v855 = vadd.f32 0.0, %v854
      %v856 = vpop.f32.mrb[0].mxu0
      %v857 = vpop.f32.mrb[0].mxu0
      %v858 = vadd.f32 0.0, %v857
      %v859 = vpop.f32.mrb[0].mxu0
      %860 = vdwg.mxu0
      %v861 = vadd.f32 %v664, %v823
      %v862 = vadd.f32 %v667, %v826
      %v863 = vadd.f32 %v672, %v831
      %v864 = vadd.f32 %v675, %v834
      %v865 = vadd.f32 %v680, %v839
      %v866 = vadd.f32 %v683, %v842
      %v867 = vadd.f32 %v688, %v847
      %v868 = vadd.f32 %v691, %v850
      %v869 = vadd.f32 %v696, %v855
      %v870 = vadd.f32 %v699, %v858
      %v871 = vld [vmem:[%s308 + $0x4] sm:$0xe]
      %v872 = vld [vmem:[%s308 + $0x8] sm:$0xf]
      %v873 = vld [vmem:[%s308 + $0xc] sm:$0xf]
      %v874 = vld [vmem:[%s308 + $0x10] sm:$0xf]
      %v875 = vld [vmem:[%s308 + $0x14] sm:$0xf]
      %v876 = vld [vmem:[%s308 + $0x18] sm:$0xf]
      %v877 = vld [vmem:[%s308 + $0x1c] sm:$0xf]
      %v878 = vld [vmem:[%s308 + $0x20] sm:$0xf]
      %v879 = vld [vmem:[%s308 + $0x24] sm:$0xf]
      %v880 = vld [vmem:[%s308 + $0x28] sm:$0xf]
      %v881 = vld [vmem:[%s308 + $0x2c] sm:$0x1]
      %s882 = scalar_lea.vmem %s1, 192
      %v883 = vld [vmem:[%s882] sm:$0xf]
      %v884 = vld [vmem:[%s882 + $0x4] sm:$0xf]
      %v885 = vld [vmem:[%s882 + $0x8] sm:$0xf]
      %v886 = vld [vmem:[%s882 + $0xc] sm:$0xf]
      %v887 = vld [vmem:[%s882 + $0x10] sm:$0xf]
      %v888 = vld [vmem:[%s882 + $0x14] sm:$0xf]
      %v889 = vld [vmem:[%s882 + $0x18] sm:$0xf]
      %v890 = vld [vmem:[%s882 + $0x1c] sm:$0xf]
      %v891 = vld [vmem:[%s882 + $0x20] sm:$0xf]
      %v892 = vld [vmem:[%s882 + $0x24] sm:$0xf]
      %v893 = vld [vmem:[%s882 + $0x28] sm:$0xf]
      %v894 = vld [vmem:[%s882 + $0x2c] sm:$0xf]
      %v895 = vld [vmem:[%s882 + $0x30] sm:$0xf]
      %v896 = vld [vmem:[%s882 + $0x34] sm:$0xf]
      %v897 = vld [vmem:[%s882 + $0x38] sm:$0xf]
      %v898 = vld [vmem:[%s882 + $0x3c] sm:$0xf]
      %v910 = vunpack.c.l.b16 %v871
      %v911 = vunpack.c.l.b16 %v872
      %v912 = vunpack.c.l.b16 %v873
      %v913 = vunpack.c.l.b16 %v874
      %v914 = vunpack.c.l.b16 %v875
      %v915 = vunpack.c.l.b16 %v876
      %v916 = vunpack.c.l.b16 %v877
      %v917 = vunpack.c.l.b16 %v878
      %v918 = vunpack.c.l.b16 %v879
      %v919 = vunpack.c.l.b16 %v880
      %v920 = vunpack.c.l.b16 %v881
      %v921 = vpack.c.b16 %v911, %v910
      %v922 = vpack.c.b16 %v913, %v912
      %v923 = vpack.c.b16 %v915, %v914
      %v924 = vpack.c.b16 %v917, %v916
      %v925 = vpack.c.b16 %v919, %v918
      %v926 = vpack.c.b16 %v920, %v920
      %v927 = vrot.slane %v921, 1
      %v928 = vrot.slane %v922, 1
      %v929 = vsel %vm723, %v927, %v928
      %v930 = vrot.slane %v923, 1
      %v931 = vsel %vm723, %v928, %v930
      %v932 = vrot.slane %v924, 1
      %v933 = vsel %vm723, %v930, %v932
      %v934 = vrot.slane %v925, 1
      %v935 = vsel %vm723, %v932, %v934
      %v936 = vrot.slane %v926, 1
      %v937 = vsel %vm723, %v934, %v936
      %v959 = vunpack.c.l.b16 %v883
      %v960 = vunpack.c.l.b16 %v884
      %v961 = vunpack.c.l.b16 %v885
      %v962 = vunpack.c.l.b16 %v886
      %v963 = vunpack.c.l.b16 %v887
      %v964 = vunpack.c.l.b16 %v888
      %v965 = vunpack.c.l.b16 %v889
      %v966 = vunpack.c.l.b16 %v890
      %v967 = vunpack.c.l.b16 %v891
      %v968 = vunpack.c.l.b16 %v892
      %v969 = vunpack.c.l.b16 %v893
      %v970 = vunpack.c.l.b16 %v894
      %v971 = vunpack.c.l.b16 %v895
      %v972 = vunpack.c.l.b16 %v896
      %v973 = vunpack.c.l.b16 %v897
      %v974 = vunpack.c.l.b16 %v898
      %v975 = vpack.c.b16 %v960, %v959
      %v976 = vpack.c.b16 %v962, %v961
      %v977 = vpack.c.b16 %v964, %v963
      %v978 = vpack.c.b16 %v966, %v965
      %v979 = vpack.c.b16 %v968, %v967
      %v980 = vpack.c.b16 %v970, %v969
      %v981 = vpack.c.b16 %v972, %v971
      %v982 = vpack.c.b16 %v974, %v973
      %991 = vmatprep.subr.bf16.mxu0 0
      %992 = vmatpush1.bf16.msra.mxu0 %v975
      %993 = vmatprep.subr.bf16.mxu0 0
      %994 = vmatpush1.bf16.msra.mxu0 %v976
      %995 = vmatprep.subr.bf16.mxu0 0
      %996 = vmatpush1.bf16.msra.mxu0 %v977
      %997 = vmatprep.subr.bf16.mxu0 0
      %998 = vmatpush1.bf16.msra.mxu0 %v978
      %999 = vmatprep.subr.bf16.mxu0 0
      %1000 = vmatpush1.bf16.msra.mxu0 %v979
      %1001 = vmatprep.subr.bf16.mxu0 0
      %1002 = vmatpush1.bf16.msra.mxu0 %v980
      %1003 = vmatprep.subr.bf16.mxu0 0
      %1004 = vmatpush1.bf16.msra.mxu0 %v981
      %1005 = vmatprep.subr.bf16.mxu0 0
      %1006 = vmatpush1.bf16.msra.mxu0 %v982
      %1007 = vmatprep.subr.bf16.mxu0 0
      %1008 = vmatpush1.bf16.msra.mxu0 0
      %1009 = vmatprep.subr.bf16.mxu0 0
      %1010 = vmatpush1.bf16.msra.mxu0 0
      %1011 = vmatprep.subr.bf16.mxu0 0
      %1012 = vmatpush1.bf16.msra.mxu0 0
      %1013 = vmatprep.subr.bf16.mxu0 0
      %1014 = vmatpush1.bf16.msra.mxu0 0
      %1015 = vmatprep.subr.bf16.mxu0 0
      %1016 = vmatpush1.bf16.msra.mxu0 0
      %1017 = vmatprep.subr.bf16.mxu0 0
      %1018 = vmatpush1.bf16.msra.mxu0 0
      %1019 = vmatprep.subr.bf16.mxu0 0
      %1020 = vmatpush1.bf16.msra.mxu0 0
      %1021 = vmatprep.subr.bf16.mxu0 0
      %1022 = vmatpush1.bf16.msra.mxu0 0
      %1023 = vmatprep.mubr.bf16.mxu0 0
      %1024 = vmatmul.mubr.bf16.gmra.mrb[0].mxu0 %v929
      %v1025 = vpop.f32.mrb[0].mxu0
      %v1026 = vadd.f32 0.0, %v1025
      %v1027 = vpop.f32.mrb[0].mxu0
      %v1028 = vpop.f32.mrb[0].mxu0
      %v1029 = vadd.f32 0.0, %v1028
      %v1030 = vpop.f32.mrb[0].mxu0
      %1031 = vmatprep.mubr.bf16.mxu0 0
      %1032 = vmatmul.mubr.bf16.gmra.mrb[0].mxu0 %v931
      %v1033 = vpop.f32.mrb[0].mxu0
      %v1034 = vadd.f32 0.0, %v1033
      %v1035 = vpop.f32.mrb[0].mxu0
      %v1036 = vpop.f32.mrb[0].mxu0
      %v1037 = vadd.f32 0.0, %v1036
      %v1038 = vpop.f32.mrb[0].mxu0
      %1039 = vmatprep.mubr.bf16.mxu0 0
      %1040 = vmatmul.mubr.bf16.gmra.mrb[0].mxu0 %v933
      %v1041 = vpop.f32.mrb[0].mxu0
      %v1042 = vadd.f32 0.0, %v1041
      %v1043 = vpop.f32.mrb[0].mxu0
      %v1044 = vpop.f32.mrb[0].mxu0
      %v1045 = vadd.f32 0.0, %v1044
      %v1046 = vpop.f32.mrb[0].mxu0
      %1047 = vmatprep.mubr.bf16.mxu0 0
      %1048 = vmatmul.mubr.bf16.gmra.mrb[0].mxu0 %v935
      %v1049 = vpop.f32.mrb[0].mxu0
      %v1050 = vadd.f32 0.0, %v1049
      %v1051 = vpop.f32.mrb[0].mxu0
      %v1052 = vpop.f32.mrb[0].mxu0
      %v1053 = vadd.f32 0.0, %v1052
      %v1054 = vpop.f32.mrb[0].mxu0
      %1055 = vmatprep.mubr.bf16.mxu0 0
      %1056 = vmatmul.mubr.bf16.gmra.mrb[0].mxu0 %v937
      %v1057 = vpop.f32.mrb[0].mxu0
      %v1058 = vadd.f32 0.0, %v1057
      %v1059 = vpop.f32.mrb[0].mxu0
      %v1060 = vpop.f32.mrb[0].mxu0
      %v1061 = vadd.f32 0.0, %v1060
      %v1062 = vpop.f32.mrb[0].mxu0
      %1063 = vdwg.mxu0
      %v1064 = vadd.f32 %v861, %v1026
      %v1065 = vadd.f32 %v862, %v1029
      %v1066 = vadd.f32 %v863, %v1034
      %v1067 = vadd.f32 %v864, %v1037
      %v1068 = vadd.f32 %v865, %v1042
      %v1069 = vadd.f32 %v866, %v1045
      %v1070 = vadd.f32 %v867, %v1050
      %v1071 = vadd.f32 %v868, %v1053
      %v1072 = vadd.f32 %v869, %v1058
      %v1073 = vadd.f32 %v870, %v1061
      %v1074 = vld [vmem:[%s308 + $0x2c] sm:$0x3]
      %s1075 = scalar_lea.vmem %s1, 256
      %v1076 = vld [vmem:[%s1075] sm:$0xf]
      %v1077 = vld [vmem:[%s1075 + $0x4] sm:$0xf]
      %v1078 = vld [vmem:[%s1075 + $0x8] sm:$0xf]
      %v1079 = vld [vmem:[%s1075 + $0xc] sm:$0xf]
      %v1080 = vld [vmem:[%s1075 + $0x10] sm:$0xf]
      %v1081 = vld [vmem:[%s1075 + $0x14] sm:$0xf]
      %v1082 = vld [vmem:[%s1075 + $0x18] sm:$0xf]
      %v1083 = vld [vmem:[%s1075 + $0x1c] sm:$0xf]
      %v1084 = vld [vmem:[%s1075 + $0x20] sm:$0xf]
      %v1085 = vld [vmem:[%s1075 + $0x24] sm:$0xf]
      %v1086 = vld [vmem:[%s1075 + $0x28] sm:$0xf]
      %v1087 = vld [vmem:[%s1075 + $0x2c] sm:$0xf]
      %v1088 = vld [vmem:[%s1075 + $0x30] sm:$0xf]
      %v1089 = vld [vmem:[%s1075 + $0x34] sm:$0xf]
      %v1090 = vld [vmem:[%s1075 + $0x38] sm:$0xf]
      %v1091 = vld [vmem:[%s1075 + $0x3c] sm:$0xf]
      %v1093 = vunpack.c.l.b16 %v1074
      %v1094 = vpack.c.b16 %v1093, %v1093
      %vm1095 = vsmask.f32 6400
      %v1097 = vshrl.u32 %v921, 16
      %v1099 = vrot.slane %v1097, 1
      %v1100 = vshll.u32 %v921, 16
      %v1102 = vrot.slane %v1100, 2
      %v1103 = vor.u32 %v1099, %v1102
      %v1105 = vshrl.u32 %v922, 16
      %v1107 = vrot.slane %v1105, 1
      %v1108 = vshll.u32 %v922, 16
      %v1110 = vrot.slane %v1108, 2
      %v1111 = vor.u32 %v1107, %v1110
      %v1112 = vsel %vm1095, %v1103, %v1111
      %v1114 = vshrl.u32 %v923, 16
      %v1116 = vrot.slane %v1114, 1
      %v1117 = vshll.u32 %v923, 16
      %v1119 = vrot.slane %v1117, 2
      %v1120 = vor.u32 %v1116, %v1119
      %v1121 = vsel %vm1095, %v1111, %v1120
      %v1123 = vshrl.u32 %v924, 16
      %v1125 = vrot.slane %v1123, 1
      %v1126 = vshll.u32 %v924, 16
      %v1128 = vrot.slane %v1126, 2
      %v1129 = vor.u32 %v1125, %v1128
      %v1130 = vsel %vm1095, %v1120, %v1129
      %v1132 = vshrl.u32 %v925, 16
      %v1134 = vrot.slane %v1132, 1
      %v1135 = vshll.u32 %v925, 16
      %v1137 = vrot.slane %v1135, 2
      %v1138 = vor.u32 %v1134, %v1137
      %v1139 = vsel %vm1095, %v1129, %v1138
      %v1141 = vshrl.u32 %v1094, 16
      %v1143 = vrot.slane %v1141, 1
      %v1144 = vshll.u32 %v1094, 16
      %v1146 = vrot.slane %v1144, 2
      %v1147 = vor.u32 %v1143, %v1146
      %v1148 = vsel %vm1095, %v1138, %v1147
      %v1170 = vunpack.c.l.b16 %v1076
      %v1171 = vunpack.c.l.b16 %v1077
      %v1172 = vunpack.c.l.b16 %v1078
      %v1173 = vunpack.c.l.b16 %v1079
      %v1174 = vunpack.c.l.b16 %v1080
      %v1175 = vunpack.c.l.b16 %v1081
      %v1176 = vunpack.c.l.b16 %v1082
      %v1177 = vunpack.c.l.b16 %v1083
      %v1178 = vunpack.c.l.b16 %v1084
      %v1179 = vunpack.c.l.b16 %v1085
      %v1180 = vunpack.c.l.b16 %v1086
      %v1181 = vunpack.c.l.b16 %v1087
      %v1182 = vunpack.c.l.b16 %v1088
      %v1183 = vunpack.c.l.b16 %v1089
      %v1184 = vunpack.c.l.b16 %v1090
      %v1185 = vunpack.c.l.b16 %v1091
      %v1186 = vpack.c.b16 %v1171, %v1170
      %v1187 = vpack.c.b16 %v1173, %v1172
      %v1188 = vpack.c.b16 %v1175, %v1174
      %v1189 = vpack.c.b16 %v1177, %v1176
      %v1190 = vpack.c.b16 %v1179, %v1178
      %v1191 = vpack.c.b16 %v1181, %v1180
      %v1192 = vpack.c.b16 %v1183, %v1182
      %v1193 = vpack.c.b16 %v1185, %v1184
      %1202 = vmatprep.subr.bf16.mxu0 0
      %1203 = vmatpush1.bf16.msra.mxu0 %v1186
      %1204 = vmatprep.subr.bf16.mxu0 0
      %1205 = vmatpush1.bf16.msra.mxu0 %v1187
      %1206 = vmatprep.subr.bf16.mxu0 0
      %1207 = vmatpush1.bf16.msra.mxu0 %v1188
      %1208 = vmatprep.subr.bf16.mxu0 0
      %1209 = vmatpush1.bf16.msra.mxu0 %v1189
      %1210 = vmatprep.subr.bf16.mxu0 0
      %1211 = vmatpush1.bf16.msra.mxu0 %v1190
      %1212 = vmatprep.subr.bf16.mxu0 0
      %1213 = vmatpush1.bf16.msra.mxu0 %v1191
      %1214 = vmatprep.subr.bf16.mxu0 0
      %1215 = vmatpush1.bf16.msra.mxu0 %v1192
      %1216 = vmatprep.subr.bf16.mxu0 0
      %1217 = vmatpush1.bf16.msra.mxu0 %v1193
      %1218 = vmatprep.subr.bf16.mxu0 0
      %1219 = vmatpush1.bf16.msra.mxu0 0
      %1220 = vmatprep.subr.bf16.mxu0 0
      %1221 = vmatpush1.bf16.msra.mxu0 0
      %1222 = vmatprep.subr.bf16.mxu0 0
      %1223 = vmatpush1.bf16.msra.mxu0 0
      %1224 = vmatprep.subr.bf16.mxu0 0
      %1225 = vmatpush1.bf16.msra.mxu0 0
      %1226 = vmatprep.subr.bf16.mxu0 0
      %1227 = vmatpush1.bf16.msra.mxu0 0
      %1228 = vmatprep.subr.bf16.mxu0 0
      %1229 = vmatpush1.bf16.msra.mxu0 0
      %1230 = vmatprep.subr.bf16.mxu0 0
      %1231 = vmatpush1.bf16.msra.mxu0 0
      %1232 = vmatprep.subr.bf16.mxu0 0
      %1233 = vmatpush1.bf16.msra.mxu0 0
      %1234 = vmatprep.mubr.bf16.mxu0 0
      %1235 = vmatmul.mubr.bf16.gmra.mrb[0].mxu0 %v1112
      %v1236 = vpop.f32.mrb[0].mxu0
      %v1237 = vadd.f32 0.0, %v1236
      %v1238 = vpop.f32.mrb[0].mxu0
      %v1239 = vpop.f32.mrb[0].mxu0
      %v1240 = vadd.f32 0.0, %v1239
      %v1241 = vpop.f32.mrb[0].mxu0
      %1242 = vmatprep.mubr.bf16.mxu0 0
      %1243 = vmatmul.mubr.bf16.gmra.mrb[0].mxu0 %v1121
      %v1244 = vpop.f32.mrb[0].mxu0
      %v1245 = vadd.f32 0.0, %v1244
      %v1246 = vpop.f32.mrb[0].mxu0
      %v1247 = vpop.f32.mrb[0].mxu0
      %v1248 = vadd.f32 0.0, %v1247
      %v1249 = vpop.f32.mrb[0].mxu0
      %1250 = vmatprep.mubr.bf16.mxu0 0
      %1251 = vmatmul.mubr.bf16.gmra.mrb[0].mxu0 %v1130
      %v1252 = vpop.f32.mrb[0].mxu0
      %v1253 = vadd.f32 0.0, %v1252
      %v1254 = vpop.f32.mrb[0].mxu0
      %v1255 = vpop.f32.mrb[0].mxu0
      %v1256 = vadd.f32 0.0, %v1255
      %v1257 = vpop.f32.mrb[0].mxu0
      %1258 = vmatprep.mubr.bf16.mxu0 0
      %1259 = vmatmul.mubr.bf16.gmra.mrb[0].mxu0 %v1139
      %v1260 = vpop.f32.mrb[0].mxu0
      %v1261 = vadd.f32 0.0, %v1260
      %v1262 = vpop.f32.mrb[0].mxu0
      %v1263 = vpop.f32.mrb[0].mxu0
      %v1264 = vadd.f32 0.0, %v1263
      %v1265 = vpop.f32.mrb[0].mxu0
      %1266 = vmatprep.mubr.bf16.mxu0 0
      %1267 = vmatmul.mubr.bf16.gmra.mrb[0].mxu0 %v1148
      %v1268 = vpop.f32.mrb[0].mxu0
      %v1269 = vadd.f32 0.0, %v1268
      %v1270 = vpop.f32.mrb[0].mxu0
      %v1271 = vpop.f32.mrb[0].mxu0
      %v1272 = vadd.f32 0.0, %v1271
      %v1273 = vpop.f32.mrb[0].mxu0
      %1274 = vdwg.mxu0
      %v1275 = vadd.f32 %v1064, %v1237
      %v1276 = vadd.f32 %v1065, %v1240
      %v1277 = vadd.f32 %v1066, %v1245
      %v1278 = vadd.f32 %v1067, %v1248
      %v1279 = vadd.f32 %v1068, %v1253
      %v1280 = vadd.f32 %v1069, %v1256
      %v1281 = vadd.f32 %v1070, %v1261
      %v1282 = vadd.f32 %v1071, %v1264
      %v1283 = vadd.f32 %v1072, %v1269
      %v1284 = vadd.f32 %v1073, %v1272
      %v1285 = vld [vmem:[%s308 + $0x4] sm:$0xc]
      %s1286 = scalar_lea.vmem %s1, 320
      %v1287 = vld [vmem:[%s1286] sm:$0xf]
      %v1288 = vld [vmem:[%s1286 + $0x4] sm:$0xf]
      %v1289 = vld [vmem:[%s1286 + $0x8] sm:$0xf]
      %v1290 = vld [vmem:[%s1286 + $0xc] sm:$0xf]
      %v1291 = vld [vmem:[%s1286 + $0x10] sm:$0xf]
      %v1292 = vld [vmem:[%s1286 + $0x14] sm:$0xf]
      %v1293 = vld [vmem:[%s1286 + $0x18] sm:$0xf]
      %v1294 = vld [vmem:[%s1286 + $0x1c] sm:$0xf]
      %v1295 = vld [vmem:[%s1286 + $0x20] sm:$0xf]
      %v1296 = vld [vmem:[%s1286 + $0x24] sm:$0xf]
      %v1297 = vld [vmem:[%s1286 + $0x28] sm:$0xf]
      %v1298 = vld [vmem:[%s1286 + $0x2c] sm:$0xf]
      %v1299 = vld [vmem:[%s1286 + $0x30] sm:$0xf]
      %v1300 = vld [vmem:[%s1286 + $0x34] sm:$0xf]
      %v1301 = vld [vmem:[%s1286 + $0x38] sm:$0xf]
      %v1302 = vld [vmem:[%s1286 + $0x3c] sm:$0xf]
      %v1304 = vunpack.c.l.b16 %v1285
      %v1305 = vpack.c.b16 %v911, %v1304
      %vm1306 = vcmask 1045504
      %v1307 = vrot.slane %v1305, 2
      %v1308 = vrot.slane %v922, 2
      %v1309 = vsel %vm1306, %v1307, %v1308
      %v1310 = vrot.slane %v923, 2
      %v1311 = vsel %vm1306, %v1308, %v1310
      %v1312 = vrot.slane %v924, 2
      %v1313 = vsel %vm1306, %v1310, %v1312
      %v1314 = vrot.slane %v925, 2
      %v1315 = vsel %vm1306, %v1312, %v1314
      %v1316 = vrot.slane %v1094, 2
      %v1317 = vsel %vm1306, %v1314, %v1316
      %v1339 = vunpack.c.l.b16 %v1287
      %v1340 = vunpack.c.l.b16 %v1288
      %v1341 = vunpack.c.l.b16 %v1289
      %v1342 = vunpack.c.l.b16 %v1290
      %v1343 = vunpack.c.l.b16 %v1291
      %v1344 = vunpack.c.l.b16 %v1292
      %v1345 = vunpack.c.l.b16 %v1293
      %v1346 = vunpack.c.l.b16 %v1294
      %v1347 = vunpack.c.l.b16 %v1295
      %v1348 = vunpack.c.l.b16 %v1296
      %v1349 = vunpack.c.l.b16 %v1297
      %v1350 = vunpack.c.l.b16 %v1298
      %v1351 = vunpack.c.l.b16 %v1299
      %v1352 = vunpack.c.l.b16 %v1300
      %v1353 = vunpack.c.l.b16 %v1301
      %v1354 = vunpack.c.l.b16 %v1302
      %v1355 = vpack.c.b16 %v1340, %v1339
      %v1356 = vpack.c.b16 %v1342, %v1341
      %v1357 = vpack.c.b16 %v1344, %v1343
      %v1358 = vpack.c.b16 %v1346, %v1345
      %v1359 = vpack.c.b16 %v1348, %v1347
      %v1360 = vpack.c.b16 %v1350, %v1349
      %v1361 = vpack.c.b16 %v1352, %v1351
      %v1362 = vpack.c.b16 %v1354, %v1353
      %1371 = vmatprep.subr.bf16.mxu0 0
      %1372 = vmatpush1.bf16.msra.mxu0 %v1355
      %1373 = vmatprep.subr.bf16.mxu0 0
      %1374 = vmatpush1.bf16.msra.mxu0 %v1356
      %1375 = vmatprep.subr.bf16.mxu0 0
      %1376 = vmatpush1.bf16.msra.mxu0 %v1357
      %1377 = vmatprep.subr.bf16.mxu0 0
      %1378 = vmatpush1.bf16.msra.mxu0 %v1358
      %1379 = vmatprep.subr.bf16.mxu0 0
      %1380 = vmatpush1.bf16.msra.mxu0 %v1359
      %1381 = vmatprep.subr.bf16.mxu0 0
      %1382 = vmatpush1.bf16.msra.mxu0 %v1360
      %1383 = vmatprep.subr.bf16.mxu0 0
      %1384 = vmatpush1.bf16.msra.mxu0 %v1361
      %1385 = vmatprep.subr.bf16.mxu0 0
      %1386 = vmatpush1.bf16.msra.mxu0 %v1362
      %1387 = vmatprep.subr.bf16.mxu0 0
      %1388 = vmatpush1.bf16.msra.mxu0 0
      %1389 = vmatprep.subr.bf16.mxu0 0
      %1390 = vmatpush1.bf16.msra.mxu0 0
      %1391 = vmatprep.subr.bf16.mxu0 0
      %1392 = vmatpush1.bf16.msra.mxu0 0
      %1393 = vmatprep.subr.bf16.mxu0 0
      %1394 = vmatpush1.bf16.msra.mxu0 0
      %1395 = vmatprep.subr.bf16.mxu0 0
      %1396 = vmatpush1.bf16.msra.mxu0 0
      %1397 = vmatprep.subr.bf16.mxu0 0
      %1398 = vmatpush1.bf16.msra.mxu0 0
      %1399 = vmatprep.subr.bf16.mxu0 0
      %1400 = vmatpush1.bf16.msra.mxu0 0
      %1401 = vmatprep.subr.bf16.mxu0 0
      %1402 = vmatpush1.bf16.msra.mxu0 0
      %1403 = vmatprep.mubr.bf16.mxu0 0
      %1404 = vmatmul.mubr.bf16.gmra.mrb[0].mxu0 %v1309
      %v1405 = vpop.f32.mrb[0].mxu0
      %v1406 = vadd.f32 0.0, %v1405
      %v1407 = vpop.f32.mrb[0].mxu0
      %v1408 = vpop.f32.mrb[0].mxu0
      %v1409 = vadd.f32 0.0, %v1408
      %v1410 = vpop.f32.mrb[0].mxu0
      %1411 = vmatprep.mubr.bf16.mxu0 0
      %1412 = vmatmul.mubr.bf16.gmra.mrb[0].mxu0 %v1311
      %v1413 = vpop.f32.mrb[0].mxu0
      %v1414 = vadd.f32 0.0, %v1413
      %v1415 = vpop.f32.mrb[0].mxu0
      %v1416 = vpop.f32.mrb[0].mxu0
      %v1417 = vadd.f32 0.0, %v1416
      %v1418 = vpop.f32.mrb[0].mxu0
      %1419 = vmatprep.mubr.bf16.mxu0 0
      %1420 = vmatmul.mubr.bf16.gmra.mrb[0].mxu0 %v1313
      %v1421 = vpop.f32.mrb[0].mxu0
      %v1422 = vadd.f32 0.0, %v1421
      %v1423 = vpop.f32.mrb[0].mxu0
      %v1424 = vpop.f32.mrb[0].mxu0
      %v1425 = vadd.f32 0.0, %v1424
      %v1426 = vpop.f32.mrb[0].mxu0
      %1427 = vmatprep.mubr.bf16.mxu0 0
      %1428 = vmatmul.mubr.bf16.gmra.mrb[0].mxu0 %v1315
      %v1429 = vpop.f32.mrb[0].mxu0
      %v1430 = vadd.f32 0.0, %v1429
      %v1431 = vpop.f32.mrb[0].mxu0
      %v1432 = vpop.f32.mrb[0].mxu0
      %v1433 = vadd.f32 0.0, %v1432
      %v1434 = vpop.f32.mrb[0].mxu0
      %1435 = vmatprep.mubr.bf16.mxu0 0
      %1436 = vmatmul.mubr.bf16.gmra.mrb[0].mxu0 %v1317
      %v1437 = vpop.f32.mrb[0].mxu0
      %v1438 = vadd.f32 0.0, %v1437
      %v1439 = vpop.f32.mrb[0].mxu0
      %v1440 = vpop.f32.mrb[0].mxu0
      %v1441 = vadd.f32 0.0, %v1440
      %v1442 = vpop.f32.mrb[0].mxu0
      %1443 = vdwg.mxu0
      %v1444 = vadd.f32 %v1275, %v1406
      %v1445 = vadd.f32 %v1276, %v1409
      %v1446 = vadd.f32 %v1277, %v1414
      %v1447 = vadd.f32 %v1278, %v1417
      %v1448 = vadd.f32 %v1279, %v1422
      %v1449 = vadd.f32 %v1280, %v1425
      %v1450 = vadd.f32 %v1281, %v1430
      %v1451 = vadd.f32 %v1282, %v1433
      %v1452 = vadd.f32 %v1283, %v1438
      %v1453 = vadd.f32 %v1284, %v1441
      %v1454 = vld [vmem:[%s308 + $0x8] sm:$0xc]
      %v1455 = vld [vmem:[%s308 + $0xc] sm:$0xf]
      %v1456 = vld [vmem:[%s308 + $0x10] sm:$0xf]
      %v1457 = vld [vmem:[%s308 + $0x14] sm:$0xf]
      %v1458 = vld [vmem:[%s308 + $0x18] sm:$0xf]
      %v1459 = vld [vmem:[%s308 + $0x1c] sm:$0xf]
      %v1460 = vld [vmem:[%s308 + $0x20] sm:$0xf]
      %v1461 = vld [vmem:[%s308 + $0x24] sm:$0xf]
      %v1462 = vld [vmem:[%s308 + $0x28] sm:$0xf]
      %v1463 = vld [vmem:[%s308 + $0x2c] sm:$0xf]
      %v1464 = vld [vmem:[%s308 + $0x30] sm:$0x3]
      %s1465 = scalar_lea.vmem %s1, 384
      %v1466 = vld [vmem:[%s1465] sm:$0xf]
      %v1467 = vld [vmem:[%s1465 + $0x4] sm:$0xf]
      %v1468 = vld [vmem:[%s1465 + $0x8] sm:$0xf]
      %v1469 = vld [vmem:[%s1465 + $0xc] sm:$0xf]
      %v1470 = vld [vmem:[%s1465 + $0x10] sm:$0xf]
      %v1471 = vld [vmem:[%s1465 + $0x14] sm:$0xf]
      %v1472 = vld [vmem:[%s1465 + $0x18] sm:$0xf]
      %v1473 = vld [vmem:[%s1465 + $0x1c] sm:$0xf]
      %v1474 = vld [vmem:[%s1465 + $0x20] sm:$0xf]
      %v1475 = vld [vmem:[%s1465 + $0x24] sm:$0xf]
      %v1476 = vld [vmem:[%s1465 + $0x28] sm:$0xf]
      %v1477 = vld [vmem:[%s1465 + $0x2c] sm:$0xf]
      %v1478 = vld [vmem:[%s1465 + $0x30] sm:$0xf]
      %v1479 = vld [vmem:[%s1465 + $0x34] sm:$0xf]
      %v1480 = vld [vmem:[%s1465 + $0x38] sm:$0xf]
      %v1481 = vld [vmem:[%s1465 + $0x3c] sm:$0xf]
      %v1493 = vunpack.c.l.b16 %v1454
      %v1494 = vunpack.c.l.b16 %v1455
      %v1495 = vunpack.c.l.b16 %v1456
      %v1496 = vunpack.c.l.b16 %v1457
      %v1497 = vunpack.c.l.b16 %v1458
      %v1498 = vunpack.c.l.b16 %v1459
      %v1499 = vunpack.c.l.b16 %v1460
      %v1500 = vunpack.c.l.b16 %v1461
      %v1501 = vunpack.c.l.b16 %v1462
      %v1502 = vunpack.c.l.b16 %v1463
      %v1503 = vunpack.c.l.b16 %v1464
      %v1504 = vpack.c.b16 %v1494, %v1493
      %v1505 = vpack.c.b16 %v1496, %v1495
      %v1506 = vpack.c.b16 %v1498, %v1497
      %v1507 = vpack.c.b16 %v1500, %v1499
      %v1508 = vpack.c.b16 %v1502, %v1501
      %v1509 = vpack.c.b16 %v1503, %v1503
      %v1510 = vrot.slane %v1504, 2
      %v1511 = vrot.slane %v1505, 2
      %v1512 = vsel %vm1306, %v1510, %v1511
      %v1513 = vrot.slane %v1506, 2
      %v1514 = vsel %vm1306, %v1511, %v1513
      %v1515 = vrot.slane %v1507, 2
      %v1516 = vsel %vm1306, %v1513, %v1515
      %v1517 = vrot.slane %v1508, 2
      %v1518 = vsel %vm1306, %v1515, %v1517
      %v1519 = vrot.slane %v1509, 2
      %v1520 = vsel %vm1306, %v1517, %v1519
      %v1542 = vunpack.c.l.b16 %v1466
      %v1543 = vunpack.c.l.b16 %v1467
      %v1544 = vunpack.c.l.b16 %v1468
      %v1545 = vunpack.c.l.b16 %v1469
      %v1546 = vunpack.c.l.b16 %v1470
      %v1547 = vunpack.c.l.b16 %v1471
      %v1548 = vunpack.c.l.b16 %v1472
      %v1549 = vunpack.c.l.b16 %v1473
      %v1550 = vunpack.c.l.b16 %v1474
      %v1551 = vunpack.c.l.b16 %v1475
      %v1552 = vunpack.c.l.b16 %v1476
      %v1553 = vunpack.c.l.b16 %v1477
      %v1554 = vunpack.c.l.b16 %v1478
      %v1555 = vunpack.c.l.b16 %v1479
      %v1556 = vunpack.c.l.b16 %v1480
      %v1557 = vunpack.c.l.b16 %v1481
      %v1558 = vpack.c.b16 %v1543, %v1542
      %v1559 = vpack.c.b16 %v1545, %v1544
      %v1560 = vpack.c.b16 %v1547, %v1546
      %v1561 = vpack.c.b16 %v1549, %v1548
      %v1562 = vpack.c.b16 %v1551, %v1550
      %v1563 = vpack.c.b16 %v1553, %v1552
      %v1564 = vpack.c.b16 %v1555, %v1554
      %v1565 = vpack.c.b16 %v1557, %v1556
      %1574 = vmatprep.subr.bf16.mxu0 0
      %1575 = vmatpush1.bf16.msra.mxu0 %v1558
      %1576 = vmatprep.subr.bf16.mxu0 0
      %1577 = vmatpush1.bf16.msra.mxu0 %v1559
      %1578 = vmatprep.subr.bf16.mxu0 0
      %1579 = vmatpush1.bf16.msra.mxu0 %v1560
      %1580 = vmatprep.subr.bf16.mxu0 0
      %1581 = vmatpush1.bf16.msra.mxu0 %v1561
      %1582 = vmatprep.subr.bf16.mxu0 0
      %1583 = vmatpush1.bf16.msra.mxu0 %v1562
      %1584 = vmatprep.subr.bf16.mxu0 0
      %1585 = vmatpush1.bf16.msra.mxu0 %v1563
      %1586 = vmatprep.subr.bf16.mxu0 0
      %1587 = vmatpush1.bf16.msra.mxu0 %v1564
      %1588 = vmatprep.subr.bf16.mxu0 0
      %1589 = vmatpush1.bf16.msra.mxu0 %v1565
      %1590 = vmatprep.subr.bf16.mxu0 0
      %1591 = vmatpush1.bf16.msra.mxu0 0
      %1592 = vmatprep.subr.bf16.mxu0 0
      %1593 = vmatpush1.bf16.msra.mxu0 0
      %1594 = vmatprep.subr.bf16.mxu0 0
      %1595 = vmatpush1.bf16.msra.mxu0 0
      %1596 = vmatprep.subr.bf16.mxu0 0
      %1597 = vmatpush1.bf16.msra.mxu0 0
      %1598 = vmatprep.subr.bf16.mxu0 0
      %1599 = vmatpush1.bf16.msra.mxu0 0
      %1600 = vmatprep.subr.bf16.mxu0 0
      %1601 = vmatpush1.bf16.msra.mxu0 0
      %1602 = vmatprep.subr.bf16.mxu0 0
      %1603 = vmatpush1.bf16.msra.mxu0 0
      %1604 = vmatprep.subr.bf16.mxu0 0
      %1605 = vmatpush1.bf16.msra.mxu0 0
      %1606 = vmatprep.mubr.bf16.mxu0 0
      %1607 = vmatmul.mubr.bf16.gmra.mrb[0].mxu0 %v1512
      %v1608 = vpop.f32.mrb[0].mxu0
      %v1609 = vadd.f32 0.0, %v1608
      %v1610 = vpop.f32.mrb[0].mxu0
      %v1611 = vpop.f32.mrb[0].mxu0
      %v1612 = vadd.f32 0.0, %v1611
      %v1613 = vpop.f32.mrb[0].mxu0
      %1614 = vmatprep.mubr.bf16.mxu0 0
      %1615 = vmatmul.mubr.bf16.gmra.mrb[0].mxu0 %v1514
      %v1616 = vpop.f32.mrb[0].mxu0
      %v1617 = vadd.f32 0.0, %v1616
      %v1618 = vpop.f32.mrb[0].mxu0
      %v1619 = vpop.f32.mrb[0].mxu0
      %v1620 = vadd.f32 0.0, %v1619
      %v1621 = vpop.f32.mrb[0].mxu0
      %1622 = vmatprep.mubr.bf16.mxu0 0
      %1623 = vmatmul.mubr.bf16.gmra.mrb[0].mxu0 %v1516
      %v1624 = vpop.f32.mrb[0].mxu0
      %v1625 = vadd.f32 0.0, %v1624
      %v1626 = vpop.f32.mrb[0].mxu0
      %v1627 = vpop.f32.mrb[0].mxu0
      %v1628 = vadd.f32 0.0, %v1627
      %v1629 = vpop.f32.mrb[0].mxu0
      %1630 = vmatprep.mubr.bf16.mxu0 0
      %1631 = vmatmul.mubr.bf16.gmra.mrb[0].mxu0 %v1518
      %v1632 = vpop.f32.mrb[0].mxu0
      %v1633 = vadd.f32 0.0, %v1632
      %v1634 = vpop.f32.mrb[0].mxu0
      %v1635 = vpop.f32.mrb[0].mxu0
      %v1636 = vadd.f32 0.0, %v1635
      %v1637 = vpop.f32.mrb[0].mxu0
      %1638 = vmatprep.mubr.bf16.mxu0 0
      %1639 = vmatmul.mubr.bf16.gmra.mrb[0].mxu0 %v1520
      %v1640 = vpop.f32.mrb[0].mxu0
      %v1641 = vadd.f32 0.0, %v1640
      %v1642 = vpop.f32.mrb[0].mxu0
      %v1643 = vpop.f32.mrb[0].mxu0
      %v1644 = vadd.f32 0.0, %v1643
      %v1645 = vpop.f32.mrb[0].mxu0
      %1646 = vdwg.mxu0
      %v1647 = vadd.f32 %v1444, %v1609
      %v1648 = vadd.f32 %v1445, %v1612
      %v1649 = vadd.f32 %v1446, %v1617
      %v1650 = vadd.f32 %v1447, %v1620
      %v1651 = vadd.f32 %v1448, %v1625
      %v1652 = vadd.f32 %v1449, %v1628
      %v1653 = vadd.f32 %v1450, %v1633
      %v1654 = vadd.f32 %v1451, %v1636
      %v1655 = vadd.f32 %v1452, %v1641
      %v1656 = vadd.f32 %v1453, %v1644
      %v1657 = vld [vmem:[%s308 + $0x30] sm:$0x7]
      %s1658 = scalar_lea.vmem %s1, 448
      %v1659 = vld [vmem:[%s1658] sm:$0xf]
      %v1660 = vld [vmem:[%s1658 + $0x4] sm:$0xf]
      %v1661 = vld [vmem:[%s1658 + $0x8] sm:$0xf]
      %v1662 = vld [vmem:[%s1658 + $0xc] sm:$0xf]
      %v1663 = vld [vmem:[%s1658 + $0x10] sm:$0xf]
      %v1664 = vld [vmem:[%s1658 + $0x14] sm:$0xf]
      %v1665 = vld [vmem:[%s1658 + $0x18] sm:$0xf]
      %v1666 = vld [vmem:[%s1658 + $0x1c] sm:$0xf]
      %v1667 = vld [vmem:[%s1658 + $0x20] sm:$0xf]
      %v1668 = vld [vmem:[%s1658 + $0x24] sm:$0xf]
      %v1669 = vld [vmem:[%s1658 + $0x28] sm:$0xf]
      %v1670 = vld [vmem:[%s1658 + $0x2c] sm:$0xf]
      %v1671 = vld [vmem:[%s1658 + $0x30] sm:$0xf]
      %v1672 = vld [vmem:[%s1658 + $0x34] sm:$0xf]
      %v1673 = vld [vmem:[%s1658 + $0x38] sm:$0xf]
      %v1674 = vld [vmem:[%s1658 + $0x3c] sm:$0xf]
      %v1676 = vunpack.c.l.b16 %v1657
      %v1677 = vpack.c.b16 %v1676, %v1676
      %vm1678 = vsmask.f32 5376
      %v1680 = vshrl.u32 %v1504, 16
      %v1682 = vrot.slane %v1680, 2
      %v1683 = vshll.u32 %v1504, 16
      %v1685 = vrot.slane %v1683, 3
      %v1686 = vor.u32 %v1682, %v1685
      %v1688 = vshrl.u32 %v1505, 16
      %v1690 = vrot.slane %v1688, 2
      %v1691 = vshll.u32 %v1505, 16
      %v1693 = vrot.slane %v1691, 3
      %v1694 = vor.u32 %v1690, %v1693
      %v1695 = vsel %vm1678, %v1686, %v1694
      %v1697 = vshrl.u32 %v1506, 16
      %v1699 = vrot.slane %v1697, 2
      %v1700 = vshll.u32 %v1506, 16
      %v1702 = vrot.slane %v1700, 3
      %v1703 = vor.u32 %v1699, %v1702
      %v1704 = vsel %vm1678, %v1694, %v1703
      %v1706 = vshrl.u32 %v1507, 16
      %v1708 = vrot.slane %v1706, 2
      %v1709 = vshll.u32 %v1507, 16
      %v1711 = vrot.slane %v1709, 3
      %v1712 = vor.u32 %v1708, %v1711
      %v1713 = vsel %vm1678, %v1703, %v1712
      %v1715 = vshrl.u32 %v1508, 16
      %v1717 = vrot.slane %v1715, 2
      %v1718 = vshll.u32 %v1508, 16
      %v1720 = vrot.slane %v1718, 3
      %v1721 = vor.u32 %v1717, %v1720
      %v1722 = vsel %vm1678, %v1712, %v1721
      %v1724 = vshrl.u32 %v1677, 16
      %v1726 = vrot.slane %v1724, 2
      %v1727 = vshll.u32 %v1677, 16
      %v1729 = vrot.slane %v1727, 3
      %v1730 = vor.u32 %v1726, %v1729
      %v1731 = vsel %vm1678, %v1721, %v1730
      %v1753 = vunpack.c.l.b16 %v1659
      %v1754 = vunpack.c.l.b16 %v1660
      %v1755 = vunpack.c.l.b16 %v1661
      %v1756 = vunpack.c.l.b16 %v1662
      %v1757 = vunpack.c.l.b16 %v1663
      %v1758 = vunpack.c.l.b16 %v1664
      %v1759 = vunpack.c.l.b16 %v1665
      %v1760 = vunpack.c.l.b16 %v1666
      %v1761 = vunpack.c.l.b16 %v1667
      %v1762 = vunpack.c.l.b16 %v1668
      %v1763 = vunpack.c.l.b16 %v1669
      %v1764 = vunpack.c.l.b16 %v1670
      %v1765 = vunpack.c.l.b16 %v1671
      %v1766 = vunpack.c.l.b16 %v1672
      %v1767 = vunpack.c.l.b16 %v1673
      %v1768 = vunpack.c.l.b16 %v1674
      %v1769 = vpack.c.b16 %v1754, %v1753
      %v1770 = vpack.c.b16 %v1756, %v1755
      %v1771 = vpack.c.b16 %v1758, %v1757
      %v1772 = vpack.c.b16 %v1760, %v1759
      %v1773 = vpack.c.b16 %v1762, %v1761
      %v1774 = vpack.c.b16 %v1764, %v1763
      %v1775 = vpack.c.b16 %v1766, %v1765
      %v1776 = vpack.c.b16 %v1768, %v1767
      %1785 = vmatprep.subr.bf16.mxu0 0
      %1786 = vmatpush1.bf16.msra.mxu0 %v1769
      %1787 = vmatprep.subr.bf16.mxu0 0
      %1788 = vmatpush1.bf16.msra.mxu0 %v1770
      %1789 = vmatprep.subr.bf16.mxu0 0
      %1790 = vmatpush1.bf16.msra.mxu0 %v1771
      %1791 = vmatprep.subr.bf16.mxu0 0
      %1792 = vmatpush1.bf16.msra.mxu0 %v1772
      %1793 = vmatprep.subr.bf16.mxu0 0
      %1794 = vmatpush1.bf16.msra.mxu0 %v1773
      %1795 = vmatprep.subr.bf16.mxu0 0
      %1796 = vmatpush1.bf16.msra.mxu0 %v1774
      %1797 = vmatprep.subr.bf16.mxu0 0
      %1798 = vmatpush1.bf16.msra.mxu0 %v1775
      %1799 = vmatprep.subr.bf16.mxu0 0
      %1800 = vmatpush1.bf16.msra.mxu0 %v1776
      %1801 = vmatprep.subr.bf16.mxu0 0
      %1802 = vmatpush1.bf16.msra.mxu0 0
      %1803 = vmatprep.subr.bf16.mxu0 0
      %1804 = vmatpush1.bf16.msra.mxu0 0
      %1805 = vmatprep.subr.bf16.mxu0 0
      %1806 = vmatpush1.bf16.msra.mxu0 0
      %1807 = vmatprep.subr.bf16.mxu0 0
      %1808 = vmatpush1.bf16.msra.mxu0 0
      %1809 = vmatprep.subr.bf16.mxu0 0
      %1810 = vmatpush1.bf16.msra.mxu0 0
      %1811 = vmatprep.subr.bf16.mxu0 0
      %1812 = vmatpush1.bf16.msra.mxu0 0
      %1813 = vmatprep.subr.bf16.mxu0 0
      %1814 = vmatpush1.bf16.msra.mxu0 0
      %1815 = vmatprep.subr.bf16.mxu0 0
      %1816 = vmatpush1.bf16.msra.mxu0 0
      %1817 = vmatprep.mubr.bf16.mxu0 0
      %1818 = vmatmul.mubr.bf16.gmra.mrb[0].mxu0 %v1695
      %v1819 = vpop.f32.mrb[0].mxu0
      %v1820 = vadd.f32 0.0, %v1819
      %v1821 = vpop.f32.mrb[0].mxu0
      %v1822 = vpop.f32.mrb[0].mxu0
      %v1823 = vadd.f32 0.0, %v1822
      %v1824 = vpop.f32.mrb[0].mxu0
      %1825 = vmatprep.mubr.bf16.mxu0 0
      %1826 = vmatmul.mubr.bf16.gmra.mrb[0].mxu0 %v1704
      %v1827 = vpop.f32.mrb[0].mxu0
      %v1828 = vadd.f32 0.0, %v1827
      %v1829 = vpop.f32.mrb[0].mxu0
      %v1830 = vpop.f32.mrb[0].mxu0
      %v1831 = vadd.f32 0.0, %v1830
      %v1832 = vpop.f32.mrb[0].mxu0
      %1833 = vmatprep.mubr.bf16.mxu0 0
      %1834 = vmatmul.mubr.bf16.gmra.mrb[0].mxu0 %v1713
      %v1835 = vpop.f32.mrb[0].mxu0
      %v1836 = vadd.f32 0.0, %v1835
      %v1837 = vpop.f32.mrb[0].mxu0
      %v1838 = vpop.f32.mrb[0].mxu0
      %v1839 = vadd.f32 0.0, %v1838
      %v1840 = vpop.f32.mrb[0].mxu0
      %1841 = vmatprep.mubr.bf16.mxu0 0
      %1842 = vmatmul.mubr.bf16.gmra.mrb[0].mxu0 %v1722
      %v1843 = vpop.f32.mrb[0].mxu0
      %v1844 = vadd.f32 0.0, %v1843
      %v1845 = vpop.f32.mrb[0].mxu0
      %v1846 = vpop.f32.mrb[0].mxu0
      %v1847 = vadd.f32 0.0, %v1846
      %v1848 = vpop.f32.mrb[0].mxu0
      %1849 = vmatprep.mubr.bf16.mxu0 0
      %1850 = vmatmul.mubr.bf16.gmra.mrb[0].mxu0 %v1731
      %v1851 = vpop.f32.mrb[0].mxu0
      %v1852 = vadd.f32 0.0, %v1851
      %v1853 = vpop.f32.mrb[0].mxu0
      %v1854 = vpop.f32.mrb[0].mxu0
      %v1855 = vadd.f32 0.0, %v1854
      %v1856 = vpop.f32.mrb[0].mxu0
      %1857 = vdwg.mxu0
      %v1858 = vadd.f32 %v1647, %v1820
      %v1859 = vadd.f32 %v1648, %v1823
      %v1860 = vadd.f32 %v1649, %v1828
      %v1861 = vadd.f32 %v1650, %v1831
      %v1862 = vadd.f32 %v1651, %v1836
      %v1863 = vadd.f32 %v1652, %v1839
      %v1864 = vadd.f32 %v1653, %v1844
      %v1865 = vadd.f32 %v1654, %v1847
      %v1866 = vadd.f32 %v1655, %v1852
      %v1867 = vadd.f32 %v1656, %v1855
      %v1868 = vld [vmem:[%s308 + $0x8] sm:$0x8]
      %s1869 = scalar_lea.vmem %s1, 512
      %v1870 = vld [vmem:[%s1869] sm:$0xf]
      %v1871 = vld [vmem:[%s1869 + $0x4] sm:$0xf]
      %v1872 = vld [vmem:[%s1869 + $0x8] sm:$0xf]
      %v1873 = vld [vmem:[%s1869 + $0xc] sm:$0xf]
      %v1874 = vld [vmem:[%s1869 + $0x10] sm:$0xf]
      %v1875 = vld [vmem:[%s1869 + $0x14] sm:$0xf]
      %v1876 = vld [vmem:[%s1869 + $0x18] sm:$0xf]
      %v1877 = vld [vmem:[%s1869 + $0x1c] sm:$0xf]
      %v1878 = vld [vmem:[%s1869 + $0x20] sm:$0xf]
      %v1879 = vld [vmem:[%s1869 + $0x24] sm:$0xf]
      %v1880 = vld [vmem:[%s1869 + $0x28] sm:$0xf]
      %v1881 = vld [vmem:[%s1869 + $0x2c] sm:$0xf]
      %v1882 = vld [vmem:[%s1869 + $0x30] sm:$0xf]
      %v1883 = vld [vmem:[%s1869 + $0x34] sm:$0xf]
      %v1884 = vld [vmem:[%s1869 + $0x38] sm:$0xf]
      %v1885 = vld [vmem:[%s1869 + $0x3c] sm:$0xf]
      %v1887 = vunpack.c.l.b16 %v1868
      %v1888 = vpack.c.b16 %v1494, %v1887
      %vm1889 = vcmask 1044480
      %v1890 = vrot.slane %v1888, 3
      %v1891 = vrot.slane %v1505, 3
      %v1892 = vsel %vm1889, %v1890, %v1891
      %v1893 = vrot.slane %v1506, 3
      %v1894 = vsel %vm1889, %v1891, %v1893
      %v1895 = vrot.slane %v1507, 3
      %v1896 = vsel %vm1889, %v1893, %v1895
      %v1897 = vrot.slane %v1508, 3
      %v1898 = vsel %vm1889, %v1895, %v1897
      %v1899 = vrot.slane %v1677, 3
      %v1900 = vsel %vm1889, %v1897, %v1899
      %v1922 = vunpack.c.l.b16 %v1870
      %v1923 = vunpack.c.l.b16 %v1871
      %v1924 = vunpack.c.l.b16 %v1872
      %v1925 = vunpack.c.l.b16 %v1873
      %v1926 = vunpack.c.l.b16 %v1874
      %v1927 = vunpack.c.l.b16 %v1875
      %v1928 = vunpack.c.l.b16 %v1876
      %v1929 = vunpack.c.l.b16 %v1877
      %v1930 = vunpack.c.l.b16 %v1878
      %v1931 = vunpack.c.l.b16 %v1879
      %v1932 = vunpack.c.l.b16 %v1880
      %v1933 = vunpack.c.l.b16 %v1881
      %v1934 = vunpack.c.l.b16 %v1882
      %v1935 = vunpack.c.l.b16 %v1883
      %v1936 = vunpack.c.l.b16 %v1884
      %v1937 = vunpack.c.l.b16 %v1885
      %v1938 = vpack.c.b16 %v1923, %v1922
      %v1939 = vpack.c.b16 %v1925, %v1924
      %v1940 = vpack.c.b16 %v1927, %v1926
      %v1941 = vpack.c.b16 %v1929, %v1928
      %v1942 = vpack.c.b16 %v1931, %v1930
      %v1943 = vpack.c.b16 %v1933, %v1932
      %v1944 = vpack.c.b16 %v1935, %v1934
      %v1945 = vpack.c.b16 %v1937, %v1936
      %1954 = vmatprep.subr.bf16.mxu0 0
      %1955 = vmatpush1.bf16.msra.mxu0 %v1938
      %1956 = vmatprep.subr.bf16.mxu0 0
      %1957 = vmatpush1.bf16.msra.mxu0 %v1939
      %1958 = vmatprep.subr.bf16.mxu0 0
      %1959 = vmatpush1.bf16.msra.mxu0 %v1940
      %1960 = vmatprep.subr.bf16.mxu0 0
      %1961 = vmatpush1.bf16.msra.mxu0 %v1941
      %1962 = vmatprep.subr.bf16.mxu0 0
      %1963 = vmatpush1.bf16.msra.mxu0 %v1942
      %1964 = vmatprep.subr.bf16.mxu0 0
      %1965 = vmatpush1.bf16.msra.mxu0 %v1943
      %1966 = vmatprep.subr.bf16.mxu0 0
      %1967 = vmatpush1.bf16.msra.mxu0 %v1944
      %1968 = vmatprep.subr.bf16.mxu0 0
      %1969 = vmatpush1.bf16.msra.mxu0 %v1945
      %1970 = vmatprep.subr.bf16.mxu0 0
      %1971 = vmatpush1.bf16.msra.mxu0 0
      %1972 = vmatprep.subr.bf16.mxu0 0
      %1973 = vmatpush1.bf16.msra.mxu0 0
      %1974 = vmatprep.subr.bf16.mxu0 0
      %1975 = vmatpush1.bf16.msra.mxu0 0
      %1976 = vmatprep.subr.bf16.mxu0 0
      %1977 = vmatpush1.bf16.msra.mxu0 0
      %1978 = vmatprep.subr.bf16.mxu0 0
      %1979 = vmatpush1.bf16.msra.mxu0 0
      %1980 = vmatprep.subr.bf16.mxu0 0
      %1981 = vmatpush1.bf16.msra.mxu0 0
      %1982 = vmatprep.subr.bf16.mxu0 0
      %1983 = vmatpush1.bf16.msra.mxu0 0
      %1984 = vmatprep.subr.bf16.mxu0 0
      %1985 = vmatpush1.bf16.msra.mxu0 0
      %1986 = vmatprep.mubr.bf16.mxu0 0
      %1987 = vmatmul.mubr.bf16.gmra.mrb[0].mxu0 %v1892
      %v1988 = vpop.f32.mrb[0].mxu0
      %v1989 = vadd.f32 0.0, %v1988
      %v1990 = vpop.f32.mrb[0].mxu0
      %v1991 = vpop.f32.mrb[0].mxu0
      %v1992 = vadd.f32 0.0, %v1991
      %v1993 = vpop.f32.mrb[0].mxu0
      %1994 = vmatprep.mubr.bf16.mxu0 0
      %1995 = vmatmul.mubr.bf16.gmra.mrb[0].mxu0 %v1894
      %v1996 = vpop.f32.mrb[0].mxu0
      %v1997 = vadd.f32 0.0, %v1996
      %v1998 = vpop.f32.mrb[0].mxu0
      %v1999 = vpop.f32.mrb[0].mxu0
      %v2000 = vadd.f32 0.0, %v1999
      %v2001 = vpop.f32.mrb[0].mxu0
      %2002 = vmatprep.mubr.bf16.mxu0 0
      %2003 = vmatmul.mubr.bf16.gmra.mrb[0].mxu0 %v1896
      %v2004 = vpop.f32.mrb[0].mxu0
      %v2005 = vadd.f32 0.0, %v2004
      %v2006 = vpop.f32.mrb[0].mxu0
      %v2007 = vpop.f32.mrb[0].mxu0
      %v2008 = vadd.f32 0.0, %v2007
      %v2009 = vpop.f32.mrb[0].mxu0
      %2010 = vmatprep.mubr.bf16.mxu0 0
      %2011 = vmatmul.mubr.bf16.gmra.mrb[0].mxu0 %v1898
      %v2012 = vpop.f32.mrb[0].mxu0
      %v2013 = vadd.f32 0.0, %v2012
      %v2014 = vpop.f32.mrb[0].mxu0
      %v2015 = vpop.f32.mrb[0].mxu0
      %v2016 = vadd.f32 0.0, %v2015
      %v2017 = vpop.f32.mrb[0].mxu0
      %2018 = vmatprep.mubr.bf16.mxu0 0
      %2019 = vmatmul.mubr.bf16.gmra.mrb[0].mxu0 %v1900
      %v2020 = vpop.f32.mrb[0].mxu0
      %v2021 = vadd.f32 0.0, %v2020
      %v2022 = vpop.f32.mrb[0].mxu0
      %v2023 = vpop.f32.mrb[0].mxu0
      %v2024 = vadd.f32 0.0, %v2023
      %v2025 = vpop.f32.mrb[0].mxu0
      %2026 = vdwg.mxu0
      %v2027 = vadd.f32 %v1858, %v1989
      %v2028 = vadd.f32 %v1859, %v1992
      %v2029 = vadd.f32 %v1860, %v1997
      %v2030 = vadd.f32 %v1861, %v2000
      %v2031 = vadd.f32 %v1862, %v2005
      %v2032 = vadd.f32 %v1863, %v2008
      %v2033 = vadd.f32 %v1864, %v2013
      %v2034 = vadd.f32 %v1865, %v2016
      %v2035 = vadd.f32 %v1866, %v2021
      %v2036 = vadd.f32 %v1867, %v2024
      %v2037 = vlaneseq
      %v2038 = vshrl.u32 %v2037, 7
      %v2039 = vadd.s32 %v2038, 8
      %v2040 = vadd.s32 %v2038, 16
      %v2041 = vadd.s32 %v2038, 24
      %v2042 = vadd.s32 %v2038, 32
      %v2043 = vadd.s32 %v2038, 40
      %v2044 = vadd.s32 %v2038, 48
      %v2045 = vadd.s32 %v2038, 56
      %v2046 = vadd.s32 %v2038, 64
      %v2047 = vadd.s32 %v2038, 72
      %vm2048 = vcmp.lt.s32.totalorder %v2038, 0
      %v2049 = vsub.s32 0, %v2038
      %v2050 = vsel %vm2048, %v2049, %v2038
      %v2051 = vmul.u32.u64.compose %v2050, 3435973837
      %v2052 = vextract.low.u32 %v2051
      %v2053 = vextract.high.u32 %v2051
      %v2054 = vshrl.u32 %v2053, 3
      %v2055 = vmul.u32 %v2054, 10
      %v2056 = vsub.s32 %v2050, %v2055
      %v2057 = vsub.s32 0, %v2056
      %v2058 = vsel %vm2048, %v2057, %v2056
      %vm2059 = vcmp.lt.s32.totalorder %v2039, 0
      %v2060 = vsub.s32 0, %v2039
      %v2061 = vsel %vm2059, %v2060, %v2039
      %v2062 = vmul.u32.u64.compose %v2061, 3435973837
      %v2063 = vextract.low.u32 %v2062
      %v2064 = vextract.high.u32 %v2062
      %v2065 = vshrl.u32 %v2064, 3
      %v2066 = vmul.u32 %v2065, 10
      %v2067 = vsub.s32 %v2061, %v2066
      %v2068 = vsub.s32 0, %v2067
      %v2069 = vsel %vm2059, %v2068, %v2067
      %vm2070 = vcmp.lt.s32.totalorder %v2040, 0
      %v2071 = vsub.s32 0, %v2040
      %v2072 = vsel %vm2070, %v2071, %v2040
      %v2073 = vmul.u32.u64.compose %v2072, 3435973837
      %v2074 = vextract.low.u32 %v2073
      %v2075 = vextract.high.u32 %v2073
      %v2076 = vshrl.u32 %v2075, 3
      %v2077 = vmul.u32 %v2076, 10
      %v2078 = vsub.s32 %v2072, %v2077
      %v2079 = vsub.s32 0, %v2078
      %v2080 = vsel %vm2070, %v2079, %v2078
      %vm2081 = vcmp.lt.s32.totalorder %v2041, 0
      %v2082 = vsub.s32 0, %v2041
      %v2083 = vsel %vm2081, %v2082, %v2041
      %v2084 = vmul.u32.u64.compose %v2083, 3435973837
      %v2085 = vextract.low.u32 %v2084
      %v2086 = vextract.high.u32 %v2084
      %v2087 = vshrl.u32 %v2086, 3
      %v2088 = vmul.u32 %v2087, 10
      %v2089 = vsub.s32 %v2083, %v2088
      %v2090 = vsub.s32 0, %v2089
      %v2091 = vsel %vm2081, %v2090, %v2089
      %vm2092 = vcmp.lt.s32.totalorder %v2042, 0
      %v2093 = vsub.s32 0, %v2042
      %v2094 = vsel %vm2092, %v2093, %v2042
      %v2095 = vmul.u32.u64.compose %v2094, 3435973837
      %v2096 = vextract.low.u32 %v2095
      %v2097 = vextract.high.u32 %v2095
      %v2098 = vshrl.u32 %v2097, 3
      %v2099 = vmul.u32 %v2098, 10
      %v2100 = vsub.s32 %v2094, %v2099
      %v2101 = vsub.s32 0, %v2100
      %v2102 = vsel %vm2092, %v2101, %v2100
      %vm2103 = vcmp.lt.s32.totalorder %v2043, 0
      %v2104 = vsub.s32 0, %v2043
      %v2105 = vsel %vm2103, %v2104, %v2043
      %v2106 = vmul.u32.u64.compose %v2105, 3435973837
      %v2107 = vextract.low.u32 %v2106
      %v2108 = vextract.high.u32 %v2106
      %v2109 = vshrl.u32 %v2108, 3
      %v2110 = vmul.u32 %v2109, 10
      %v2111 = vsub.s32 %v2105, %v2110
      %v2112 = vsub.s32 0, %v2111
      %v2113 = vsel %vm2103, %v2112, %v2111
      %vm2114 = vcmp.lt.s32.totalorder %v2044, 0
      %v2115 = vsub.s32 0, %v2044
      %v2116 = vsel %vm2114, %v2115, %v2044
      %v2117 = vmul.u32.u64.compose %v2116, 3435973837
      %v2118 = vextract.low.u32 %v2117
      %v2119 = vextract.high.u32 %v2117
      %v2120 = vshrl.u32 %v2119, 3
      %v2121 = vmul.u32 %v2120, 10
      %v2122 = vsub.s32 %v2116, %v2121
      %v2123 = vsub.s32 0, %v2122
      %v2124 = vsel %vm2114, %v2123, %v2122
      %vm2125 = vcmp.lt.s32.totalorder %v2045, 0
      %v2126 = vsub.s32 0, %v2045
      %v2127 = vsel %vm2125, %v2126, %v2045
      %v2128 = vmul.u32.u64.compose %v2127, 3435973837
      %v2129 = vextract.low.u32 %v2128
      %v2130 = vextract.high.u32 %v2128
      %v2131 = vshrl.u32 %v2130, 3
      %v2132 = vmul.u32 %v2131, 10
      %v2133 = vsub.s32 %v2127, %v2132
      %v2134 = vsub.s32 0, %v2133
      %v2135 = vsel %vm2125, %v2134, %v2133
      %vm2136 = vcmp.lt.s32.totalorder %v2046, 0
      %v2137 = vsub.s32 0, %v2046
      %v2138 = vsel %vm2136, %v2137, %v2046
      %v2139 = vmul.u32.u64.compose %v2138, 3435973837
      %v2140 = vextract.low.u32 %v2139
      %v2141 = vextract.high.u32 %v2139
      %v2142 = vshrl.u32 %v2141, 3
      %v2143 = vmul.u32 %v2142, 10
      %v2144 = vsub.s32 %v2138, %v2143
      %v2145 = vsub.s32 0, %v2144
      %v2146 = vsel %vm2136, %v2145, %v2144
      %vm2147 = vcmp.lt.s32.totalorder %v2047, 0
      %v2148 = vsub.s32 0, %v2047
      %v2149 = vsel %vm2147, %v2148, %v2047
      %v2150 = vmul.u32.u64.compose %v2149, 3435973837
      %v2151 = vextract.low.u32 %v2150
      %v2152 = vextract.high.u32 %v2150
      %v2153 = vshrl.u32 %v2152, 3
      %v2154 = vmul.u32 %v2153, 10
      %v2155 = vsub.s32 %v2149, %v2154
      %v2156 = vsub.s32 0, %v2155
      %v2157 = vsel %vm2147, %v2156, %v2155
      %vm2158 = vcmp.ne.s32.totalorder %v2058, 0
      %vm2159 = vcmp.ne.s32.totalorder %v2069, 0
      %vm2160 = vcmp.ne.s32.totalorder %v2080, 0
      %vm2161 = vcmp.ne.s32.totalorder %v2091, 0
      %vm2162 = vcmp.ne.s32.totalorder %v2102, 0
      %vm2163 = vcmp.ne.s32.totalorder %v2113, 0
      %vm2164 = vcmp.ne.s32.totalorder %v2124, 0
      %vm2165 = vcmp.ne.s32.totalorder %v2135, 0
      %vm2166 = vcmp.ne.s32.totalorder %v2146, 0
      %vm2167 = vcmp.ne.s32.totalorder %v2157, 0
      %vm2168 = vcmp.lt.s32.totalorder %v2058, 0
      %vm2169 = vcmp.lt.s32.totalorder %v2069, 0
      %vm2170 = vcmp.lt.s32.totalorder %v2080, 0
      %vm2171 = vcmp.lt.s32.totalorder %v2091, 0
      %vm2172 = vcmp.lt.s32.totalorder %v2102, 0
      %vm2173 = vcmp.lt.s32.totalorder %v2113, 0
      %vm2174 = vcmp.lt.s32.totalorder %v2124, 0
      %vm2175 = vcmp.lt.s32.totalorder %v2135, 0
      %vm2176 = vcmp.lt.s32.totalorder %v2146, 0
      %vm2177 = vcmp.lt.s32.totalorder %v2157, 0
      %vm2178 = vmand %vm2168, %vm2158
      %vm2179 = vmand %vm2169, %vm2159
      %vm2180 = vmand %vm2170, %vm2160
      %vm2181 = vmand %vm2171, %vm2161
      %vm2182 = vmand %vm2172, %vm2162
      %vm2183 = vmand %vm2173, %vm2163
      %vm2184 = vmand %vm2174, %vm2164
      %vm2185 = vmand %vm2175, %vm2165
      %vm2186 = vmand %vm2176, %vm2166
      %vm2187 = vmand %vm2177, %vm2167
      %v2188 = vadd.s32 %v2058, 10
      %v2189 = vadd.s32 %v2069, 10
      %v2190 = vadd.s32 %v2080, 10
      %v2191 = vadd.s32 %v2091, 10
      %v2192 = vadd.s32 %v2102, 10
      %v2193 = vadd.s32 %v2113, 10
      %v2194 = vadd.s32 %v2124, 10
      %v2195 = vadd.s32 %v2135, 10
      %v2196 = vadd.s32 %v2146, 10
      %v2197 = vadd.s32 %v2157, 10
      %v2198 = vsel %vm2178, %v2188, %v2058
      %v2199 = vsel %vm2179, %v2189, %v2069
      %v2200 = vsel %vm2180, %v2190, %v2080
      %v2201 = vsel %vm2181, %v2191, %v2091
      %v2202 = vsel %vm2182, %v2192, %v2102
      %v2203 = vsel %vm2183, %v2193, %v2113
      %v2204 = vsel %vm2184, %v2194, %v2124
      %v2205 = vsel %vm2185, %v2195, %v2135
      %v2206 = vsel %vm2186, %v2196, %v2146
      %v2207 = vsel %vm2187, %v2197, %v2157
      %vm2208 = vcmp.lt.s32.totalorder %v2198, 8
      %vm2209 = vcmp.lt.s32.totalorder %v2199, 8
      %vm2210 = vcmp.lt.s32.totalorder %v2200, 8
      %vm2211 = vcmp.lt.s32.totalorder %v2201, 8
      %vm2212 = vcmp.lt.s32.totalorder %v2202, 8
      %vm2213 = vcmp.lt.s32.totalorder %v2203, 8
      %vm2214 = vcmp.lt.s32.totalorder %v2204, 8
      %vm2215 = vcmp.lt.s32.totalorder %v2205, 8
      %vm2216 = vcmp.lt.s32.totalorder %v2206, 8
      %vm2217 = vcmp.lt.s32.totalorder %v2207, 8
      %v2218 = vsel %vm2208, 1, 0
      %v2219 = vsel %vm2209, 1, 0
      %v2220 = vsel %vm2210, 1, 0
      %v2221 = vsel %vm2211, 1, 0
      %v2222 = vsel %vm2212, 1, 0
      %v2223 = vsel %vm2213, 1, 0
      %v2224 = vsel %vm2214, 1, 0
      %v2225 = vsel %vm2215, 1, 0
      %v2226 = vsel %vm2216, 1, 0
      %v2227 = vsel %vm2217, 1, 0
      %v2228 = vcvt.s32.f32 %v2218
      %v2229 = vcvt.s32.f32 %v2219
      %v2230 = vcvt.s32.f32 %v2220
      %v2231 = vcvt.s32.f32 %v2221
      %v2232 = vcvt.s32.f32 %v2222
      %v2233 = vcvt.s32.f32 %v2223
      %v2234 = vcvt.s32.f32 %v2224
      %v2235 = vcvt.s32.f32 %v2225
      %v2236 = vcvt.s32.f32 %v2226
      %v2237 = vcvt.s32.f32 %v2227
      %v2238 = vpack.c.bf16 %v2028, %v2027
      %v2239 = vpack.c.bf16 %v2030, %v2029
      %v2240 = vpack.c.bf16 %v2032, %v2031
      %v2241 = vpack.c.bf16 %v2034, %v2033
      %v2242 = vpack.c.bf16 %v2036, %v2035
      %v2248 = vunpack.c.l.b16 %v2238
      %v2249 = vunpack.c.h.b16 %v2238
      %v2250 = vunpack.c.l.b16 %v2239
      %v2251 = vunpack.c.h.b16 %v2239
      %v2252 = vunpack.c.l.b16 %v2240
      %v2253 = vunpack.c.h.b16 %v2240
      %v2254 = vunpack.c.l.b16 %v2241
      %v2255 = vunpack.c.h.b16 %v2241
      %v2256 = vunpack.c.l.b16 %v2242
      %v2257 = vunpack.c.h.b16 %v2242
      %v2258 = vpack.c.b16 %v2248, %v2248
      %v2259 = vpack.c.b16 %v2249, %v2249
      %v2260 = vpack.c.b16 %v2250, %v2250
      %v2261 = vpack.c.b16 %v2251, %v2251
      %v2262 = vpack.c.b16 %v2252, %v2252
      %v2263 = vpack.c.b16 %v2253, %v2253
      %v2264 = vpack.c.b16 %v2254, %v2254
      %v2265 = vpack.c.b16 %v2255, %v2255
      %v2266 = vpack.c.b16 %v2256, %v2256
      %v2267 = vpack.c.b16 %v2257, %v2257
      %2278 = vst [vmem:[%s318] sm:$0xf] %v2258
      %2279 = vst [vmem:[%s318 + $0x4] sm:$0xf] %v2259
      %2280 = vst [vmem:[%s318 + $0x8] sm:$0xf] %v2260
      %2281 = vst [vmem:[%s318 + $0xc] sm:$0xf] %v2261
      %2282 = vst [vmem:[%s318 + $0x10] sm:$0xf] %v2262
      %2283 = vst [vmem:[%s318 + $0x14] sm:$0xf] %v2263
      %2284 = vst [vmem:[%s318 + $0x18] sm:$0xf] %v2264
      %2285 = vst [vmem:[%s318 + $0x1c] sm:$0xf] %v2265
      %2286 = vst [vmem:[%s318 + $0x20] sm:$0xf] %v2266
      %2287 = vst [vmem:[%s318 + $0x24] sm:$0xf] %v2267
      %v2288 = vmul.f32 %v2027, %v2228
      %v2289 = vmul.f32 %v2028, %v2229
      %v2290 = vmul.f32 %v2029, %v2230
      %v2291 = vmul.f32 %v2030, %v2231
      %v2292 = vmul.f32 %v2031, %v2232
      %v2293 = vmul.f32 %v2032, %v2233
      %v2294 = vmul.f32 %v2033, %v2234
      %v2295 = vmul.f32 %v2034, %v2235
      %v2296 = vmul.f32 %v2035, %v2236
      %v2297 = vmul.f32 %v2036, %v2237
      %v2298 = vadd.f32 %v2288, %v2289
      %v2299 = vadd.f32 %v2298, %v2290
      %v2300 = vadd.f32 %v2299, %v2291
      %v2301 = vadd.f32 %v2300, %v2292
      %v2302 = vadd.f32 %v2301, %v2293
      %v2303 = vadd.f32 %v2302, %v2294
      %v2304 = vadd.f32 %v2303, %v2295
      %v2305 = vadd.f32 %v2304, %v2296
      %v2306 = vadd.f32 %v2305, %v2297
      %v2307 = vrot.slane %v2306, 4
      %v2308 = vadd.f32 %v2306, %v2307
      %v2309 = vrot.slane %v2308, 2
      %v2310 = vadd.f32 %v2308, %v2309
      %v2311 = vrot.slane %v2310, 1
      %v2312 = vadd.f32 %v2310, %v2311
      %v2313 = vmul.f32 %v2288, %v2027
      %v2314 = vmul.f32 %v2289, %v2028
      %v2315 = vmul.f32 %v2290, %v2029
      %v2316 = vmul.f32 %v2291, %v2030
      %v2317 = vmul.f32 %v2292, %v2031
      %v2318 = vmul.f32 %v2293, %v2032
      %v2319 = vmul.f32 %v2294, %v2033
      %v2320 = vmul.f32 %v2295, %v2034
      %v2321 = vmul.f32 %v2296, %v2035
      %v2322 = vmul.f32 %v2297, %v2036
      %v2323 = vadd.f32 %v2313, %v2314
      %v2324 = vadd.f32 %v2323, %v2315
      %v2325 = vadd.f32 %v2324, %v2316
      %v2326 = vadd.f32 %v2325, %v2317
      %v2327 = vadd.f32 %v2326, %v2318
      %v2328 = vadd.f32 %v2327, %v2319
      %v2329 = vadd.f32 %v2328, %v2320
      %v2330 = vadd.f32 %v2329, %v2321
      %v2331 = vadd.f32 %v2330, %v2322
      %v2332 = vrot.slane %v2331, 4
      %v2333 = vadd.f32 %v2331, %v2332
      %v2334 = vrot.slane %v2333, 2
      %v2335 = vadd.f32 %v2333, %v2334
      %v2336 = vrot.slane %v2335, 1
      %v2337 = vadd.f32 %v2335, %v2336
      %vm2338 = vcmask 1040384
      %v2339 = vsel %vm2338, %v2312, %v2337
      %2340 = vst [vmem:[%s322] sm:$0x3] %v2339
      %v2341 = vld [vmem:[%s313] sm:$0xf]
      %v2342 = vld [vmem:[%s313 + $0x4] sm:$0xf]
      %v2343 = vld [vmem:[%s313 + $0x8] sm:$0xf]
      %v2344 = vld [vmem:[%s313 + $0xc] sm:$0xf]
      %v2345 = vld [vmem:[%s313 + $0x10] sm:$0xf]
      %v2346 = vld [vmem:[%s313 + $0x14] sm:$0xf]
      %v2347 = vld [vmem:[%s313 + $0x18] sm:$0xf]
      %v2348 = vld [vmem:[%s313 + $0x1c] sm:$0xf]
      %v2349 = vld [vmem:[%s313 + $0x20] sm:$0xf]
      %v2350 = vld [vmem:[%s313 + $0x24] sm:$0xf]
      %v2351 = vld [vmem:[%s3] sm:$0xf]
      %v2352 = vld [vmem:[%s3 + $0x4] sm:$0xf]
      %v2353 = vld [vmem:[%s3 + $0x8] sm:$0xf]
      %v2354 = vld [vmem:[%s3 + $0xc] sm:$0xf]
      %v2355 = vld [vmem:[%s3 + $0x10] sm:$0xf]
      %v2356 = vld [vmem:[%s3 + $0x14] sm:$0xf]
      %v2357 = vld [vmem:[%s3 + $0x18] sm:$0xf]
      %v2358 = vld [vmem:[%s3 + $0x1c] sm:$0xf]
      %v2359 = vld [vmem:[%s3 + $0x20] sm:$0xf]
      %v2360 = vld [vmem:[%s3 + $0x24] sm:$0xf]
      %v2361 = vld [vmem:[%s3 + $0x28] sm:$0xf]
      %v2362 = vld [vmem:[%s3 + $0x2c] sm:$0xf]
      %v2363 = vld [vmem:[%s3 + $0x30] sm:$0xf]
      %v2364 = vld [vmem:[%s3 + $0x34] sm:$0xf]
      %v2365 = vld [vmem:[%s3 + $0x38] sm:$0xf]
      %v2366 = vld [vmem:[%s3 + $0x3c] sm:$0xf]
      %v2377 = vunpack.c.l.b16 %v2341
      %v2378 = vunpack.c.l.b16 %v2342
      %v2379 = vunpack.c.l.b16 %v2343
      %v2380 = vunpack.c.l.b16 %v2344
      %v2381 = vunpack.c.l.b16 %v2345
      %v2382 = vunpack.c.l.b16 %v2346
      %v2383 = vunpack.c.l.b16 %v2347
      %v2384 = vunpack.c.l.b16 %v2348
      %v2385 = vunpack.c.l.b16 %v2349
      %v2386 = vunpack.c.l.b16 %v2350
      %v2387 = vpack.c.b16 %v2378, %v2377
      %v2388 = vpack.c.b16 %v2380, %v2379
      %v2389 = vpack.c.b16 %v2382, %v2381
      %v2390 = vpack.c.b16 %v2384, %v2383
      %v2391 = vpack.c.b16 %v2386, %v2385
      %v2413 = vunpack.c.l.b16 %v2351
      %v2414 = vunpack.c.l.b16 %v2352
      %v2415 = vunpack.c.l.b16 %v2353
      %v2416 = vunpack.c.l.b16 %v2354
      %v2417 = vunpack.c.l.b16 %v2355
      %v2418 = vunpack.c.l.b16 %v2356
      %v2419 = vunpack.c.l.b16 %v2357
      %v2420 = vunpack.c.l.b16 %v2358
      %v2421 = vunpack.c.l.b16 %v2359
      %v2422 = vunpack.c.l.b16 %v2360
      %v2423 = vunpack.c.l.b16 %v2361
      %v2424 = vunpack.c.l.b16 %v2362
      %v2425 = vunpack.c.l.b16 %v2363
      %v2426 = vunpack.c.l.b16 %v2364
      %v2427 = vunpack.c.l.b16 %v2365
      %v2428 = vunpack.c.l.b16 %v2366
      %v2429 = vpack.c.b16 %v2414, %v2413
      %v2430 = vpack.c.b16 %v2416, %v2415
      %v2431 = vpack.c.b16 %v2418, %v2417
      %v2432 = vpack.c.b16 %v2420, %v2419
      %v2433 = vpack.c.b16 %v2422, %v2421
      %v2434 = vpack.c.b16 %v2424, %v2423
      %v2435 = vpack.c.b16 %v2426, %v2425
      %v2436 = vpack.c.b16 %v2428, %v2427
      %2445 = vmatprep.subr.bf16.mxu0 0
      %2446 = vmatpush1.bf16.msra.mxu0 %v2429
      %2447 = vmatprep.subr.bf16.mxu0 0
      %2448 = vmatpush1.bf16.msra.mxu0 %v2430
      %2449 = vmatprep.subr.bf16.mxu0 0
      %2450 = vmatpush1.bf16.msra.mxu0 %v2431
      %2451 = vmatprep.subr.bf16.mxu0 0
      %2452 = vmatpush1.bf16.msra.mxu0 %v2432
      %2453 = vmatprep.subr.bf16.mxu0 0
      %2454 = vmatpush1.bf16.msra.mxu0 %v2433
      %2455 = vmatprep.subr.bf16.mxu0 0
      %2456 = vmatpush1.bf16.msra.mxu0 %v2434
      %2457 = vmatprep.subr.bf16.mxu0 0
      %2458 = vmatpush1.bf16.msra.mxu0 %v2435
      %2459 = vmatprep.subr.bf16.mxu0 0
      %2460 = vmatpush1.bf16.msra.mxu0 %v2436
      %2461 = vmatprep.subr.bf16.mxu0 0
      %2462 = vmatpush1.bf16.msra.mxu0 0
      %2463 = vmatprep.subr.bf16.mxu0 0
      %2464 = vmatpush1.bf16.msra.mxu0 0
      %2465 = vmatprep.subr.bf16.mxu0 0
      %2466 = vmatpush1.bf16.msra.mxu0 0
      %2467 = vmatprep.subr.bf16.mxu0 0
      %2468 = vmatpush1.bf16.msra.mxu0 0
      %2469 = vmatprep.subr.bf16.mxu0 0
      %2470 = vmatpush1.bf16.msra.mxu0 0
      %2471 = vmatprep.subr.bf16.mxu0 0
      %2472 = vmatpush1.bf16.msra.mxu0 0
      %2473 = vmatprep.subr.bf16.mxu0 0
      %2474 = vmatpush1.bf16.msra.mxu0 0
      %2475 = vmatprep.subr.bf16.mxu0 0
      %2476 = vmatpush1.bf16.msra.mxu0 0
      %2477 = vmatprep.mubr.bf16.mxu0 0
      %2478 = vmatmul.mubr.bf16.gmra.mrb[0].mxu0 %v2387
      %v2479 = vpop.f32.mrb[0].mxu0
      %v2480 = vadd.f32 0.0, %v2479
      %v2481 = vpop.f32.mrb[0].mxu0
      %v2482 = vpop.f32.mrb[0].mxu0
      %v2483 = vadd.f32 0.0, %v2482
      %v2484 = vpop.f32.mrb[0].mxu0
      %2485 = vmatprep.mubr.bf16.mxu0 0
      %2486 = vmatmul.mubr.bf16.gmra.mrb[0].mxu0 %v2388
      %v2487 = vpop.f32.mrb[0].mxu0
      %v2488 = vadd.f32 0.0, %v2487
      %v2489 = vpop.f32.mrb[0].mxu0
      %v2490 = vpop.f32.mrb[0].mxu0
      %v2491 = vadd.f32 0.0, %v2490
      %v2492 = vpop.f32.mrb[0].mxu0
      %2493 = vmatprep.mubr.bf16.mxu0 0
      %2494 = vmatmul.mubr.bf16.gmra.mrb[0].mxu0 %v2389
      %v2495 = vpop.f32.mrb[0].mxu0
      %v2496 = vadd.f32 0.0, %v2495
      %v2497 = vpop.f32.mrb[0].mxu0
      %v2498 = vpop.f32.mrb[0].mxu0
      %v2499 = vadd.f32 0.0, %v2498
      %v2500 = vpop.f32.mrb[0].mxu0
      %2501 = vmatprep.mubr.bf16.mxu0 0
      %2502 = vmatmul.mubr.bf16.gmra.mrb[0].mxu0 %v2390
      %v2503 = vpop.f32.mrb[0].mxu0
      %v2504 = vadd.f32 0.0, %v2503
      %v2505 = vpop.f32.mrb[0].mxu0
      %v2506 = vpop.f32.mrb[0].mxu0
      %v2507 = vadd.f32 0.0, %v2506
      %v2508 = vpop.f32.mrb[0].mxu0
      %2509 = vmatprep.mubr.bf16.mxu0 0
      %2510 = vmatmul.mubr.bf16.gmra.mrb[0].mxu0 %v2391
      %v2511 = vpop.f32.mrb[0].mxu0
      %v2512 = vadd.f32 0.0, %v2511
      %v2513 = vpop.f32.mrb[0].mxu0
      %v2514 = vpop.f32.mrb[0].mxu0
      %v2515 = vadd.f32 0.0, %v2514
      %v2516 = vpop.f32.mrb[0].mxu0
      %2517 = vdwg.mxu0
      %v2518 = vpack.c.bf16 %v2483, %v2480
      %v2519 = vpack.c.bf16 %v2491, %v2488
      %v2520 = vpack.c.bf16 %v2499, %v2496
      %v2521 = vpack.c.bf16 %v2507, %v2504
      %v2522 = vpack.c.bf16 %v2515, %v2512
      %v2528 = vunpack.c.l.b16 %v2518
      %v2529 = vunpack.c.h.b16 %v2518
      %v2530 = vunpack.c.l.b16 %v2519
      %v2531 = vunpack.c.h.b16 %v2519
      %v2532 = vunpack.c.l.b16 %v2520
      %v2533 = vunpack.c.h.b16 %v2520
      %v2534 = vunpack.c.l.b16 %v2521
      %v2535 = vunpack.c.h.b16 %v2521
      %v2536 = vunpack.c.l.b16 %v2522
      %v2537 = vunpack.c.h.b16 %v2522
      %v2538 = vpack.c.b16 %v2528, %v2528
      %v2539 = vpack.c.b16 %v2529, %v2529
      %v2540 = vpack.c.b16 %v2530, %v2530
      %v2541 = vpack.c.b16 %v2531, %v2531
      %v2542 = vpack.c.b16 %v2532, %v2532
      %v2543 = vpack.c.b16 %v2533, %v2533
      %v2544 = vpack.c.b16 %v2534, %v2534
      %v2545 = vpack.c.b16 %v2535, %v2535
      %v2546 = vpack.c.b16 %v2536, %v2536
      %v2547 = vpack.c.b16 %v2537, %v2537
      %2558 = vst [vmem:[%s327] sm:$0xf] %v2538
      %2559 = vst [vmem:[%s327 + $0x4] sm:$0xf] %v2539
      %2560 = vst [vmem:[%s327 + $0x8] sm:$0xf] %v2540
      %2561 = vst [vmem:[%s327 + $0xc] sm:$0xf] %v2541
      %2562 = vst [vmem:[%s327 + $0x10] sm:$0xf] %v2542
      %2563 = vst [vmem:[%s327 + $0x14] sm:$0xf] %v2543
      %2564 = vst [vmem:[%s327 + $0x18] sm:$0xf] %v2544
      %2565 = vst [vmem:[%s327 + $0x1c] sm:$0xf] %v2545
      %2566 = vst [vmem:[%s327 + $0x20] sm:$0xf] %v2546
      %2567 = vst [vmem:[%s327 + $0x24] sm:$0xf] %v2547
      %v2568 = vmul.f32 %v2480, %v2228
      %v2569 = vmul.f32 %v2483, %v2229
      %v2570 = vmul.f32 %v2488, %v2230
      %v2571 = vmul.f32 %v2491, %v2231
      %v2572 = vmul.f32 %v2496, %v2232
      %v2573 = vmul.f32 %v2499, %v2233
      %v2574 = vmul.f32 %v2504, %v2234
      %v2575 = vmul.f32 %v2507, %v2235
      %v2576 = vmul.f32 %v2512, %v2236
      %v2577 = vmul.f32 %v2515, %v2237
      %v2578 = vadd.f32 %v2568, %v2569
      %v2579 = vadd.f32 %v2578, %v2570
      %v2580 = vadd.f32 %v2579, %v2571
      %v2581 = vadd.f32 %v2580, %v2572
      %v2582 = vadd.f32 %v2581, %v2573
      %v2583 = vadd.f32 %v2582, %v2574
      %v2584 = vadd.f32 %v2583, %v2575
      %v2585 = vadd.f32 %v2584, %v2576
      %v2586 = vadd.f32 %v2585, %v2577
      %v2587 = vrot.slane %v2586, 4
      %v2588 = vadd.f32 %v2586, %v2587
      %v2589 = vrot.slane %v2588, 2
      %v2590 = vadd.f32 %v2588, %v2589
      %v2591 = vrot.slane %v2590, 1
      %v2592 = vadd.f32 %v2590, %v2591
      %v2593 = vmul.f32 %v2568, %v2480
      %v2594 = vmul.f32 %v2569, %v2483
      %v2595 = vmul.f32 %v2570, %v2488
      %v2596 = vmul.f32 %v2571, %v2491
      %v2597 = vmul.f32 %v2572, %v2496
      %v2598 = vmul.f32 %v2573, %v2499
      %v2599 = vmul.f32 %v2574, %v2504
      %v2600 = vmul.f32 %v2575, %v2507
      %v2601 = vmul.f32 %v2576, %v2512
      %v2602 = vmul.f32 %v2577, %v2515
      %v2603 = vadd.f32 %v2593, %v2594
      %v2604 = vadd.f32 %v2603, %v2595
      %v2605 = vadd.f32 %v2604, %v2596
      %v2606 = vadd.f32 %v2605, %v2597
      %v2607 = vadd.f32 %v2606, %v2598
      %v2608 = vadd.f32 %v2607, %v2599
      %v2609 = vadd.f32 %v2608, %v2600
      %v2610 = vadd.f32 %v2609, %v2601
      %v2611 = vadd.f32 %v2610, %v2602
      %v2612 = vrot.slane %v2611, 4
      %v2613 = vadd.f32 %v2611, %v2612
      %v2614 = vrot.slane %v2613, 2
      %v2615 = vadd.f32 %v2613, %v2614
      %v2616 = vrot.slane %v2615, 1
      %v2617 = vadd.f32 %v2615, %v2616
      %v2618 = vsel %vm2338, %v2592, %v2617
      %2619 = vst [vmem:[%s331] sm:$0x3] %v2618
      %p2620 = scmp.lt.s32.totalorder %s19, 1
      %s2621 = scalar_select %p2620, %s19, 1
      %s2622 = smul.addr %s2621, 10
      %s2623 = smul.addr %s2622, 4
      %s2624 = scalar_lea.vmem %s4, %s2623
      %p2625 = scmp.lt.s32.totalorder %s19, 1
      %s2626 = scalar_select %p2625, %s19, 1
      %s2627 = smul.addr %s2626, 2
      %s2628 = scalar_lea.vmem %s5, %s2627
      %p2629 = scmp.lt.s32.totalorder %s19, 1
      %s2630 = scalar_select %p2629, %s19, 1
      %s2631 = smul.addr %s2630, 10
      %s2632 = smul.addr %s2631, 4
      %s2633 = scalar_lea.vmem %s6, %s2632
      %p2634 = scmp.lt.s32.totalorder %s19, 1
      %s2635 = scalar_select %p2634, %s19, 1
      %s2636 = smul.addr %s2635, 2
      %s2637 = scalar_lea.vmem %s7, %s2636
      // Predicated region
      $region37: #{basic_block_forward.4} parent=35 // pred_check
        %p2638 = pneg %p131
      $region38: #{basic_block_forward.4} parent=35 // pred_check_branch
        %2640 = sbr.rel (%p2638) target = $region40
      $region39: #{basic_block_forward.4} parent=35 // pred_region
        _
      $region40: #{basic_block_forward.4} parent=35 // pred_fallthru
        _
      // Predicated region
      $region41: #{basic_block_forward.4} parent=35 // pred_check
        %p2641 = pneg %p157
      $region42: #{basic_block_forward.4} parent=35 // pred_check_branch
        %2643 = sbr.rel (%p2641) target = $region44
      $region43: #{basic_block_forward.4} parent=35 // pred_region
        _
      $region44: #{basic_block_forward.4} parent=35 // pred_fallthru
        _
      // Predicated region
      $region45: #{basic_block_forward.4} parent=35 // pred_check
        %p2644 = pneg %p183
      $region46: #{basic_block_forward.4} parent=35 // pred_check_branch
        %2646 = sbr.rel (%p2644) target = $region48
      $region47: #{basic_block_forward.4} parent=35 // pred_region
        _
      $region48: #{basic_block_forward.4} parent=35 // pred_fallthru
        _
      // Predicated region
      $region49: #{basic_block_forward.4} parent=35 // pred_check
        %p2647 = pneg %p209
      $region50: #{basic_block_forward.4} parent=35 // pred_check_branch
        %2649 = sbr.rel (%p2647) target = $region52
      $region51: #{basic_block_forward.4} parent=35 // pred_region
        _
      $region52: #{basic_block_forward.4} parent=35 // pred_fallthru
        _
    $region36: #{basic_block_forward.4} parent=5 // pred_fallthru
      _
    %p2650 = scmp.le.s32.totalorder 2, %s14
    // Predicated region
    $region53: #{basic_block_forward.4} parent=5 // pred_check
      %p2651 = pneg %p2650
    $region54: #{basic_block_forward.4} parent=5 // pred_check_branch
      %2653 = sbr.rel (%p2651) target = $region56
    $region55: #{basic_block_forward.4} parent=5 // pred_region
      %s2654 = ssub.s32 %s14, 2
      // Predicated region
      $region57: #{basic_block_forward.4} parent=55 // pred_check
        %p2655 = pneg %p137
      $region58: #{basic_block_forward.4} parent=55 // pred_check_branch
        %2657 = sbr.rel (%p2655) target = $region60
      $region59: #{basic_block_forward.4} parent=55 // pred_region
        %p2658 = scmp.lt.s32.totalorder %s20, 1
        %s2659 = scalar_select %p2658, %s20, 1
        %s2660 = smul.addr %s2659, 10
        %s2661 = smul.addr %s2660, 4
        %s2662 = scalar_lea.vmem %s4, %s2661
      $region60: #{basic_block_forward.4} parent=55 // pred_fallthru
        _
      // Predicated region
      $region61: #{basic_block_forward.4} parent=55 // pred_check
        %p2663 = pneg %p163
      $region62: #{basic_block_forward.4} parent=55 // pred_check_branch
        %2665 = sbr.rel (%p2663) target = $region64
      $region63: #{basic_block_forward.4} parent=55 // pred_region
        %p2666 = scmp.lt.s32.totalorder %s20, 1
        %s2667 = scalar_select %p2666, %s20, 1
        %s2668 = smul.addr %s2667, 2
        %s2669 = scalar_lea.vmem %s5, %s2668
      $region64: #{basic_block_forward.4} parent=55 // pred_fallthru
        _
      // Predicated region
      $region65: #{basic_block_forward.4} parent=55 // pred_check
        %p2670 = pneg %p189
      $region66: #{basic_block_forward.4} parent=55 // pred_check_branch
        %2672 = sbr.rel (%p2670) target = $region68
      $region67: #{basic_block_forward.4} parent=55 // pred_region
        %p2673 = scmp.lt.s32.totalorder %s20, 1
        %s2674 = scalar_select %p2673, %s20, 1
        %s2675 = smul.addr %s2674, 10
        %s2676 = smul.addr %s2675, 4
        %s2677 = scalar_lea.vmem %s6, %s2676
      $region68: #{basic_block_forward.4} parent=55 // pred_fallthru
        _
      // Predicated region
      $region69: #{basic_block_forward.4} parent=55 // pred_check
        %p2678 = pneg %p215
      $region70: #{basic_block_forward.4} parent=55 // pred_check_branch
        %2680 = sbr.rel (%p2678) target = $region72
      $region71: #{basic_block_forward.4} parent=55 // pred_region
        %p2681 = scmp.lt.s32.totalorder %s20, 1
        %s2682 = scalar_select %p2681, %s20, 1
        %s2683 = smul.addr %s2682, 2
        %s2684 = scalar_lea.vmem %s7, %s2683
      $region72: #{basic_block_forward.4} parent=55 // pred_fallthru
        _
    $region56: #{basic_block_forward.4} parent=5 // pred_fallthru
      _
  $region6: #{basic_block_forward.4} parent=0 // loop_footer
    %s18 = sadd.s32 1, %s14
  $region7: #{basic_block_forward.4} parent=0 // loop_footer_branch
    %13 = sbr.rel target = $region3
  $region8: #{basic_block_forward.4} parent=0 // loop_exit
    _

</llo_original>
